<compile_context>
chip_gen: v7x
topology: tpu7x:2x2x1
jax: 0.10.0
libtpu: 0.0.40
codegen_flags: <defaults>
</compile_context>

<pallas_src>
import jax
import jax.numpy as jnp
from jax.experimental import pallas as pl
from jax.experimental.pallas import tpu as pltpu

NOISE = 100
NOISE_PAD = 128                       # lane-dense padded noise width
IMAGE_SHAPE = (1, 28, 28)
IMG_FLAT = IMAGE_SHAPE[0] * IMAGE_SHAPE[1] * IMAGE_SHAPE[2]   # 784
IMG_PAD = 896                         # 7 * 128, lane-dense padded image width
BN_EPS = 0.8                          # BatchNorm1d(out, 0.8) -> eps = 0.8 (see note above)
LRELU_SLOPE = 0.2
VMEM_LIMIT = 32 << 20


# ---------------------------------------------------------------------------
# In-kernel helpers (pure jnp, traced inside the Pallas bodies)
# ---------------------------------------------------------------------------
def _leaky_relu(x):
    # slope in (0,1)  =>  leaky_relu(x) == max(x, slope*x): one mul + one max on the VPU
    return jnp.maximum(x, LRELU_SLOPE * x)


def _bn_train(h, gamma, beta):
    # Training-mode BatchNorm1d over the batch axis, biased variance (PyTorch semantics).
    # One pass over h for the stats (E[x], E[x^2]); gamma * rsqrt(var+eps) is folded
    # into one per-feature scale. One-pass cancellation is safe here: eps=0.8 >> var.
    inv_b = 1.0 / h.shape[0]
    mean = jnp.sum(h, axis=0, keepdims=True) * inv_b
    mean_sq = jnp.sum(h * h, axis=0, keepdims=True) * inv_b
    var = mean_sq - mean * mean
    scale = gamma * jax.lax.rsqrt(var + BN_EPS)
    return (h - mean) * scale + beta


def _dot_bf16(x_f32, w_bf16):
    # bf16 feeds to the MXU, f32 accumulation.
    return jnp.dot(x_f32.astype(jnp.bfloat16), w_bf16[...],
                   preferred_element_type=jnp.float32)


# ---------------------------------------------------------------------------
# Generator trunk kernel (grid-less): z -> 3x [Linear + BN + LeakyReLU] -> (B,512) bf16.
# Training-mode BN couples the whole batch, so this stage cannot be batch-tiled.
# Pre-BN Linear biases are omitted (cancelled exactly by the batch-mean subtraction).
# ---------------------------------------------------------------------------
def gen_trunk_kernel(z_ref,
                     w1, g1, be1,
                     w2, g2, be2,
                     w3, g3, be3,
                     h_ref):
    h = jnp.dot(z_ref[...], w1[...], preferred_element_type=jnp.float32)  # z already bf16
    h = _leaky_relu(_bn_train(h, g1[...], be1[...]))
    h = _dot_bf16(h, w2)
    h = _leaky_relu(_bn_train(h, g2[...], be2[...]))
    h = _dot_bf16(h, w3)
    h = _leaky_relu(_bn_train(h, g3[...], be3[...]))
    h_ref[...] = h.astype(h_ref.dtype)


# ---------------------------------------------------------------------------
# Generator head kernel (batch-tiled "parallel"): Linear(512,896) + tanh, bf16 output.
# ---------------------------------------------------------------------------
def gen_head_kernel(h_ref, w4, b4, out_ref):
    y = jnp.dot(h_ref[...], w4[...], preferred_element_type=jnp.float32) + b4[...]
    out_ref[...] = jnp.tanh(y).astype(out_ref.dtype)


# ---------------------------------------------------------------------------
# Discriminator kernel (batch-tiled "parallel"), padded bf16 input (B,896).
# ---------------------------------------------------------------------------
def disc_kernel(x_ref,
                w1, b1,
                w2, b2,
                w3, b3,
                out_ref):
    h = _leaky_relu(jnp.dot(x_ref[...], w1[...],
                            preferred_element_type=jnp.float32) + b1[...])
    h = _leaky_relu(_dot_bf16(h, w2) + b2[...])
    h = _dot_bf16(h, w3) + b3[...]     # padded to 128 output lanes (col 0 is the logit)
    out_ref[...] = jax.nn.sigmoid(h)


# ---------------------------------------------------------------------------
# Wrapper helpers
# ---------------------------------------------------------------------------
def _vmem_specs(n):
    return [pl.BlockSpec(memory_space=pltpu.MemorySpace.VMEM) for _ in range(n)]


def _param_bytes(params):
    return int(sum(p.size * p.dtype.itemsize for p in params))


def _pick_batch_tile(B):
    # Prefer >= 2 grid steps (cap tb at 128 and at B//2): shards the batch across both
    # v7x TensorCores and lets auto-pipelining hide the activation-tile DMAs.
    for tb in (128, 64, 32, 16, 8):
        if B % tb == 0 and B // tb >= 2:
            return tb
    return B   # tiny / odd batch: single block == full array (no (8,128) constraint)


def _generator_padded(z, params):
    """z (B,100) -> lane-dense padded flat generator output (B,896) bf16."""
    B = z.shape[0]
    (gw1, gg1, gbe1, gw2, gg2, gbe2, gw3, gg3, gbe3, gw4, gb4) = params

    # Fused bf16 cast + pad 100 -> 128 (one tiny wrapper op; w1's padded rows are zero).
    z_pad = jnp.pad(z.astype(jnp.bfloat16), ((0, 0), (0, NOISE_PAD - NOISE)))

    trunk_params = (gw1, gg1, gbe1, gw2, gg2, gbe2, gw3, gg3, gbe3)
    trunk_flops = 2 * B * (NOISE_PAD * 128 + 128 * 256 + 256 * 512)
    trunk_bytes = B * NOISE_PAD * 2 + _param_bytes(trunk_params) + B * 512 * 2

    # Grid-less trunk (single TC): activations grow ~4 KB per batch row; comfortably
    # inside the 32 MiB scoped VMEM limit for B up to a few thousand on all generations.
    h = pl.pallas_call(
        gen_trunk_kernel,
        out_shape=jax.ShapeDtypeStruct((B, 512), jnp.bfloat16),
        in_specs=_vmem_specs(1 + len(trunk_params)),
        out_specs=pl.BlockSpec(memory_space=pltpu.MemorySpace.VMEM),
        compiler_params=pltpu.CompilerParams(vmem_limit_bytes=VMEM_LIMIT),
        cost_estimate=pl.CostEstimate(flops=trunk_flops,
                                      transcendentals=128 + 256 + 512,   # per-feature rsqrt
                                      bytes_accessed=trunk_bytes),
    )(z_pad, *trunk_params)

    # Batch-tiled head: Linear(512,896)+tanh — most of G's FLOPs and all of its output
    # write traffic; "parallel" grid with >=2 steps uses both v7x TCs + pipelined stores.
    tb = _pick_batch_tile(B)
    grid = (B // tb,)
    head_flops = 2 * B * 512 * IMG_PAD
    head_bytes = B * 512 * 2 + _param_bytes((gw4, gb4)) + B * IMG_PAD * 2

    # Weights/biases keep default double-buffering: ~1.6 MB total, VMEM is not the
    # constraint here, so pl.Buffered(1) would buy nothing.
    in_specs = [pl.BlockSpec((tb, 512), lambda i: (i, 0)),
                pl.BlockSpec(gw4.shape, lambda i: (0, 0)),
                pl.BlockSpec(gb4.shape, lambda i: (0, 0))]
    out_specs = pl.BlockSpec((tb, IMG_PAD), lambda i: (i, 0))

    flat_pad = pl.pallas_call(
        gen_head_kernel,
        out_shape=jax.ShapeDtypeStruct((B, IMG_PAD), jnp.bfloat16),
        grid=grid,
        in_specs=in_specs,
        out_specs=out_specs,
        compiler_params=pltpu.CompilerParams(
            dimension_semantics=("parallel",),
            vmem_limit_bytes=VMEM_LIMIT),
        cost_estimate=pl.CostEstimate(flops=head_flops,
                                      transcendentals=B * IMG_PAD,      # tanh
                                      bytes_accessed=head_bytes),
    )(h, gw4, gb4)
    return flat_pad


def _discriminator_padded(x_pad, params):
    """x_pad (B,896) bf16 (cols 784..895 must be zero) -> validity (B,1) f32."""
    B = x_pad.shape[0]
    tb = _pick_batch_tile(B)
    grid = (B // tb,)

    in_specs = [pl.BlockSpec((tb, IMG_PAD), lambda i: (i, 0))]
    # Untiled weights/biases (constant block index, ~1.1 MB total): default double
    # buffering kept — VMEM capacity is a non-issue at these sizes.
    for p in params:
        in_specs.append(pl.BlockSpec(p.shape, lambda i: (0, 0)))
    out_specs = pl.BlockSpec((tb, 128), lambda i: (i, 0))

    flops = 2 * B * (IMG_PAD * 512 + 512 * 256 + 256 * 128)
    bytes_accessed = B * IMG_PAD * 2 + _param_bytes(params) + B * 128 * 4

    out_pad = pl.pallas_call(
        disc_kernel,
        out_shape=jax.ShapeDtypeStruct((B, 128), jnp.float32),
        grid=grid,
        in_specs=in_specs,
        out_specs=out_specs,
        compiler_params=pltpu.CompilerParams(
            dimension_semantics=("parallel",),
            vmem_limit_bytes=VMEM_LIMIT),
        cost_estimate=pl.CostEstimate(flops=flops,
                                      transcendentals=B * 128,          # sigmoid (exp)
                                      bytes_accessed=bytes_accessed),
    )(x_pad, *params)

    return out_pad[:, :1]                                        # validity (B, 1)


# ---------------------------------------------------------------------------
# Public forwards (PyTorch-equivalent API) + fused D(G(z)) path
# ---------------------------------------------------------------------------
@jax.jit
def generator_forward(z, params):
    B = z.shape[0]
    flat_pad = _generator_padded(z, params)
    # Drop padded lanes, then image.view(B, *image_shape). Images are bf16 (boundary I/O).
    return flat_pad[:, :IMG_FLAT].reshape(B, *IMAGE_SHAPE)


@jax.jit
def discriminator_forward(image, params):
    B = image.shape[0]
    x = image.reshape(B, -1)                                     # image.view(B, -1)
    # Fused pad 784 -> 896 + bf16 cast (padded dw1 rows are zero -> product unchanged).
    x_pad = jnp.pad(x, ((0, 0), (0, IMG_PAD - IMG_FLAT))).astype(jnp.bfloat16)
    return _discriminator_padded(x_pad, params)


@jax.jit
def gan_forward(z, gen_params, dis_params):
    """Fused D(G(z)) path: the discriminator consumes the generator's padded (B,896)
    bf16 output directly (padded cols are tanh(0)=0, dw1 padded rows are 0), skipping
    the slice / reshape / re-pad HBM round trips of the standalone path."""
    B = z.shape[0]
    flat_pad = _generator_padded(z, gen_params)
    validity = _discriminator_padded(flat_pad, dis_params)
    gen_imgs = flat_pad[:, :IMG_FLAT].reshape(B, *IMAGE_SHAPE)
    return gen_imgs, validity


# ---------------------------------------------------------------------------
# Deterministic parameter init (matches initialize_weights: Linear ~ N(0, 0.01),
# bias = 0; BatchNorm gamma ~ N(1.0, 0.02), beta = 0). Weights stored as (in, out)
# bf16 (random init, so the transpose vs. PyTorch's (out, in) is immaterial),
# pre-padded so every matmul and store is lane/sublane aligned.
# ---------------------------------------------------------------------------
def init_params(key):
    keys = jax.random.split(key, 16)
    ki = iter(keys)

    def lin_w(kin, din, dout, din_pad=None, dout_pad=None):
        w = 0.01 * jax.random.normal(kin, (din, dout), dtype=jnp.float32)
        pad_r = (din_pad - din) if din_pad else 0
        pad_c = (dout_pad - dout) if dout_pad else 0
        if pad_r or pad_c:
            w = jnp.pad(w, ((0, pad_r), (0, pad_c)))
        return w.astype(jnp.bfloat16)

    def bn(kin, d):
        g = 1.0 + 0.02 * jax.random.normal(kin, (1, d), dtype=jnp.float32)
        be = jnp.zeros((1, d), dtype=jnp.float32)
        return g, be

    # Generator: 100->128(BN)->256(BN)->512(BN)->784   (biases before BN dropped: no-ops)
    gw1 = lin_w(next(ki), NOISE, 128, din_pad=NOISE_PAD)
    gg1, gbe1 = bn(next(ki), 128)
    gw2 = lin_w(next(ki), 128, 256)
    gg2, gbe2 = bn(next(ki), 256)
    gw3 = lin_w(next(ki), 256, 512)
    gg3, gbe3 = bn(next(ki), 512)
    gw4 = lin_w(next(ki), 512, IMG_FLAT, dout_pad=IMG_PAD)
    gb4 = jnp.zeros((1, IMG_PAD), dtype=jnp.float32)
    gen_params = (gw1, gg1, gbe1,
                  gw2, gg2, gbe2,
                  gw3, gg3, gbe3,
                  gw4, gb4)

    # Discriminator: 784->512->256->1 (input padded to 896, final layer padded to 128 lanes)
    dw1 = lin_w(next(ki), IMG_FLAT, 512, din_pad=IMG_PAD)
    db1 = jnp.zeros((1, 512), dtype=jnp.float32)
    dw2 = lin_w(next(ki), 512, 256)
    db2 = jnp.zeros((1, 256), dtype=jnp.float32)
    dw3 = lin_w(next(ki), 256, 1, dout_pad=128)
    db3 = jnp.zeros((1, 128), dtype=jnp.float32)
    dis_params = (dw1, db1, dw2, db2, dw3, db3)

    return gen_params, dis_params


# ---------------------------------------------------------------------------
# Pure-JAX f32 reference (same padded bf16-stored weights, f32 math everywhere).
# ---------------------------------------------------------------------------
def reference_forward(z, gen_params, dis_params):
    (gw1, gg1, gbe1, gw2, gg2, gbe2, gw3, gg3, gbe3, gw4, gb4) = gen_params
    (dw1, db1, dw2, db2, dw3, db3) = dis_params
    f32 = lambda a: a.astype(jnp.float32)

    def bn(h, g, b):
        mean = jnp.mean(h, axis=0, keepdims=True)
        var = jnp.mean((h - mean) ** 2, axis=0, keepdims=True)   # biased var (train mode)
        return (h - mean) / jnp.sqrt(var + BN_EPS) * g + b

    def lrelu(x):
        return jnp.where(x >= 0, x, LRELU_SLOPE * x)

    zp = jnp.pad(z.astype(jnp.float32), ((0, 0), (0, NOISE_PAD - NOISE)))
    h = lrelu(bn(zp @ f32(gw1), gg1, gbe1))
    h = lrelu(bn(h @ f32(gw2), gg2, gbe2))
    h = lrelu(bn(h @ f32(gw3), gg3, gbe3))
    flat = jnp.tanh(h @ f32(gw4) + gb4)                          # (B, 896), pad cols = 0
    imgs = flat[:, :IMG_FLAT].reshape(z.shape[0], *IMAGE_SHAPE)

    h = lrelu(flat @ f32(dw1) + db1)
    h = lrelu(h @ f32(dw2) + db2)
    validity = jax.nn.sigmoid(h @ f32(dw3) + db3)[:, :1]
    return imgs, validity


if __name__ == "__main__":
    key = jax.random.PRNGKey(0)
    k_params, k_noise = jax.random.split(key)

    gen_params, dis_params = init_params(k_params)

    # Batch of 64 (the reference MNIST dataloader batch size): the discriminator and
    # generator head get a 2-step "parallel" grid (tb=32) -> both v7x TCs, pipelined DMA.
    batch = 64
    z = jax.random.normal(k_noise, (batch, NOISE), dtype=jnp.float32)

    # Standalone generator / discriminator forwards (PyTorch-equivalent API)
    gen_imgs = jax.block_until_ready(generator_forward(z, gen_params))
    assert gen_imgs.shape == (batch, *IMAGE_SHAPE)
    validity = jax.block_until_ready(discriminator_forward(gen_imgs, dis_params))
    assert validity.shape == (batch, 1)

    # Fused D(G(z)) path (no slice / re-pad HBM round trips for the intermediate)
    gen_imgs_f, validity_f = jax.block_until_ready(gan_forward(z, gen_params, dis_params))
    assert gen_imgs_f.shape == (batch, *IMAGE_SHAPE) and validity_f.shape == (batch, 1)

    # Pure-JAX f32 reference, loosened (bf16-appropriate) tolerance.
    ref_imgs, ref_validity = reference_forward(z, gen_params, dis_params)
    assert bool(jnp.allclose(gen_imgs.astype(jnp.float32), ref_imgs, atol=2e-2)), "gen mismatch"
    assert bool(jnp.allclose(validity, ref_validity, atol=2e-2)), "disc mismatch"
    assert bool(jnp.allclose(validity_f, ref_validity, atol=2e-2)), "fused GAN mismatch"

    assert bool(jnp.all(jnp.isfinite(gen_imgs))) and bool(jnp.all(jnp.isfinite(validity)))
    assert bool(jnp.all((validity > 0.0) & (validity < 1.0)))

    # TODO(synk): MNIST data loading, Adam/BCE training loop and loss plotting are
    # host-side orchestration, not kernel forward passes, so they are not reproduced.
    print("KERNEL_OK")
</pallas_src>

<mosaic_0001>
module attributes {stable_mosaic.version = 11 : i64} {
  func.func @gen_trunk_kernel(%arg0: memref<64x128xbf16, #tpu.memory_space<vmem>>, %arg1: memref<128x128xbf16, #tpu.memory_space<vmem>>, %arg2: memref<1x128xf32, #tpu.memory_space<vmem>>, %arg3: memref<1x128xf32, #tpu.memory_space<vmem>>, %arg4: memref<128x256xbf16, #tpu.memory_space<vmem>>, %arg5: memref<1x256xf32, #tpu.memory_space<vmem>>, %arg6: memref<1x256xf32, #tpu.memory_space<vmem>>, %arg7: memref<256x512xbf16, #tpu.memory_space<vmem>>, %arg8: memref<1x512xf32, #tpu.memory_space<vmem>>, %arg9: memref<1x512xf32, #tpu.memory_space<vmem>>, %arg10: memref<64x512xbf16, #tpu.memory_space<vmem>>) attributes {dimension_semantics = [], scalar_prefetch = 0 : i64, scratch_operands = 0 : i64, tpu.core_type = #tpu.core_type<tc>} {
    %c0 = arith.constant 0 : index
    %c0_0 = arith.constant 0 : index
    %0 = vector.load %arg0[%c0, %c0_0] : memref<64x128xbf16, #tpu.memory_space<vmem>>, vector<64x128xbf16>
    %c0_1 = arith.constant 0 : index
    %c0_2 = arith.constant 0 : index
    %1 = vector.load %arg1[%c0_1, %c0_2] : memref<128x128xbf16, #tpu.memory_space<vmem>>, vector<128x128xbf16>
    %cst = arith.constant dense<0.000000e+00> : vector<64x128xf32>
    %2 = tpu.matmul %0, %1, %cst {dimension_numbers = #tpu.dot_dimension_numbers<[1], [0], [0], [1], [0, 0, 1, 1], [], []>} : vector<64x128xbf16>, vector<128x128xbf16>, vector<64x128xf32> -> vector<64x128xf32>
    %c0_3 = arith.constant 0 : index
    %c0_4 = arith.constant 0 : index
    %3 = vector.load %arg2[%c0_3, %c0_4] : memref<1x128xf32, #tpu.memory_space<vmem>>, vector<1x128xf32>
    %c0_5 = arith.constant 0 : index
    %c0_6 = arith.constant 0 : index
    %4 = vector.load %arg3[%c0_5, %c0_6] : memref<1x128xf32, #tpu.memory_space<vmem>>, vector<1x128xf32>
    %cst_7 = arith.constant dense<0.000000e+00> : vector<128xf32>
    %5 = vector.multi_reduction <add>, %2, %cst_7 [0] : vector<64x128xf32> to vector<128xf32>
    %6 = vector.shape_cast %5 : vector<128xf32> to vector<1x128xf32>
    %cst_8 = arith.constant 1.562500e-02 : f32
    %7 = vector.broadcast %cst_8 : f32 to vector<1x128xf32>
    %8 = arith.mulf %6, %7 : vector<1x128xf32>
    %9 = arith.mulf %2, %2 : vector<64x128xf32>
    %cst_9 = arith.constant dense<0.000000e+00> : vector<128xf32>
    %10 = vector.multi_reduction <add>, %9, %cst_9 [0] : vector<64x128xf32> to vector<128xf32>
    %11 = vector.shape_cast %10 : vector<128xf32> to vector<1x128xf32>
    %cst_10 = arith.constant 1.562500e-02 : f32
    %12 = vector.broadcast %cst_10 : f32 to vector<1x128xf32>
    %13 = arith.mulf %11, %12 : vector<1x128xf32>
    %14 = arith.mulf %8, %8 : vector<1x128xf32>
    %15 = arith.subf %13, %14 : vector<1x128xf32>
    %cst_11 = arith.constant 8.000000e-01 : f32
    %16 = vector.broadcast %cst_11 : f32 to vector<1x128xf32>
    %17 = arith.addf %15, %16 : vector<1x128xf32>
    %18 = math.rsqrt %17 : vector<1x128xf32>
    %19 = arith.mulf %3, %18 : vector<1x128xf32>
    %20 = vector.broadcast %8 : vector<1x128xf32> to vector<64x128xf32>
    %21 = arith.subf %2, %20 : vector<64x128xf32>
    %22 = vector.broadcast %19 : vector<1x128xf32> to vector<64x128xf32>
    %23 = arith.mulf %21, %22 : vector<64x128xf32>
    %24 = vector.broadcast %4 : vector<1x128xf32> to vector<64x128xf32>
    %25 = arith.addf %23, %24 : vector<64x128xf32>
    %cst_12 = arith.constant 2.000000e-01 : f32
    %26 = vector.broadcast %cst_12 : f32 to vector<64x128xf32>
    %27 = arith.mulf %26, %25 : vector<64x128xf32>
    %28 = arith.maximumf %25, %27 : vector<64x128xf32>
    %29 = arith.truncf %28 : vector<64x128xf32> to vector<64x128xbf16>
    %c0_13 = arith.constant 0 : index
    %c0_14 = arith.constant 0 : index
    %30 = vector.load %arg4[%c0_13, %c0_14] : memref<128x256xbf16, #tpu.memory_space<vmem>>, vector<128x256xbf16>
    %cst_15 = arith.constant dense<0.000000e+00> : vector<64x256xf32>
    %31 = tpu.matmul %29, %30, %cst_15 {dimension_numbers = #tpu.dot_dimension_numbers<[1], [0], [0], [1], [0, 0, 1, 1], [], []>} : vector<64x128xbf16>, vector<128x256xbf16>, vector<64x256xf32> -> vector<64x256xf32>
    %c0_16 = arith.constant 0 : index
    %c0_17 = arith.constant 0 : index
    %32 = vector.load %arg5[%c0_16, %c0_17] : memref<1x256xf32, #tpu.memory_space<vmem>>, vector<1x256xf32>
    %c0_18 = arith.constant 0 : index
    %c0_19 = arith.constant 0 : index
    %33 = vector.load %arg6[%c0_18, %c0_19] : memref<1x256xf32, #tpu.memory_space<vmem>>, vector<1x256xf32>
    %cst_20 = arith.constant dense<0.000000e+00> : vector<256xf32>
    %34 = vector.multi_reduction <add>, %31, %cst_20 [0] : vector<64x256xf32> to vector<256xf32>
    %35 = vector.shape_cast %34 : vector<256xf32> to vector<1x256xf32>
    %cst_21 = arith.constant 1.562500e-02 : f32
    %36 = vector.broadcast %cst_21 : f32 to vector<1x256xf32>
    %37 = arith.mulf %35, %36 : vector<1x256xf32>
    %38 = arith.mulf %31, %31 : vector<64x256xf32>
    %cst_22 = arith.constant dense<0.000000e+00> : vector<256xf32>
    %39 = vector.multi_reduction <add>, %38, %cst_22 [0] : vector<64x256xf32> to vector<256xf32>
    %40 = vector.shape_cast %39 : vector<256xf32> to vector<1x256xf32>
    %cst_23 = arith.constant 1.562500e-02 : f32
    %41 = vector.broadcast %cst_23 : f32 to vector<1x256xf32>
    %42 = arith.mulf %40, %41 : vector<1x256xf32>
    %43 = arith.mulf %37, %37 : vector<1x256xf32>
    %44 = arith.subf %42, %43 : vector<1x256xf32>
    %cst_24 = arith.constant 8.000000e-01 : f32
    %45 = vector.broadcast %cst_24 : f32 to vector<1x256xf32>
    %46 = arith.addf %44, %45 : vector<1x256xf32>
    %47 = math.rsqrt %46 : vector<1x256xf32>
    %48 = arith.mulf %32, %47 : vector<1x256xf32>
    %49 = vector.broadcast %37 : vector<1x256xf32> to vector<64x256xf32>
    %50 = arith.subf %31, %49 : vector<64x256xf32>
    %51 = vector.broadcast %48 : vector<1x256xf32> to vector<64x256xf32>
    %52 = arith.mulf %50, %51 : vector<64x256xf32>
    %53 = vector.broadcast %33 : vector<1x256xf32> to vector<64x256xf32>
    %54 = arith.addf %52, %53 : vector<64x256xf32>
    %cst_25 = arith.constant 2.000000e-01 : f32
    %55 = vector.broadcast %cst_25 : f32 to vector<64x256xf32>
    %56 = arith.mulf %55, %54 : vector<64x256xf32>
    %57 = arith.maximumf %54, %56 : vector<64x256xf32>
    %58 = arith.truncf %57 : vector<64x256xf32> to vector<64x256xbf16>
    %c0_26 = arith.constant 0 : index
    %c0_27 = arith.constant 0 : index
    %59 = vector.load %arg7[%c0_26, %c0_27] : memref<256x512xbf16, #tpu.memory_space<vmem>>, vector<256x512xbf16>
    %cst_28 = arith.constant dense<0.000000e+00> : vector<64x512xf32>
    %60 = tpu.matmul %58, %59, %cst_28 {dimension_numbers = #tpu.dot_dimension_numbers<[1], [0], [0], [1], [0, 0, 1, 1], [], []>} : vector<64x256xbf16>, vector<256x512xbf16>, vector<64x512xf32> -> vector<64x512xf32>
    %c0_29 = arith.constant 0 : index
    %c0_30 = arith.constant 0 : index
    %61 = vector.load %arg8[%c0_29, %c0_30] : memref<1x512xf32, #tpu.memory_space<vmem>>, vector<1x512xf32>
    %c0_31 = arith.constant 0 : index
    %c0_32 = arith.constant 0 : index
    %62 = vector.load %arg9[%c0_31, %c0_32] : memref<1x512xf32, #tpu.memory_space<vmem>>, vector<1x512xf32>
    %cst_33 = arith.constant dense<0.000000e+00> : vector<512xf32>
    %63 = vector.multi_reduction <add>, %60, %cst_33 [0] : vector<64x512xf32> to vector<512xf32>
    %64 = vector.shape_cast %63 : vector<512xf32> to vector<1x512xf32>
    %cst_34 = arith.constant 1.562500e-02 : f32
    %65 = vector.broadcast %cst_34 : f32 to vector<1x512xf32>
    %66 = arith.mulf %64, %65 : vector<1x512xf32>
    %67 = arith.mulf %60, %60 : vector<64x512xf32>
    %cst_35 = arith.constant dense<0.000000e+00> : vector<512xf32>
    %68 = vector.multi_reduction <add>, %67, %cst_35 [0] : vector<64x512xf32> to vector<512xf32>
    %69 = vector.shape_cast %68 : vector<512xf32> to vector<1x512xf32>
    %cst_36 = arith.constant 1.562500e-02 : f32
    %70 = vector.broadcast %cst_36 : f32 to vector<1x512xf32>
    %71 = arith.mulf %69, %70 : vector<1x512xf32>
    %72 = arith.mulf %66, %66 : vector<1x512xf32>
    %73 = arith.subf %71, %72 : vector<1x512xf32>
    %cst_37 = arith.constant 8.000000e-01 : f32
    %74 = vector.broadcast %cst_37 : f32 to vector<1x512xf32>
    %75 = arith.addf %73, %74 : vector<1x512xf32>
    %76 = math.rsqrt %75 : vector<1x512xf32>
    %77 = arith.mulf %61, %76 : vector<1x512xf32>
    %78 = vector.broadcast %66 : vector<1x512xf32> to vector<64x512xf32>
    %79 = arith.subf %60, %78 : vector<64x512xf32>
    %80 = vector.broadcast %77 : vector<1x512xf32> to vector<64x512xf32>
    %81 = arith.mulf %79, %80 : vector<64x512xf32>
    %82 = vector.broadcast %62 : vector<1x512xf32> to vector<64x512xf32>
    %83 = arith.addf %81, %82 : vector<64x512xf32>
    %cst_38 = arith.constant 2.000000e-01 : f32
    %84 = vector.broadcast %cst_38 : f32 to vector<64x512xf32>
    %85 = arith.mulf %84, %83 : vector<64x512xf32>
    %86 = arith.maximumf %83, %85 : vector<64x512xf32>
    %87 = arith.truncf %86 : vector<64x512xf32> to vector<64x512xbf16>
    %c0_39 = arith.constant 0 : index
    %c0_40 = arith.constant 0 : index
    %88 = vector.load %arg10[%c0_39, %c0_40] : memref<64x512xbf16, #tpu.memory_space<vmem>>, vector<64x512xbf16>
    tpu.vector_store %arg10[%c0_39, %c0_40], %87 {strides = array<i32>} : memref<64x512xbf16, #tpu.memory_space<vmem>>, vector<64x512xbf16>,
    return
  }
}

module attributes {stable_mosaic.version = 11 : i64} {
  func.func @gen_head_kernel(%arg0: i32, %arg1: memref<32x512xbf16, #tpu.memory_space<vmem>>, %arg2: memref<512x896xbf16, #tpu.memory_space<vmem>>, %arg3: memref<1x896xf32, #tpu.memory_space<vmem>>, %arg4: memref<32x896xbf16, #tpu.memory_space<vmem>>) attributes {dimension_semantics = [#tpu.dimension_semantics<parallel>], iteration_bounds = array<i64: 2>, scalar_prefetch = 0 : i64, scratch_operands = 0 : i64, tpu.core_type = #tpu.core_type<tc>, window_params = [{transform_indices = @transform_0, window_bounds = array<i64: 32, 512>}, {pipeline_mode = #tpu.pipeline_mode<synchronous>, transform_indices = @transform_1, window_bounds = array<i64: 512, 896>}, {pipeline_mode = #tpu.pipeline_mode<synchronous>, transform_indices = @transform_2, window_bounds = array<i64: 1, 896>}, {transform_indices = @transform_3, window_bounds = array<i64: 32, 896>}]} {
    %c0 = arith.constant 0 : index
    %c0_0 = arith.constant 0 : index
    %0 = vector.load %arg1[%c0, %c0_0] : memref<32x512xbf16, #tpu.memory_space<vmem>>, vector<32x512xbf16>
    %c0_1 = arith.constant 0 : index
    %c0_2 = arith.constant 0 : index
    %1 = vector.load %arg2[%c0_1, %c0_2] : memref<512x896xbf16, #tpu.memory_space<vmem>>, vector<512x896xbf16>
    %cst = arith.constant dense<0.000000e+00> : vector<32x896xf32>
    %2 = tpu.matmul %0, %1, %cst {dimension_numbers = #tpu.dot_dimension_numbers<[1], [0], [0], [1], [0, 0, 1, 1], [], []>} : vector<32x512xbf16>, vector<512x896xbf16>, vector<32x896xf32> -> vector<32x896xf32>
    %c0_3 = arith.constant 0 : index
    %c0_4 = arith.constant 0 : index
    %3 = vector.load %arg3[%c0_3, %c0_4] : memref<1x896xf32, #tpu.memory_space<vmem>>, vector<1x896xf32>
    %4 = vector.broadcast %3 : vector<1x896xf32> to vector<32x896xf32>
    %5 = arith.addf %2, %4 : vector<32x896xf32>
    %6 = math.tanh %5 : vector<32x896xf32>
    %7 = arith.truncf %6 : vector<32x896xf32> to vector<32x896xbf16>
    %c0_5 = arith.constant 0 : index
    %c0_6 = arith.constant 0 : index
    %8 = vector.load %arg4[%c0_5, %c0_6] : memref<32x896xbf16, #tpu.memory_space<vmem>>, vector<32x896xbf16>
    tpu.vector_store %arg4[%c0_5, %c0_6], %7 {strides = array<i32>} : memref<32x896xbf16, #tpu.memory_space<vmem>>, vector<32x896xbf16>,
    return
  }
  func.func @transform_0(%arg0: i32) -> (i32, i32) {
    %c0_i32 = arith.constant 0 : i32
    %c0_i32_0 = arith.constant 0 : i32
    return %arg0, %c0_i32 : i32, i32
  }
  func.func @transform_1(%arg0: i32) -> (i32, i32) {
    %c0_i32 = arith.constant 0 : i32
    %c0_i32_0 = arith.constant 0 : i32
    %c0_i32_1 = arith.constant 0 : i32
    return %c0_i32, %c0_i32_0 : i32, i32
  }
  func.func @transform_2(%arg0: i32) -> (i32, i32) {
    %c0_i32 = arith.constant 0 : i32
    %c0_i32_0 = arith.constant 0 : i32
    %c0_i32_1 = arith.constant 0 : i32
    return %c0_i32, %c0_i32_0 : i32, i32
  }
  func.func @transform_3(%arg0: i32) -> (i32, i32) {
    %c0_i32 = arith.constant 0 : i32
    %c0_i32_0 = arith.constant 0 : i32
    return %arg0, %c0_i32 : i32, i32
  }
}

</mosaic_0001>

<llo_original>
// kernel: generator_forward.2
$region0: #{generator_forward.2}
  #allocation0 [shape = 'u32[]', space=smem, size = 0x4, offset = 0x4, fixed_abs, tag = 'smem constant byte address 0x4 - core index']
  #allocation1 [shape = 'u32[144,128]{1,0:T(1,128)}', space=vmem, size = 0x12000, scoped, tag = 'internal scratch']
  %s0 = inlined_call_operand.vmem [shape: bf16[64,128], index: 0, kind: input, shape index: {}]
  %s1 = inlined_call_operand.hbm [shape: bf16[128,128], index: 1, kind: input, shape index: {}]
  %s2 = inlined_call_operand.vmem [shape: f32[1,128], index: 2, kind: input, shape index: {}]
  %s3 = inlined_call_operand.vmem [shape: f32[1,128], index: 3, kind: input, shape index: {}]
  %s4 = inlined_call_operand.vmem [shape: bf16[128,256], index: 4, kind: input, shape index: {}]
  %s5 = inlined_call_operand.vmem [shape: f32[1,256], index: 5, kind: input, shape index: {}]
  %s6 = inlined_call_operand.vmem [shape: f32[1,256], index: 6, kind: input, shape index: {}]
  %s7 = inlined_call_operand.hbm [shape: bf16[256,512], index: 7, kind: input, shape index: {}]
  %s8 = inlined_call_operand.vmem [shape: f32[1,512], index: 8, kind: input, shape index: {}]
  %s9 = inlined_call_operand.vmem [shape: f32[1,512], index: 9, kind: input, shape index: {}]
  %s10 = inlined_call_operand.vmem [shape: bf16[64,512], index: 10, kind: output, shape index: {}]
  %s11 = sld [smem:[#allocation0]]
  $region58: #{generator_forward.2} parent=0
    _
  %s13 = ssub.s32 1, %s11
  %s14 = scalar_select 0, %s13, %s11
  $region1: #{generator_forward.2} parent=0
    #allocation2 [shape = 'u8[32768]{0}', space=vmem, size = 0x8000, scoped, tag = 'input window, operand 1, single buffered']
    #allocation3 [shape = 's32[1]{0}', space=sflag, size = 0x4, scoped, tag = 'scoped memory for generator_forward.2']
    #allocation4 [shape = 'u8[262144]{0}', space=vmem, size = 0x40000, scoped, tag = 'input window, operand 7, single buffered']
    #allocation5 [shape = 's32[1]{0}', space=sflag, size = 0x4, scoped, tag = 'scoped memory for generator_forward.2']
    %15 = vsyncpa [#allocation3], 0
    %16 = vsyncpa [#allocation5], 0
    // Predicated region
    $region2: #{generator_forward.2} parent=1 // pred_check
      _
    $region3: #{generator_forward.2} parent=1 // pred_check_branch
      %18 = sbr.rel (0) target = $region5
    $region4: #{generator_forward.2} parent=1 // pred_region
      _
    $region5: #{generator_forward.2} parent=1 // pred_fallthru
      _
    // Predicated region
    $region6: #{generator_forward.2} parent=1 // pred_check
      _
    $region7: #{generator_forward.2} parent=1 // pred_check_branch
      %20 = sbr.rel (0) target = $region9
    $region8: #{generator_forward.2} parent=1 // pred_region
      %s22 = ssub.s32 1024, 1024
      %23 = vsyncadd [#allocation3], %s22
      %s24 = sshll.u32 [#allocation2], 4
      %s25 = int_to_ptr.vmem [resolvable:$true] %s24
      %30 = dma.hbm_to_vmem [thread:$0]  %s1, 1024, %s25, [#allocation3], 64, 64, 4
    $region9: #{generator_forward.2} parent=1 // pred_fallthru
      _
    // Predicated region
    $region10: #{generator_forward.2} parent=1 // pred_check
      _
    $region11: #{generator_forward.2} parent=1 // pred_check_branch
      %32 = sbr.rel (0) target = $region13
    $region12: #{generator_forward.2} parent=1 // pred_region
      _
    $region13: #{generator_forward.2} parent=1 // pred_fallthru
      _
    // Predicated region
    $region14: #{generator_forward.2} parent=1 // pred_check
      _
    $region15: #{generator_forward.2} parent=1 // pred_check_branch
      %34 = sbr.rel (0) target = $region17
    $region16: #{generator_forward.2} parent=1 // pred_region
      _
    $region17: #{generator_forward.2} parent=1 // pred_fallthru
      _
    // Predicated region
    $region18: #{generator_forward.2} parent=1 // pred_check
      _
    $region19: #{generator_forward.2} parent=1 // pred_check_branch
      %36 = sbr.rel (0) target = $region21
    $region20: #{generator_forward.2} parent=1 // pred_region
      _
    $region21: #{generator_forward.2} parent=1 // pred_fallthru
      _
    // Predicated region
    $region22: #{generator_forward.2} parent=1 // pred_check
      _
    $region23: #{generator_forward.2} parent=1 // pred_check_branch
      %38 = sbr.rel (0) target = $region25
    $region24: #{generator_forward.2} parent=1 // pred_region
      _
    $region25: #{generator_forward.2} parent=1 // pred_fallthru
      _
    // Predicated region
    $region26: #{generator_forward.2} parent=1 // pred_check
      _
    $region27: #{generator_forward.2} parent=1 // pred_check_branch
      %40 = sbr.rel (0) target = $region29
    $region28: #{generator_forward.2} parent=1 // pred_region
      _
    $region29: #{generator_forward.2} parent=1 // pred_fallthru
      _
    // Predicated region
    $region30: #{generator_forward.2} parent=1 // pred_check
      _
    $region31: #{generator_forward.2} parent=1 // pred_check_branch
      %42 = sbr.rel (0) target = $region33
    $region32: #{generator_forward.2} parent=1 // pred_region
      %s44 = ssub.s32 8192, 8192
      %45 = vsyncadd [#allocation5], %s44
      %s46 = sshll.u32 [#allocation4], 4
      %s47 = int_to_ptr.vmem [resolvable:$true] %s46
      %52 = dma.hbm_to_vmem [thread:$0]  %s7, 8192, %s47, [#allocation5], 256, 256, 16
    $region33: #{generator_forward.2} parent=1 // pred_fallthru
      _
    // Predicated region
    $region34: #{generator_forward.2} parent=1 // pred_check
      _
    $region35: #{generator_forward.2} parent=1 // pred_check_branch
      %54 = sbr.rel (0) target = $region37
    $region36: #{generator_forward.2} parent=1 // pred_region
      _
    $region37: #{generator_forward.2} parent=1 // pred_fallthru
      _
    // Predicated region
    $region38: #{generator_forward.2} parent=1 // pred_check
      _
    $region39: #{generator_forward.2} parent=1 // pred_check_branch
      %56 = sbr.rel (0) target = $region41
    $region40: #{generator_forward.2} parent=1 // pred_region
      _
    $region41: #{generator_forward.2} parent=1 // pred_fallthru
      _
    // Predicated region
    $region42: #{generator_forward.2} parent=1 // pred_check
      _
    $region43: #{generator_forward.2} parent=1 // pred_check_branch
      %58 = sbr.rel (0) target = $region45
    $region44: #{generator_forward.2} parent=1 // pred_region
      %59 = dma.done [#allocation3], 1024
    $region45: #{generator_forward.2} parent=1 // pred_fallthru
      _
    // Predicated region
    $region46: #{generator_forward.2} parent=1 // pred_check
      _
    $region47: #{generator_forward.2} parent=1 // pred_check_branch
      %61 = sbr.rel (0) target = $region49
    $region48: #{generator_forward.2} parent=1 // pred_region
      %62 = dma.done [#allocation5], 8192
    $region49: #{generator_forward.2} parent=1 // pred_fallthru
      _
    %v64 = vld [vmem:[%s0] sm:$0xf]
    %v65 = vld [vmem:[%s0 + $0x4] sm:$0xf]
    %v66 = vld [vmem:[%s0 + $0x8] sm:$0xf]
    %v67 = vld [vmem:[%s0 + $0xc] sm:$0xf]
    %v68 = vld [vmem:[%s0 + $0x10] sm:$0xf]
    %v69 = vld [vmem:[%s0 + $0x14] sm:$0xf]
    %v70 = vld [vmem:[%s0 + $0x18] sm:$0xf]
    %v71 = vld [vmem:[%s0 + $0x1c] sm:$0xf]
    %v72 = vld [vmem:[#allocation2] sm:$0xf]
    %v73 = vld [vmem:[#allocation2 + $0x4] sm:$0xf]
    %v74 = vld [vmem:[#allocation2 + $0x8] sm:$0xf]
    %v75 = vld [vmem:[#allocation2 + $0xc] sm:$0xf]
    %v76 = vld [vmem:[#allocation2 + $0x10] sm:$0xf]
    %v77 = vld [vmem:[#allocation2 + $0x14] sm:$0xf]
    %v78 = vld [vmem:[#allocation2 + $0x18] sm:$0xf]
    %v79 = vld [vmem:[#allocation2 + $0x1c] sm:$0xf]
    %v80 = vld [vmem:[#allocation2 + $0x20] sm:$0xf]
    %v81 = vld [vmem:[#allocation2 + $0x24] sm:$0xf]
    %v82 = vld [vmem:[#allocation2 + $0x28] sm:$0xf]
    %v83 = vld [vmem:[#allocation2 + $0x2c] sm:$0xf]
    %v84 = vld [vmem:[#allocation2 + $0x30] sm:$0xf]
    %v85 = vld [vmem:[#allocation2 + $0x34] sm:$0xf]
    %v86 = vld [vmem:[#allocation2 + $0x38] sm:$0xf]
    %v87 = vld [vmem:[#allocation2 + $0x3c] sm:$0xf]
    %v96 = vunpack.c.l.b16 %v64
    %v97 = vunpack.c.l.b16 %v65
    %v98 = vunpack.c.l.b16 %v66
    %v99 = vunpack.c.l.b16 %v67
    %v100 = vunpack.c.l.b16 %v68
    %v101 = vunpack.c.l.b16 %v69
    %v102 = vunpack.c.l.b16 %v70
    %v103 = vunpack.c.l.b16 %v71
    %v104 = vpack.c.b16 %v97, %v96
    %v105 = vpack.c.b16 %v99, %v98
    %v106 = vpack.c.b16 %v101, %v100
    %v107 = vpack.c.b16 %v103, %v102
    %v128 = vunpack.c.l.b16 %v72
    %v129 = vunpack.c.l.b16 %v73
    %v130 = vunpack.c.l.b16 %v74
    %v131 = vunpack.c.l.b16 %v75
    %v132 = vunpack.c.l.b16 %v76
    %v133 = vunpack.c.l.b16 %v77
    %v134 = vunpack.c.l.b16 %v78
    %v135 = vunpack.c.l.b16 %v79
    %v136 = vunpack.c.l.b16 %v80
    %v137 = vunpack.c.l.b16 %v81
    %v138 = vunpack.c.l.b16 %v82
    %v139 = vunpack.c.l.b16 %v83
    %v140 = vunpack.c.l.b16 %v84
    %v141 = vunpack.c.l.b16 %v85
    %v142 = vunpack.c.l.b16 %v86
    %v143 = vunpack.c.l.b16 %v87
    %v144 = vpack.c.b16 %v129, %v128
    %v145 = vpack.c.b16 %v131, %v130
    %v146 = vpack.c.b16 %v133, %v132
    %v147 = vpack.c.b16 %v135, %v134
    %v148 = vpack.c.b16 %v137, %v136
    %v149 = vpack.c.b16 %v139, %v138
    %v150 = vpack.c.b16 %v141, %v140
    %v151 = vpack.c.b16 %v143, %v142
    %160 = vmatprep.subr.bf16.mxu0 0
    %161 = vmatpush1.bf16.msra.mxu0 %v144
    %162 = vmatprep.subr.bf16.mxu0 0
    %163 = vmatpush1.bf16.msra.mxu0 %v145
    %164 = vmatprep.subr.bf16.mxu0 0
    %165 = vmatpush1.bf16.msra.mxu0 %v146
    %166 = vmatprep.subr.bf16.mxu0 0
    %167 = vmatpush1.bf16.msra.mxu0 %v147
    %168 = vmatprep.subr.bf16.mxu0 0
    %169 = vmatpush1.bf16.msra.mxu0 %v148
    %170 = vmatprep.subr.bf16.mxu0 0
    %171 = vmatpush1.bf16.msra.mxu0 %v149
    %172 = vmatprep.subr.bf16.mxu0 0
    %173 = vmatpush1.bf16.msra.mxu0 %v150
    %174 = vmatprep.subr.bf16.mxu0 0
    %175 = vmatpush1.bf16.msra.mxu0 %v151
    %176 = vmatprep.subr.bf16.mxu0 0
    %177 = vmatpush1.bf16.msra.mxu0 0
    %178 = vmatprep.subr.bf16.mxu0 0
    %179 = vmatpush1.bf16.msra.mxu0 0
    %180 = vmatprep.subr.bf16.mxu0 0
    %181 = vmatpush1.bf16.msra.mxu0 0
    %182 = vmatprep.subr.bf16.mxu0 0
    %183 = vmatpush1.bf16.msra.mxu0 0
    %184 = vmatprep.subr.bf16.mxu0 0
    %185 = vmatpush1.bf16.msra.mxu0 0
    %186 = vmatprep.subr.bf16.mxu0 0
    %187 = vmatpush1.bf16.msra.mxu0 0
    %188 = vmatprep.subr.bf16.mxu0 0
    %189 = vmatpush1.bf16.msra.mxu0 0
    %190 = vmatprep.subr.bf16.mxu0 0
    %191 = vmatpush1.bf16.msra.mxu0 0
    %192 = vmatprep.mubr.bf16.mxu0 0
    %193 = vmatmul.mubr.bf16.gmra.mrb[0].mxu0 %v104
    %v194 = vpop.f32.mrb[0].mxu0
    %v195 = vadd.f32 0.0, %v194
    %v196 = vpop.f32.mrb[0].mxu0
    %v197 = vpop.f32.mrb[0].mxu0
    %v198 = vadd.f32 0.0, %v197
    %v199 = vpop.f32.mrb[0].mxu0
    %200 = vmatprep.mubr.bf16.mxu0 0
    %201 = vmatmul.mubr.bf16.gmra.mrb[0].mxu0 %v105
    %v202 = vpop.f32.mrb[0].mxu0
    %v203 = vadd.f32 0.0, %v202
    %v204 = vpop.f32.mrb[0].mxu0
    %v205 = vpop.f32.mrb[0].mxu0
    %v206 = vadd.f32 0.0, %v205
    %v207 = vpop.f32.mrb[0].mxu0
    %208 = vmatprep.mubr.bf16.mxu0 0
    %209 = vmatmul.mubr.bf16.gmra.mrb[0].mxu0 %v106
    %v210 = vpop.f32.mrb[0].mxu0
    %v211 = vadd.f32 0.0, %v210
    %v212 = vpop.f32.mrb[0].mxu0
    %v213 = vpop.f32.mrb[0].mxu0
    %v214 = vadd.f32 0.0, %v213
    %v215 = vpop.f32.mrb[0].mxu0
    %216 = vmatprep.mubr.bf16.mxu0 0
    %217 = vmatmul.mubr.bf16.gmra.mrb[0].mxu0 %v107
    %v218 = vpop.f32.mrb[0].mxu0
    %v219 = vadd.f32 0.0, %v218
    %v220 = vpop.f32.mrb[0].mxu0
    %v221 = vpop.f32.mrb[0].mxu0
    %v222 = vadd.f32 0.0, %v221
    %v223 = vpop.f32.mrb[0].mxu0
    %224 = vdwg.mxu0
    %v225 = vld [vmem:[%s2] sm:$0x1]
    %v226 = vld [vmem:[%s3] sm:$0x1]
    %v227 = vadd.f32 %v195, %v198
    %v228 = vadd.f32 %v227, %v203
    %v229 = vadd.f32 %v228, %v206
    %v230 = vadd.f32 %v229, %v211
    %v231 = vadd.f32 %v230, %v214
    %v232 = vadd.f32 %v231, %v219
    %v233 = vadd.f32 %v232, %v222
    %v234 = vrot.slane %v233, 4
    %v235 = vadd.f32 %v233, %v234
    %v236 = vrot.slane %v235, 2
    %v237 = vadd.f32 %v235, %v236
    %v238 = vrot.slane %v237, 1
    %v239 = vadd.f32 %v237, %v238
    %v240 = vmul.f32 %v239, 0.015625
    %v241 = vmul.f32 %v195, %v195
    %v242 = vmul.f32 %v198, %v198
    %v243 = vmul.f32 %v203, %v203
    %v244 = vmul.f32 %v206, %v206
    %v245 = vmul.f32 %v211, %v211
    %v246 = vmul.f32 %v214, %v214
    %v247 = vmul.f32 %v219, %v219
    %v248 = vmul.f32 %v222, %v222
    %v249 = vadd.f32 %v241, %v242
    %v250 = vadd.f32 %v249, %v243
    %v251 = vadd.f32 %v250, %v244
    %v252 = vadd.f32 %v251, %v245
    %v253 = vadd.f32 %v252, %v246
    %v254 = vadd.f32 %v253, %v247
    %v255 = vadd.f32 %v254, %v248
    %v256 = vrot.slane %v255, 4
    %v257 = vadd.f32 %v255, %v256
    %v258 = vrot.slane %v257, 2
    %v259 = vadd.f32 %v257, %v258
    %v260 = vrot.slane %v259, 1
    %v261 = vadd.f32 %v259, %v260
    %v262 = vmul.f32 %v261, 0.015625
    %v263 = vmul.f32 %v240, %v240
    %v264 = vsub.f32 %v262, %v263
    %v265 = vadd.f32 %v264, 0.8
    %v266 = vrsqrt.pop %v265
    %v267 = vmul.f32 %v225, %v266
    %v268 = vsub.f32 %v195, %v240
    %v269 = vsub.f32 %v198, %v240
    %v270 = vsub.f32 %v203, %v240
    %v271 = vsub.f32 %v206, %v240
    %v272 = vsub.f32 %v211, %v240
    %v273 = vsub.f32 %v214, %v240
    %v274 = vsub.f32 %v219, %v240
    %v275 = vsub.f32 %v222, %v240
    %v277 = vlaneseq
    %v278 = vshrl.u32 %v277, 7
    %v279 = vsub.s32 0, %v278
    %v280 = vrot.slane %v267, %v279
    %v282 = vmul.f32 %v268, %v280
    %v283 = vmul.f32 %v269, %v280
    %v284 = vmul.f32 %v270, %v280
    %v285 = vmul.f32 %v271, %v280
    %v286 = vmul.f32 %v272, %v280
    %v287 = vmul.f32 %v273, %v280
    %v288 = vmul.f32 %v274, %v280
    %v289 = vmul.f32 %v275, %v280
    %v291 = vlaneseq
    %v292 = vshrl.u32 %v291, 7
    %v293 = vsub.s32 0, %v292
    %v294 = vrot.slane %v226, %v293
    %v296 = vadd.f32 %v282, %v294
    %v297 = vadd.f32 %v283, %v294
    %v298 = vadd.f32 %v284, %v294
    %v299 = vadd.f32 %v285, %v294
    %v300 = vadd.f32 %v286, %v294
    %v301 = vadd.f32 %v287, %v294
    %v302 = vadd.f32 %v288, %v294
    %v303 = vadd.f32 %v289, %v294
    %v304 = vmul.f32 %v296, 0.2
    %v305 = vmul.f32 %v297, 0.2
    %v306 = vmul.f32 %v298, 0.2
    %v307 = vmul.f32 %v299, 0.2
    %v308 = vmul.f32 %v300, 0.2
    %v309 = vmul.f32 %v301, 0.2
    %v310 = vmul.f32 %v302, 0.2
    %v311 = vmul.f32 %v303, 0.2
    %v312 = vmax.f32 %v296, %v304
    %v313 = vmax.f32 %v297, %v305
    %v314 = vmax.f32 %v298, %v306
    %v315 = vmax.f32 %v299, %v307
    %v316 = vmax.f32 %v300, %v308
    %v317 = vmax.f32 %v301, %v309
    %v318 = vmax.f32 %v302, %v310
    %v319 = vmax.f32 %v303, %v311
    %v320 = vpack.c.bf16 %v313, %v312
    %v321 = vpack.c.bf16 %v315, %v314
    %v322 = vpack.c.bf16 %v317, %v316
    %v323 = vpack.c.bf16 %v319, %v318
    %v324 = vld [vmem:[%s4] sm:$0xff]
    %v325 = vld [vmem:[%s4 + $0x8] sm:$0xff]
    %v326 = vld [vmem:[%s4 + $0x10] sm:$0xff]
    %v327 = vld [vmem:[%s4 + $0x18] sm:$0xff]
    %v328 = vld [vmem:[%s4 + $0x20] sm:$0xff]
    %v329 = vld [vmem:[%s4 + $0x28] sm:$0xff]
    %v330 = vld [vmem:[%s4 + $0x30] sm:$0xff]
    %v331 = vld [vmem:[%s4 + $0x38] sm:$0xff]
    %v332 = vld [vmem:[%s4 + $0x40] sm:$0xff]
    %v333 = vld [vmem:[%s4 + $0x48] sm:$0xff]
    %v334 = vld [vmem:[%s4 + $0x50] sm:$0xff]
    %v335 = vld [vmem:[%s4 + $0x58] sm:$0xff]
    %v336 = vld [vmem:[%s4 + $0x60] sm:$0xff]
    %v337 = vld [vmem:[%s4 + $0x68] sm:$0xff]
    %v338 = vld [vmem:[%s4 + $0x70] sm:$0xff]
    %v339 = vld [vmem:[%s4 + $0x78] sm:$0xff]
    %v356 = vunpack.c.l.b16 %v324
    %v357 = vunpack.c.h.b16 %v324
    %v358 = vunpack.c.l.b16 %v325
    %v359 = vunpack.c.h.b16 %v325
    %v360 = vunpack.c.l.b16 %v326
    %v361 = vunpack.c.h.b16 %v326
    %v362 = vunpack.c.l.b16 %v327
    %v363 = vunpack.c.h.b16 %v327
    %v364 = vunpack.c.l.b16 %v328
    %v365 = vunpack.c.h.b16 %v328
    %v366 = vunpack.c.l.b16 %v329
    %v367 = vunpack.c.h.b16 %v329
    %v368 = vunpack.c.l.b16 %v330
    %v369 = vunpack.c.h.b16 %v330
    %v370 = vunpack.c.l.b16 %v331
    %v371 = vunpack.c.h.b16 %v331
    %v372 = vunpack.c.l.b16 %v332
    %v373 = vunpack.c.h.b16 %v332
    %v374 = vunpack.c.l.b16 %v333
    %v375 = vunpack.c.h.b16 %v333
    %v376 = vunpack.c.l.b16 %v334
    %v377 = vunpack.c.h.b16 %v334
    %v378 = vunpack.c.l.b16 %v335
    %v379 = vunpack.c.h.b16 %v335
    %v380 = vunpack.c.l.b16 %v336
    %v381 = vunpack.c.h.b16 %v336
    %v382 = vunpack.c.l.b16 %v337
    %v383 = vunpack.c.h.b16 %v337
    %v384 = vunpack.c.l.b16 %v338
    %v385 = vunpack.c.h.b16 %v338
    %v386 = vunpack.c.l.b16 %v339
    %v387 = vunpack.c.h.b16 %v339
    %v388 = vpack.c.b16 %v358, %v356
    %v389 = vpack.c.b16 %v359, %v357
    %v390 = vpack.c.b16 %v362, %v360
    %v391 = vpack.c.b16 %v363, %v361
    %v392 = vpack.c.b16 %v366, %v364
    %v393 = vpack.c.b16 %v367, %v365
    %v394 = vpack.c.b16 %v370, %v368
    %v395 = vpack.c.b16 %v371, %v369
    %v396 = vpack.c.b16 %v374, %v372
    %v397 = vpack.c.b16 %v375, %v373
    %v398 = vpack.c.b16 %v378, %v376
    %v399 = vpack.c.b16 %v379, %v377
    %v400 = vpack.c.b16 %v382, %v380
    %v401 = vpack.c.b16 %v383, %v381
    %v402 = vpack.c.b16 %v386, %v384
    %v403 = vpack.c.b16 %v387, %v385
    %420 = vmatprep.subr.bf16.mxu0 %v389
    %421 = vmatpush1.bf16.msra.mxu0 %v388
    %422 = vmatprep.subr.bf16.mxu0 %v391
    %423 = vmatpush1.bf16.msra.mxu0 %v390
    %424 = vmatprep.subr.bf16.mxu0 %v393
    %425 = vmatpush1.bf16.msra.mxu0 %v392
    %426 = vmatprep.subr.bf16.mxu0 %v395
    %427 = vmatpush1.bf16.msra.mxu0 %v394
    %428 = vmatprep.subr.bf16.mxu0 %v397
    %429 = vmatpush1.bf16.msra.mxu0 %v396
    %430 = vmatprep.subr.bf16.mxu0 %v399
    %431 = vmatpush1.bf16.msra.mxu0 %v398
    %432 = vmatprep.subr.bf16.mxu0 %v401
    %433 = vmatpush1.bf16.msra.mxu0 %v400
    %434 = vmatprep.subr.bf16.mxu0 %v403
    %435 = vmatpush1.bf16.msra.mxu0 %v402
    %436 = vmatprep.subr.bf16.mxu0 0
    %437 = vmatpush1.bf16.msra.mxu0 0
    %438 = vmatprep.subr.bf16.mxu0 0
    %439 = vmatpush1.bf16.msra.mxu0 0
    %440 = vmatprep.subr.bf16.mxu0 0
    %441 = vmatpush1.bf16.msra.mxu0 0
    %442 = vmatprep.subr.bf16.mxu0 0
    %443 = vmatpush1.bf16.msra.mxu0 0
    %444 = vmatprep.subr.bf16.mxu0 0
    %445 = vmatpush1.bf16.msra.mxu0 0
    %446 = vmatprep.subr.bf16.mxu0 0
    %447 = vmatpush1.bf16.msra.mxu0 0
    %448 = vmatprep.subr.bf16.mxu0 0
    %449 = vmatpush1.bf16.msra.mxu0 0
    %450 = vmatprep.subr.bf16.mxu0 0
    %451 = vmatpush1.bf16.msra.mxu0 0
    %452 = vmatprep.mubr.bf16.mxu0 0
    %453 = vmatmul.mubr.bf16.gmra.mrb[0].mxu0 %v320
    %v454 = vpop.f32.mrb[0].mxu0
    %v455 = vadd.f32 0.0, %v454
    %v456 = vpop.f32.mrb[0].mxu0
    %v457 = vadd.f32 0.0, %v456
    %v458 = vpop.f32.mrb[0].mxu0
    %v459 = vadd.f32 0.0, %v458
    %v460 = vpop.f32.mrb[0].mxu0
    %v461 = vadd.f32 0.0, %v460
    %462 = vmatprep.mubr.bf16.mxu0 0
    %463 = vmatmul.mubr.bf16.gmra.mrb[0].mxu0 %v321
    %v464 = vpop.f32.mrb[0].mxu0
    %v465 = vadd.f32 0.0, %v464
    %v466 = vpop.f32.mrb[0].mxu0
    %v467 = vadd.f32 0.0, %v466
    %v468 = vpop.f32.mrb[0].mxu0
    %v469 = vadd.f32 0.0, %v468
    %v470 = vpop.f32.mrb[0].mxu0
    %v471 = vadd.f32 0.0, %v470
    %472 = vmatprep.mubr.bf16.mxu0 0
    %473 = vmatmul.mubr.bf16.gmra.mrb[0].mxu0 %v322
    %v474 = vpop.f32.mrb[0].mxu0
    %v475 = vadd.f32 0.0, %v474
    %v476 = vpop.f32.mrb[0].mxu0
    %v477 = vadd.f32 0.0, %v476
    %v478 = vpop.f32.mrb[0].mxu0
    %v479 = vadd.f32 0.0, %v478
    %v480 = vpop.f32.mrb[0].mxu0
    %v481 = vadd.f32 0.0, %v480
    %482 = vmatprep.mubr.bf16.mxu0 0
    %483 = vmatmul.mubr.bf16.gmra.mrb[0].mxu0 %v323
    %v484 = vpop.f32.mrb[0].mxu0
    %v485 = vadd.f32 0.0, %v484
    %v486 = vpop.f32.mrb[0].mxu0
    %v487 = vadd.f32 0.0, %v486
    %v488 = vpop.f32.mrb[0].mxu0
    %v489 = vadd.f32 0.0, %v488
    %v490 = vpop.f32.mrb[0].mxu0
    %v491 = vadd.f32 0.0, %v490
    %492 = vdwg.mxu0
    %v493 = vld [vmem:[%s5] sm:$0x3]
    %v494 = vld [vmem:[%s6] sm:$0x3]
    %v495 = vadd.f32 %v455, %v459
    %v496 = vadd.f32 %v495, %v465
    %v497 = vadd.f32 %v496, %v469
    %v498 = vadd.f32 %v497, %v475
    %v499 = vadd.f32 %v498, %v479
    %v500 = vadd.f32 %v499, %v485
    %v501 = vadd.f32 %v500, %v489
    %v502 = vrot.slane %v501, 4
    %v503 = vadd.f32 %v501, %v502
    %v504 = vrot.slane %v503, 2
    %v505 = vadd.f32 %v503, %v504
    %v506 = vrot.slane %v505, 1
    %v507 = vadd.f32 %v505, %v506
    %v508 = vadd.f32 %v457, %v461
    %v509 = vadd.f32 %v508, %v467
    %v510 = vadd.f32 %v509, %v471
    %v511 = vadd.f32 %v510, %v477
    %v512 = vadd.f32 %v511, %v481
    %v513 = vadd.f32 %v512, %v487
    %v514 = vadd.f32 %v513, %v491
    %v515 = vrot.slane %v514, 4
    %v516 = vadd.f32 %v514, %v515
    %v517 = vrot.slane %v516, 2
    %v518 = vadd.f32 %v516, %v517
    %v519 = vrot.slane %v518, 1
    %v520 = vadd.f32 %v518, %v519
    %v521 = vmul.f32 %v507, 0.015625
    %v522 = vmul.f32 %v520, 0.015625
    %v523 = vmul.f32 %v455, %v455
    %v524 = vmul.f32 %v457, %v457
    %v525 = vmul.f32 %v459, %v459
    %v526 = vmul.f32 %v461, %v461
    %v527 = vmul.f32 %v465, %v465
    %v528 = vmul.f32 %v467, %v467
    %v529 = vmul.f32 %v469, %v469
    %v530 = vmul.f32 %v471, %v471
    %v531 = vmul.f32 %v475, %v475
    %v532 = vmul.f32 %v477, %v477
    %v533 = vmul.f32 %v479, %v479
    %v534 = vmul.f32 %v481, %v481
    %v535 = vmul.f32 %v485, %v485
    %v536 = vmul.f32 %v487, %v487
    %v537 = vmul.f32 %v489, %v489
    %v538 = vmul.f32 %v491, %v491
    %v539 = vadd.f32 %v523, %v525
    %v540 = vadd.f32 %v539, %v527
    %v541 = vadd.f32 %v540, %v529
    %v542 = vadd.f32 %v541, %v531
    %v543 = vadd.f32 %v542, %v533
    %v544 = vadd.f32 %v543, %v535
    %v545 = vadd.f32 %v544, %v537
    %v546 = vrot.slane %v545, 4
    %v547 = vadd.f32 %v545, %v546
    %v548 = vrot.slane %v547, 2
    %v549 = vadd.f32 %v547, %v548
    %v550 = vrot.slane %v549, 1
    %v551 = vadd.f32 %v549, %v550
    %v552 = vadd.f32 %v524, %v526
    %v553 = vadd.f32 %v552, %v528
    %v554 = vadd.f32 %v553, %v530
    %v555 = vadd.f32 %v554, %v532
    %v556 = vadd.f32 %v555, %v534
    %v557 = vadd.f32 %v556, %v536
    %v558 = vadd.f32 %v557, %v538
    %v559 = vrot.slane %v558, 4
    %v560 = vadd.f32 %v558, %v559
    %v561 = vrot.slane %v560, 2
    %v562 = vadd.f32 %v560, %v561
    %v563 = vrot.slane %v562, 1
    %v564 = vadd.f32 %v562, %v563
    %v565 = vmul.f32 %v551, 0.015625
    %v566 = vmul.f32 %v564, 0.015625
    %v567 = vmul.f32 %v521, %v521
    %v568 = vmul.f32 %v522, %v522
    %v569 = vsub.f32 %v565, %v567
    %v570 = vsub.f32 %v566, %v568
    %v571 = vadd.f32 %v569, 0.8
    %v572 = vadd.f32 %v570, 0.8
    %v573 = vrsqrt.pop %v571
    %v574 = vrsqrt.pop %v572
    %v577 = vcombine.low %v573, %v574
    %v579 = vunpack.c.l.s4 1966171168
    %v580 = vunpack.c.0.s8 %v579
    %v581 = vlaneseq
    %v582 = vshrl.u32 %v581, 7
    %v583 = vsub.s32 %v580, %v582
    %v584 = vrot.slane %v577, %v583
    %v586 = vunpack.c.l.s4 1966171168
    %v587 = vunpack.c.0.s8 %v586
    %v588 = vlaneseq
    %v589 = vshrl.u32 %v588, 7
    %v590 = vsub.s32 %v587, %v589
    %v591 = vrot.slane %v584, %v590
    %v593 = vmul.f32 %v493, %v591
    %v594 = vsub.f32 %v455, %v521
    %v595 = vsub.f32 %v457, %v522
    %v596 = vsub.f32 %v459, %v521
    %v597 = vsub.f32 %v461, %v522
    %v598 = vsub.f32 %v465, %v521
    %v599 = vsub.f32 %v467, %v522
    %v600 = vsub.f32 %v469, %v521
    %v601 = vsub.f32 %v471, %v522
    %v602 = vsub.f32 %v475, %v521
    %v603 = vsub.f32 %v477, %v522
    %v604 = vsub.f32 %v479, %v521
    %v605 = vsub.f32 %v481, %v522
    %v606 = vsub.f32 %v485, %v521
    %v607 = vsub.f32 %v487, %v522
    %v608 = vsub.f32 %v489, %v521
    %v609 = vsub.f32 %v491, %v522
    %v611 = vlaneseq
    %v612 = vshrl.u32 %v611, 7
    %v613 = vsub.s32 0, %v612
    %v614 = vrot.slane %v593, %v613
    %v615 = vlaneseq
    %v616 = vshrl.u32 %v615, 7
    %v617 = vsub.s32 1, %v616
    %v618 = vrot.slane %v593, %v617
    %v621 = vmul.f32 %v594, %v614
    %v622 = vmul.f32 %v595, %v618
    %v623 = vmul.f32 %v596, %v614
    %v624 = vmul.f32 %v597, %v618
    %v625 = vmul.f32 %v598, %v614
    %v626 = vmul.f32 %v599, %v618
    %v627 = vmul.f32 %v600, %v614
    %v628 = vmul.f32 %v601, %v618
    %v629 = vmul.f32 %v602, %v614
    %v630 = vmul.f32 %v603, %v618
    %v631 = vmul.f32 %v604, %v614
    %v632 = vmul.f32 %v605, %v618
    %v633 = vmul.f32 %v606, %v614
    %v634 = vmul.f32 %v607, %v618
    %v635 = vmul.f32 %v608, %v614
    %v636 = vmul.f32 %v609, %v618
    %v638 = vlaneseq
    %v639 = vshrl.u32 %v638, 7
    %v640 = vsub.s32 0, %v639
    %v641 = vrot.slane %v494, %v640
    %v642 = vlaneseq
    %v643 = vshrl.u32 %v642, 7
    %v644 = vsub.s32 1, %v643
    %v645 = vrot.slane %v494, %v644
    %v648 = vadd.f32 %v621, %v641
    %v649 = vadd.f32 %v622, %v645
    %v650 = vadd.f32 %v623, %v641
    %v651 = vadd.f32 %v624, %v645
    %v652 = vadd.f32 %v625, %v641
    %v653 = vadd.f32 %v626, %v645
    %v654 = vadd.f32 %v627, %v641
    %v655 = vadd.f32 %v628, %v645
    %v656 = vadd.f32 %v629, %v641
    %v657 = vadd.f32 %v630, %v645
    %v658 = vadd.f32 %v631, %v641
    %v659 = vadd.f32 %v632, %v645
    %v660 = vadd.f32 %v633, %v641
    %v661 = vadd.f32 %v634, %v645
    %v662 = vadd.f32 %v635, %v641
    %v663 = vadd.f32 %v636, %v645
    %v664 = vmul.f32 %v648, 0.2
    %v665 = vmul.f32 %v649, 0.2
    %v666 = vmul.f32 %v650, 0.2
    %v667 = vmul.f32 %v651, 0.2
    %v668 = vmul.f32 %v652, 0.2
    %v669 = vmul.f32 %v653, 0.2
    %v670 = vmul.f32 %v654, 0.2
    %v671 = vmul.f32 %v655, 0.2
    %v672 = vmul.f32 %v656, 0.2
    %v673 = vmul.f32 %v657, 0.2
    %v674 = vmul.f32 %v658, 0.2
    %v675 = vmul.f32 %v659, 0.2
    %v676 = vmul.f32 %v660, 0.2
    %v677 = vmul.f32 %v661, 0.2
    %v678 = vmul.f32 %v662, 0.2
    %v679 = vmul.f32 %v663, 0.2
    %v680 = vmax.f32 %v648, %v664
    %v681 = vmax.f32 %v649, %v665
    %v682 = vmax.f32 %v650, %v666
    %v683 = vmax.f32 %v651, %v667
    %v684 = vmax.f32 %v652, %v668
    %v685 = vmax.f32 %v653, %v669
    %v686 = vmax.f32 %v654, %v670
    %v687 = vmax.f32 %v655, %v671
    %v688 = vmax.f32 %v656, %v672
    %v689 = vmax.f32 %v657, %v673
    %v690 = vmax.f32 %v658, %v674
    %v691 = vmax.f32 %v659, %v675
    %v692 = vmax.f32 %v660, %v676
    %v693 = vmax.f32 %v661, %v677
    %v694 = vmax.f32 %v662, %v678
    %v695 = vmax.f32 %v663, %v679
    %v696 = vpack.c.bf16 %v682, %v680
    %v697 = vpack.c.bf16 %v683, %v681
    %v698 = vpack.c.bf16 %v686, %v684
    %v699 = vpack.c.bf16 %v687, %v685
    %v700 = vpack.c.bf16 %v690, %v688
    %v701 = vpack.c.bf16 %v691, %v689
    %v702 = vpack.c.bf16 %v694, %v692
    %v703 = vpack.c.bf16 %v695, %v693
    %v704 = vld [vmem:[#allocation4] sm:$0xff]
    %v705 = vld [vmem:[#allocation4 + $0x8] sm:$0xff]
    %v706 = vld [vmem:[#allocation4 + $0x10] sm:$0xff]
    %v707 = vld [vmem:[#allocation4 + $0x18] sm:$0xff]
    %v708 = vld [vmem:[#allocation4 + $0x20] sm:$0xff]
    %v709 = vld [vmem:[#allocation4 + $0x28] sm:$0xff]
    %v710 = vld [vmem:[#allocation4 + $0x30] sm:$0xff]
    %v711 = vld [vmem:[#allocation4 + $0x38] sm:$0xff]
    %v712 = vld [vmem:[#allocation4 + $0x40] sm:$0xff]
    %v713 = vld [vmem:[#allocation4 + $0x48] sm:$0xff]
    %v714 = vld [vmem:[#allocation4 + $0x50] sm:$0xff]
    %v715 = vld [vmem:[#allocation4 + $0x58] sm:$0xff]
    %v716 = vld [vmem:[#allocation4 + $0x60] sm:$0xff]
    %v717 = vld [vmem:[#allocation4 + $0x68] sm:$0xff]
    %v718 = vld [vmem:[#allocation4 + $0x70] sm:$0xff]
    %v719 = vld [vmem:[#allocation4 + $0x78] sm:$0xff]
    %v720 = vld [vmem:[#allocation4 + $0x80] sm:$0xff]
    %v721 = vld [vmem:[#allocation4 + $0x88] sm:$0xff]
    %v722 = vld [vmem:[#allocation4 + $0x90] sm:$0xff]
    %v723 = vld [vmem:[#allocation4 + $0x98] sm:$0xff]
    %v724 = vld [vmem:[#allocation4 + $0xa0] sm:$0xff]
    %v725 = vld [vmem:[#allocation4 + $0xa8] sm:$0xff]
    %v726 = vld [vmem:[#allocation4 + $0xb0] sm:$0xff]
    %v727 = vld [vmem:[#allocation4 + $0xb8] sm:$0xff]
    %v728 = vld [vmem:[#allocation4 + $0xc0] sm:$0xff]
    %v729 = vld [vmem:[#allocation4 + $0xc8] sm:$0xff]
    %v730 = vld [vmem:[#allocation4 + $0xd0] sm:$0xff]
    %v731 = vld [vmem:[#allocation4 + $0xd8] sm:$0xff]
    %v732 = vld [vmem:[#allocation4 + $0xe0] sm:$0xff]
    %v733 = vld [vmem:[#allocation4 + $0xe8] sm:$0xff]
    %v734 = vld [vmem:[#allocation4 + $0xf0] sm:$0xff]
    %v735 = vld [vmem:[#allocation4 + $0xf8] sm:$0xff]
    %v736 = vld [vmem:[#allocation4 + $0x100] sm:$0xff]
    %v737 = vld [vmem:[#allocation4 + $0x108] sm:$0xff]
    %v738 = vld [vmem:[#allocation4 + $0x110] sm:$0xff]
    %v739 = vld [vmem:[#allocation4 + $0x118] sm:$0xff]
    %v740 = vld [vmem:[#allocation4 + $0x120] sm:$0xff]
    %v741 = vld [vmem:[#allocation4 + $0x128] sm:$0xff]
    %v742 = vld [vmem:[#allocation4 + $0x130] sm:$0xff]
    %v743 = vld [vmem:[#allocation4 + $0x138] sm:$0xff]
    %v744 = vld [vmem:[#allocation4 + $0x140] sm:$0xff]
    %v745 = vld [vmem:[#allocation4 + $0x148] sm:$0xff]
    %v746 = vld [vmem:[#allocation4 + $0x150] sm:$0xff]
    %v747 = vld [vmem:[#allocation4 + $0x158] sm:$0xff]
    %v748 = vld [vmem:[#allocation4 + $0x160] sm:$0xff]
    %v749 = vld [vmem:[#allocation4 + $0x168] sm:$0xff]
    %v750 = vld [vmem:[#allocation4 + $0x170] sm:$0xff]
    %v751 = vld [vmem:[#allocation4 + $0x178] sm:$0xff]
    %v752 = vld [vmem:[#allocation4 + $0x180] sm:$0xff]
    %v753 = vld [vmem:[#allocation4 + $0x188] sm:$0xff]
    %v754 = vld [vmem:[#allocation4 + $0x190] sm:$0xff]
    %v755 = vld [vmem:[#allocation4 + $0x198] sm:$0xff]
    %v756 = vld [vmem:[#allocation4 + $0x1a0] sm:$0xff]
    %v757 = vld [vmem:[#allocation4 + $0x1a8] sm:$0xff]
    %v758 = vld [vmem:[#allocation4 + $0x1b0] sm:$0xff]
    %v759 = vld [vmem:[#allocation4 + $0x1b8] sm:$0xff]
    %v760 = vld [vmem:[#allocation4 + $0x1c0] sm:$0xff]
    %v761 = vld [vmem:[#allocation4 + $0x1c8] sm:$0xff]
    %v762 = vld [vmem:[#allocation4 + $0x1d0] sm:$0xff]
    %v763 = vld [vmem:[#allocation4 + $0x1d8] sm:$0xff]
    %v764 = vld [vmem:[#allocation4 + $0x1e0] sm:$0xff]
    %v765 = vld [vmem:[#allocation4 + $0x1e8] sm:$0xff]
    %v766 = vld [vmem:[#allocation4 + $0x1f0] sm:$0xff]
    %v767 = vld [vmem:[#allocation4 + $0x1f8] sm:$0xff]
    %v832 = vunpack.c.l.b16 %v704
    %v833 = vunpack.c.h.b16 %v704
    %v834 = vunpack.c.l.b16 %v705
    %v835 = vunpack.c.h.b16 %v705
    %v836 = vunpack.c.l.b16 %v706
    %v837 = vunpack.c.h.b16 %v706
    %v838 = vunpack.c.l.b16 %v707
    %v839 = vunpack.c.h.b16 %v707
    %v840 = vunpack.c.l.b16 %v708
    %v841 = vunpack.c.h.b16 %v708
    %v842 = vunpack.c.l.b16 %v709
    %v843 = vunpack.c.h.b16 %v709
    %v844 = vunpack.c.l.b16 %v710
    %v845 = vunpack.c.h.b16 %v710
    %v846 = vunpack.c.l.b16 %v711
    %v847 = vunpack.c.h.b16 %v711
    %v848 = vunpack.c.l.b16 %v712
    %v849 = vunpack.c.h.b16 %v712
    %v850 = vunpack.c.l.b16 %v713
    %v851 = vunpack.c.h.b16 %v713
    %v852 = vunpack.c.l.b16 %v714
    %v853 = vunpack.c.h.b16 %v714
    %v854 = vunpack.c.l.b16 %v715
    %v855 = vunpack.c.h.b16 %v715
    %v856 = vunpack.c.l.b16 %v716
    %v857 = vunpack.c.h.b16 %v716
    %v858 = vunpack.c.l.b16 %v717
    %v859 = vunpack.c.h.b16 %v717
    %v860 = vunpack.c.l.b16 %v718
    %v861 = vunpack.c.h.b16 %v718
    %v862 = vunpack.c.l.b16 %v719
    %v863 = vunpack.c.h.b16 %v719
    %v864 = vunpack.c.l.b16 %v720
    %v865 = vunpack.c.h.b16 %v720
    %v866 = vunpack.c.l.b16 %v721
    %v867 = vunpack.c.h.b16 %v721
    %v868 = vunpack.c.l.b16 %v722
    %v869 = vunpack.c.h.b16 %v722
    %v870 = vunpack.c.l.b16 %v723
    %v871 = vunpack.c.h.b16 %v723
    %v872 = vunpack.c.l.b16 %v724
    %v873 = vunpack.c.h.b16 %v724
    %v874 = vunpack.c.l.b16 %v725
    %v875 = vunpack.c.h.b16 %v725
    %v876 = vunpack.c.l.b16 %v726
    %v877 = vunpack.c.h.b16 %v726
    %v878 = vunpack.c.l.b16 %v727
    %v879 = vunpack.c.h.b16 %v727
    %v880 = vunpack.c.l.b16 %v728
    %v881 = vunpack.c.h.b16 %v728
    %v882 = vunpack.c.l.b16 %v729
    %v883 = vunpack.c.h.b16 %v729
    %v884 = vunpack.c.l.b16 %v730
    %v885 = vunpack.c.h.b16 %v730
    %v886 = vunpack.c.l.b16 %v731
    %v887 = vunpack.c.h.b16 %v731
    %v888 = vunpack.c.l.b16 %v732
    %v889 = vunpack.c.h.b16 %v732
    %v890 = vunpack.c.l.b16 %v733
    %v891 = vunpack.c.h.b16 %v733
    %v892 = vunpack.c.l.b16 %v734
    %v893 = vunpack.c.h.b16 %v734
    %v894 = vunpack.c.l.b16 %v735
    %v895 = vunpack.c.h.b16 %v735
    %v896 = vunpack.c.l.b16 %v736
    %v897 = vunpack.c.h.b16 %v736
    %v898 = vunpack.c.l.b16 %v737
    %v899 = vunpack.c.h.b16 %v737
    %v900 = vunpack.c.l.b16 %v738
    %v901 = vunpack.c.h.b16 %v738
    %v902 = vunpack.c.l.b16 %v739
    %v903 = vunpack.c.h.b16 %v739
    %v904 = vunpack.c.l.b16 %v740
    %v905 = vunpack.c.h.b16 %v740
    %v906 = vunpack.c.l.b16 %v741
    %v907 = vunpack.c.h.b16 %v741
    %v908 = vunpack.c.l.b16 %v742
    %v909 = vunpack.c.h.b16 %v742
    %v910 = vunpack.c.l.b16 %v743
    %v911 = vunpack.c.h.b16 %v743
    %v912 = vunpack.c.l.b16 %v744
    %v913 = vunpack.c.h.b16 %v744
    %v914 = vunpack.c.l.b16 %v745
    %v915 = vunpack.c.h.b16 %v745
    %v916 = vunpack.c.l.b16 %v746
    %v917 = vunpack.c.h.b16 %v746
    %v918 = vunpack.c.l.b16 %v747
    %v919 = vunpack.c.h.b16 %v747
    %v920 = vunpack.c.l.b16 %v748
    %v921 = vunpack.c.h.b16 %v748
    %v922 = vunpack.c.l.b16 %v749
    %v923 = vunpack.c.h.b16 %v749
    %v924 = vunpack.c.l.b16 %v750
    %v925 = vunpack.c.h.b16 %v750
    %v926 = vunpack.c.l.b16 %v751
    %v927 = vunpack.c.h.b16 %v751
    %v928 = vunpack.c.l.b16 %v752
    %v929 = vunpack.c.h.b16 %v752
    %v930 = vunpack.c.l.b16 %v753
    %v931 = vunpack.c.h.b16 %v753
    %v932 = vunpack.c.l.b16 %v754
    %v933 = vunpack.c.h.b16 %v754
    %v934 = vunpack.c.l.b16 %v755
    %v935 = vunpack.c.h.b16 %v755
    %v936 = vunpack.c.l.b16 %v756
    %v937 = vunpack.c.h.b16 %v756
    %v938 = vunpack.c.l.b16 %v757
    %v939 = vunpack.c.h.b16 %v757
    %v940 = vunpack.c.l.b16 %v758
    %v941 = vunpack.c.h.b16 %v758
    %v942 = vunpack.c.l.b16 %v759
    %v943 = vunpack.c.h.b16 %v759
    %v944 = vunpack.c.l.b16 %v760
    %v945 = vunpack.c.h.b16 %v760
    %v946 = vunpack.c.l.b16 %v761
    %v947 = vunpack.c.h.b16 %v761
    %v948 = vunpack.c.l.b16 %v762
    %v949 = vunpack.c.h.b16 %v762
    %v950 = vunpack.c.l.b16 %v763
    %v951 = vunpack.c.h.b16 %v763
    %v952 = vunpack.c.l.b16 %v764
    %v953 = vunpack.c.h.b16 %v764
    %v954 = vunpack.c.l.b16 %v765
    %v955 = vunpack.c.h.b16 %v765
    %v956 = vunpack.c.l.b16 %v766
    %v957 = vunpack.c.h.b16 %v766
    %v958 = vunpack.c.l.b16 %v767
    %v959 = vunpack.c.h.b16 %v767
    %v960 = vpack.c.b16 %v836, %v832
    %v961 = vpack.c.b16 %v837, %v833
    %v962 = vpack.c.b16 %v838, %v834
    %v963 = vpack.c.b16 %v839, %v835
    %v964 = vpack.c.b16 %v844, %v840
    %v965 = vpack.c.b16 %v845, %v841
    %v966 = vpack.c.b16 %v846, %v842
    %v967 = vpack.c.b16 %v847, %v843
    %v968 = vpack.c.b16 %v852, %v848
    %v969 = vpack.c.b16 %v853, %v849
    %v970 = vpack.c.b16 %v854, %v850
    %v971 = vpack.c.b16 %v855, %v851
    %v972 = vpack.c.b16 %v860, %v856
    %v973 = vpack.c.b16 %v861, %v857
    %v974 = vpack.c.b16 %v862, %v858
    %v975 = vpack.c.b16 %v863, %v859
    %v976 = vpack.c.b16 %v868, %v864
    %v977 = vpack.c.b16 %v869, %v865
    %v978 = vpack.c.b16 %v870, %v866
    %v979 = vpack.c.b16 %v871, %v867
    %v980 = vpack.c.b16 %v876, %v872
    %v981 = vpack.c.b16 %v877, %v873
    %v982 = vpack.c.b16 %v878, %v874
    %v983 = vpack.c.b16 %v879, %v875
    %v984 = vpack.c.b16 %v884, %v880
    %v985 = vpack.c.b16 %v885, %v881
    %v986 = vpack.c.b16 %v886, %v882
    %v987 = vpack.c.b16 %v887, %v883
    %v988 = vpack.c.b16 %v892, %v888
    %v989 = vpack.c.b16 %v893, %v889
    %v990 = vpack.c.b16 %v894, %v890
    %v991 = vpack.c.b16 %v895, %v891
    %v992 = vpack.c.b16 %v900, %v896
    %v993 = vpack.c.b16 %v901, %v897
    %v994 = vpack.c.b16 %v902, %v898
    %v995 = vpack.c.b16 %v903, %v899
    %v996 = vpack.c.b16 %v908, %v904
    %v997 = vpack.c.b16 %v909, %v905
    %v998 = vpack.c.b16 %v910, %v906
    %v999 = vpack.c.b16 %v911, %v907
    %v1000 = vpack.c.b16 %v916, %v912
    %v1001 = vpack.c.b16 %v917, %v913
    %v1002 = vpack.c.b16 %v918, %v914
    %v1003 = vpack.c.b16 %v919, %v915
    %v1004 = vpack.c.b16 %v924, %v920
    %v1005 = vpack.c.b16 %v925, %v921
    %v1006 = vpack.c.b16 %v926, %v922
    %v1007 = vpack.c.b16 %v927, %v923
    %v1008 = vpack.c.b16 %v932, %v928
    %v1009 = vpack.c.b16 %v933, %v929
    %v1010 = vpack.c.b16 %v934, %v930
    %v1011 = vpack.c.b16 %v935, %v931
    %v1012 = vpack.c.b16 %v940, %v936
    %v1013 = vpack.c.b16 %v941, %v937
    %v1014 = vpack.c.b16 %v942, %v938
    %v1015 = vpack.c.b16 %v943, %v939
    %v1016 = vpack.c.b16 %v948, %v944
    %v1017 = vpack.c.b16 %v949, %v945
    %v1018 = vpack.c.b16 %v950, %v946
    %v1019 = vpack.c.b16 %v951, %v947
    %v1020 = vpack.c.b16 %v956, %v952
    %v1021 = vpack.c.b16 %v957, %v953
    %v1022 = vpack.c.b16 %v958, %v954
    %v1023 = vpack.c.b16 %v959, %v955
    %1088 = vmatprep.subr.bf16.mxu0 %v961
    %1089 = vmatpush1.bf16.msra.mxu0 %v960
    %1090 = vmatprep.subr.bf16.mxu0 %v965
    %1091 = vmatpush1.bf16.msra.mxu0 %v964
    %1092 = vmatprep.subr.bf16.mxu0 %v969
    %1093 = vmatpush1.bf16.msra.mxu0 %v968
    %1094 = vmatprep.subr.bf16.mxu0 %v973
    %1095 = vmatpush1.bf16.msra.mxu0 %v972
    %1096 = vmatprep.subr.bf16.mxu0 %v977
    %1097 = vmatpush1.bf16.msra.mxu0 %v976
    %1098 = vmatprep.subr.bf16.mxu0 %v981
    %1099 = vmatpush1.bf16.msra.mxu0 %v980
    %1100 = vmatprep.subr.bf16.mxu0 %v985
    %1101 = vmatpush1.bf16.msra.mxu0 %v984
    %1102 = vmatprep.subr.bf16.mxu0 %v989
    %1103 = vmatpush1.bf16.msra.mxu0 %v988
    %1104 = vmatprep.subr.bf16.mxu0 %v993
    %1105 = vmatpush1.bf16.msra.mxu0 %v992
    %1106 = vmatprep.subr.bf16.mxu0 %v997
    %1107 = vmatpush1.bf16.msra.mxu0 %v996
    %1108 = vmatprep.subr.bf16.mxu0 %v1001
    %1109 = vmatpush1.bf16.msra.mxu0 %v1000
    %1110 = vmatprep.subr.bf16.mxu0 %v1005
    %1111 = vmatpush1.bf16.msra.mxu0 %v1004
    %1112 = vmatprep.subr.bf16.mxu0 %v1009
    %1113 = vmatpush1.bf16.msra.mxu0 %v1008
    %1114 = vmatprep.subr.bf16.mxu0 %v1013
    %1115 = vmatpush1.bf16.msra.mxu0 %v1012
    %1116 = vmatprep.subr.bf16.mxu0 %v1017
    %1117 = vmatpush1.bf16.msra.mxu0 %v1016
    %1118 = vmatprep.subr.bf16.mxu0 %v1021
    %1119 = vmatpush1.bf16.msra.mxu0 %v1020
    %1120 = vmatprep.mubr.bf16.mxu0 %v697
    %1121 = vmatmul.mubr.bf16.gmra.mrb[0].mxu0 %v696
    %v1122 = vpop.f32.mrb[0].mxu0
    %v1123 = vadd.f32 0.0, %v1122
    %v1124 = vpop.f32.mrb[0].mxu0
    %v1125 = vadd.f32 0.0, %v1124
    %v1126 = vpop.f32.mrb[0].mxu0
    %v1127 = vadd.f32 0.0, %v1126
    %v1128 = vpop.f32.mrb[0].mxu0
    %v1129 = vadd.f32 0.0, %v1128
    %1130 = vmatprep.mubr.bf16.mxu0 %v699
    %1131 = vmatmul.mubr.bf16.gmra.mrb[0].mxu0 %v698
    %v1132 = vpop.f32.mrb[0].mxu0
    %v1133 = vadd.f32 0.0, %v1132
    %v1134 = vpop.f32.mrb[0].mxu0
    %v1135 = vadd.f32 0.0, %v1134
    %v1136 = vpop.f32.mrb[0].mxu0
    %v1137 = vadd.f32 0.0, %v1136
    %v1138 = vpop.f32.mrb[0].mxu0
    %v1139 = vadd.f32 0.0, %v1138
    %1140 = vmatprep.mubr.bf16.mxu0 %v701
    %1141 = vmatmul.mubr.bf16.gmra.mrb[0].mxu0 %v700
    %v1142 = vpop.f32.mrb[0].mxu0
    %v1143 = vadd.f32 0.0, %v1142
    %v1144 = vpop.f32.mrb[0].mxu0
    %v1145 = vadd.f32 0.0, %v1144
    %v1146 = vpop.f32.mrb[0].mxu0
    %v1147 = vadd.f32 0.0, %v1146
    %v1148 = vpop.f32.mrb[0].mxu0
    %v1149 = vadd.f32 0.0, %v1148
    %1150 = vmatprep.mubr.bf16.mxu0 %v703
    %1151 = vmatmul.mubr.bf16.gmra.mrb[0].mxu0 %v702
    %v1152 = vpop.f32.mrb[0].mxu0
    %v1153 = vadd.f32 0.0, %v1152
    %v1154 = vpop.f32.mrb[0].mxu0
    %v1155 = vadd.f32 0.0, %v1154
    %v1156 = vpop.f32.mrb[0].mxu0
    %v1157 = vadd.f32 0.0, %v1156
    %v1158 = vpop.f32.mrb[0].mxu0
    %v1159 = vadd.f32 0.0, %v1158
    %1160 = vdwg.mxu0
    %1161 = vmatprep.subr.bf16.mxu0 %v963
    %1162 = vmatpush1.bf16.msra.mxu0 %v962
    %1163 = vmatprep.subr.bf16.mxu0 %v967
    %1164 = vmatpush1.bf16.msra.mxu0 %v966
    %1165 = vmatprep.subr.bf16.mxu0 %v971
    %1166 = vmatpush1.bf16.msra.mxu0 %v970
    %1167 = vmatprep.subr.bf16.mxu0 %v975
    %1168 = vmatpush1.bf16.msra.mxu0 %v974
    %1169 = vmatprep.subr.bf16.mxu0 %v979
    %1170 = vmatpush1.bf16.msra.mxu0 %v978
    %1171 = vmatprep.subr.bf16.mxu0 %v983
    %1172 = vmatpush1.bf16.msra.mxu0 %v982
    %1173 = vmatprep.subr.bf16.mxu0 %v987
    %1174 = vmatpush1.bf16.msra.mxu0 %v986
    %1175 = vmatprep.subr.bf16.mxu0 %v991
    %1176 = vmatpush1.bf16.msra.mxu0 %v990
    %1177 = vmatprep.subr.bf16.mxu0 %v995
    %1178 = vmatpush1.bf16.msra.mxu0 %v994
    %1179 = vmatprep.subr.bf16.mxu0 %v999
    %1180 = vmatpush1.bf16.msra.mxu0 %v998
    %1181 = vmatprep.subr.bf16.mxu0 %v1003
    %1182 = vmatpush1.bf16.msra.mxu0 %v1002
    %1183 = vmatprep.subr.bf16.mxu0 %v1007
    %1184 = vmatpush1.bf16.msra.mxu0 %v1006
    %1185 = vmatprep.subr.bf16.mxu0 %v1011
    %1186 = vmatpush1.bf16.msra.mxu0 %v1010
    %1187 = vmatprep.subr.bf16.mxu0 %v1015
    %1188 = vmatpush1.bf16.msra.mxu0 %v1014
    %1189 = vmatprep.subr.bf16.mxu0 %v1019
    %1190 = vmatpush1.bf16.msra.mxu0 %v1018
    %1191 = vmatprep.subr.bf16.mxu0 %v1023
    %1192 = vmatpush1.bf16.msra.mxu0 %v1022
    %1193 = vmatprep.mubr.bf16.mxu0 %v697
    %1194 = vmatmul.mubr.bf16.gmra.mrb[0].mxu0 %v696
    %v1195 = vpop.f32.mrb[0].mxu0
    %v1196 = vadd.f32 0.0, %v1195
    %v1197 = vpop.f32.mrb[0].mxu0
    %v1198 = vadd.f32 0.0, %v1197
    %v1199 = vpop.f32.mrb[0].mxu0
    %v1200 = vadd.f32 0.0, %v1199
    %v1201 = vpop.f32.mrb[0].mxu0
    %v1202 = vadd.f32 0.0, %v1201
    %1203 = vmatprep.mubr.bf16.mxu0 %v699
    %1204 = vmatmul.mubr.bf16.gmra.mrb[0].mxu0 %v698
    %v1205 = vpop.f32.mrb[0].mxu0
    %v1206 = vadd.f32 0.0, %v1205
    %v1207 = vpop.f32.mrb[0].mxu0
    %v1208 = vadd.f32 0.0, %v1207
    %v1209 = vpop.f32.mrb[0].mxu0
    %v1210 = vadd.f32 0.0, %v1209
    %v1211 = vpop.f32.mrb[0].mxu0
    %v1212 = vadd.f32 0.0, %v1211
    %1213 = vmatprep.mubr.bf16.mxu0 %v701
    %1214 = vmatmul.mubr.bf16.gmra.mrb[0].mxu0 %v700
    %v1215 = vpop.f32.mrb[0].mxu0
    %v1216 = vadd.f32 0.0, %v1215
    %v1217 = vpop.f32.mrb[0].mxu0
    %v1218 = vadd.f32 0.0, %v1217
    %v1219 = vpop.f32.mrb[0].mxu0
    %v1220 = vadd.f32 0.0, %v1219
    %v1221 = vpop.f32.mrb[0].mxu0
    %v1222 = vadd.f32 0.0, %v1221
    %1223 = vmatprep.mubr.bf16.mxu0 %v703
    %1224 = vmatmul.mubr.bf16.gmra.mrb[0].mxu0 %v702
    %v1225 = vpop.f32.mrb[0].mxu0
    %v1226 = vadd.f32 0.0, %v1225
    %v1227 = vpop.f32.mrb[0].mxu0
    %v1228 = vadd.f32 0.0, %v1227
    %v1229 = vpop.f32.mrb[0].mxu0
    %v1230 = vadd.f32 0.0, %v1229
    %v1231 = vpop.f32.mrb[0].mxu0
    %v1232 = vadd.f32 0.0, %v1231
    %1233 = vdwg.mxu0
    %v1234 = vld [vmem:[%s8] sm:$0xf]
    %v1235 = vld [vmem:[%s9] sm:$0xf]
    %v1236 = vadd.f32 %v1123, %v1127
    %v1237 = vadd.f32 %v1236, %v1133
    %v1238 = vadd.f32 %v1237, %v1137
    %v1239 = vadd.f32 %v1238, %v1143
    %v1240 = vadd.f32 %v1239, %v1147
    %v1241 = vadd.f32 %v1240, %v1153
    %v1242 = vadd.f32 %v1241, %v1157
    %v1243 = vrot.slane %v1242, 4
    %v1244 = vadd.f32 %v1242, %v1243
    %v1245 = vrot.slane %v1244, 2
    %v1246 = vadd.f32 %v1244, %v1245
    %v1247 = vrot.slane %v1246, 1
    %v1248 = vadd.f32 %v1246, %v1247
    %v1249 = vadd.f32 %v1125, %v1129
    %v1250 = vadd.f32 %v1249, %v1135
    %v1251 = vadd.f32 %v1250, %v1139
    %v1252 = vadd.f32 %v1251, %v1145
    %v1253 = vadd.f32 %v1252, %v1149
    %v1254 = vadd.f32 %v1253, %v1155
    %v1255 = vadd.f32 %v1254, %v1159
    %v1256 = vrot.slane %v1255, 4
    %v1257 = vadd.f32 %v1255, %v1256
    %v1258 = vrot.slane %v1257, 2
    %v1259 = vadd.f32 %v1257, %v1258
    %v1260 = vrot.slane %v1259, 1
    %v1261 = vadd.f32 %v1259, %v1260
    %v1262 = vadd.f32 %v1196, %v1200
    %v1263 = vadd.f32 %v1262, %v1206
    %v1264 = vadd.f32 %v1263, %v1210
    %v1265 = vadd.f32 %v1264, %v1216
    %v1266 = vadd.f32 %v1265, %v1220
    %v1267 = vadd.f32 %v1266, %v1226
    %v1268 = vadd.f32 %v1267, %v1230
    %v1269 = vrot.slane %v1268, 4
    %v1270 = vadd.f32 %v1268, %v1269
    %v1271 = vrot.slane %v1270, 2
    %v1272 = vadd.f32 %v1270, %v1271
    %v1273 = vrot.slane %v1272, 1
    %v1274 = vadd.f32 %v1272, %v1273
    %v1275 = vadd.f32 %v1198, %v1202
    %v1276 = vadd.f32 %v1275, %v1208
    %v1277 = vadd.f32 %v1276, %v1212
    %v1278 = vadd.f32 %v1277, %v1218
    %v1279 = vadd.f32 %v1278, %v1222
    %v1280 = vadd.f32 %v1279, %v1228
    %v1281 = vadd.f32 %v1280, %v1232
    %v1282 = vrot.slane %v1281, 4
    %v1283 = vadd.f32 %v1281, %v1282
    %v1284 = vrot.slane %v1283, 2
    %v1285 = vadd.f32 %v1283, %v1284
    %v1286 = vrot.slane %v1285, 1
    %v1287 = vadd.f32 %v1285, %v1286
    %v1288 = vmul.f32 %v1248, 0.015625
    %v1289 = vmul.f32 %v1261, 0.015625
    %v1290 = vmul.f32 %v1274, 0.015625
    %v1291 = vmul.f32 %v1287, 0.015625
    %v1292 = vmul.f32 %v1123, %v1123
    %v1293 = vmul.f32 %v1125, %v1125
    %v1294 = vmul.f32 %v1196, %v1196
    %v1295 = vmul.f32 %v1198, %v1198
    %v1296 = vmul.f32 %v1127, %v1127
    %v1297 = vmul.f32 %v1129, %v1129
    %v1298 = vmul.f32 %v1200, %v1200
    %v1299 = vmul.f32 %v1202, %v1202
    %v1300 = vmul.f32 %v1133, %v1133
    %v1301 = vmul.f32 %v1135, %v1135
    %v1302 = vmul.f32 %v1206, %v1206
    %v1303 = vmul.f32 %v1208, %v1208
    %v1304 = vmul.f32 %v1137, %v1137
    %v1305 = vmul.f32 %v1139, %v1139
    %v1306 = vmul.f32 %v1210, %v1210
    %v1307 = vmul.f32 %v1212, %v1212
    %v1308 = vmul.f32 %v1143, %v1143
    %v1309 = vmul.f32 %v1145, %v1145
    %v1310 = vmul.f32 %v1216, %v1216
    %v1311 = vmul.f32 %v1218, %v1218
    %v1312 = vmul.f32 %v1147, %v1147
    %v1313 = vmul.f32 %v1149, %v1149
    %v1314 = vmul.f32 %v1220, %v1220
    %v1315 = vmul.f32 %v1222, %v1222
    %v1316 = vmul.f32 %v1153, %v1153
    %v1317 = vmul.f32 %v1155, %v1155
    %v1318 = vmul.f32 %v1226, %v1226
    %v1319 = vmul.f32 %v1228, %v1228
    %v1320 = vmul.f32 %v1157, %v1157
    %v1321 = vmul.f32 %v1159, %v1159
    %v1322 = vmul.f32 %v1230, %v1230
    %v1323 = vmul.f32 %v1232, %v1232
    %v1324 = vadd.f32 %v1292, %v1296
    %v1325 = vadd.f32 %v1324, %v1300
    %v1326 = vadd.f32 %v1325, %v1304
    %v1327 = vadd.f32 %v1326, %v1308
    %v1328 = vadd.f32 %v1327, %v1312
    %v1329 = vadd.f32 %v1328, %v1316
    %v1330 = vadd.f32 %v1329, %v1320
    %v1331 = vrot.slane %v1330, 4
    %v1332 = vadd.f32 %v1330, %v1331
    %v1333 = vrot.slane %v1332, 2
    %v1334 = vadd.f32 %v1332, %v1333
    %v1335 = vrot.slane %v1334, 1
    %v1336 = vadd.f32 %v1334, %v1335
    %v1337 = vadd.f32 %v1293, %v1297
    %v1338 = vadd.f32 %v1337, %v1301
    %v1339 = vadd.f32 %v1338, %v1305
    %v1340 = vadd.f32 %v1339, %v1309
    %v1341 = vadd.f32 %v1340, %v1313
    %v1342 = vadd.f32 %v1341, %v1317
    %v1343 = vadd.f32 %v1342, %v1321
    %v1344 = vrot.slane %v1343, 4
    %v1345 = vadd.f32 %v1343, %v1344
    %v1346 = vrot.slane %v1345, 2
    %v1347 = vadd.f32 %v1345, %v1346
    %v1348 = vrot.slane %v1347, 1
    %v1349 = vadd.f32 %v1347, %v1348
    %v1350 = vadd.f32 %v1294, %v1298
    %v1351 = vadd.f32 %v1350, %v1302
    %v1352 = vadd.f32 %v1351, %v1306
    %v1353 = vadd.f32 %v1352, %v1310
    %v1354 = vadd.f32 %v1353, %v1314
    %v1355 = vadd.f32 %v1354, %v1318
    %v1356 = vadd.f32 %v1355, %v1322
    %v1357 = vrot.slane %v1356, 4
    %v1358 = vadd.f32 %v1356, %v1357
    %v1359 = vrot.slane %v1358, 2
    %v1360 = vadd.f32 %v1358, %v1359
    %v1361 = vrot.slane %v1360, 1
    %v1362 = vadd.f32 %v1360, %v1361
    %v1363 = vadd.f32 %v1295, %v1299
    %v1364 = vadd.f32 %v1363, %v1303
    %v1365 = vadd.f32 %v1364, %v1307
    %v1366 = vadd.f32 %v1365, %v1311
    %v1367 = vadd.f32 %v1366, %v1315
    %v1368 = vadd.f32 %v1367, %v1319
    %v1369 = vadd.f32 %v1368, %v1323
    %v1370 = vrot.slane %v1369, 4
    %v1371 = vadd.f32 %v1369, %v1370
    %v1372 = vrot.slane %v1371, 2
    %v1373 = vadd.f32 %v1371, %v1372
    %v1374 = vrot.slane %v1373, 1
    %v1375 = vadd.f32 %v1373, %v1374
    %v1376 = vmul.f32 %v1336, 0.015625
    %v1377 = vmul.f32 %v1349, 0.015625
    %v1378 = vmul.f32 %v1362, 0.015625
    %v1379 = vmul.f32 %v1375, 0.015625
    %v1380 = vmul.f32 %v1288, %v1288
    %v1381 = vmul.f32 %v1289, %v1289
    %v1382 = vmul.f32 %v1290, %v1290
    %v1383 = vmul.f32 %v1291, %v1291
    %v1384 = vsub.f32 %v1376, %v1380
    %v1385 = vsub.f32 %v1377, %v1381
    %v1386 = vsub.f32 %v1378, %v1382
    %v1387 = vsub.f32 %v1379, %v1383
    %v1388 = vadd.f32 %v1384, 0.8
    %v1389 = vadd.f32 %v1385, 0.8
    %v1390 = vadd.f32 %v1386, 0.8
    %v1391 = vadd.f32 %v1387, 0.8
    %v1392 = vrsqrt.pop %v1388
    %v1393 = vrsqrt.pop %v1389
    %v1394 = vrsqrt.pop %v1390
    %v1395 = vrsqrt.pop %v1391
    %v1400 = vcombine.low %v1392, %v1393
    %v1401 = vcombine.low %v1394, %v1395
    %v1403 = vunpack.c.l.s4 1966171168
    %v1404 = vunpack.c.0.s8 %v1403
    %v1405 = vlaneseq
    %v1406 = vshrl.u32 %v1405, 7
    %v1407 = vsub.s32 %v1404, %v1406
    %v1408 = vrot.slane %v1400, %v1407
    %v1410 = vunpack.c.l.s4 1966171168
    %v1411 = vunpack.c.0.s8 %v1410
    %v1412 = vlaneseq
    %v1413 = vshrl.u32 %v1412, 7
    %v1414 = vsub.s32 %v1411, %v1413
    %v1415 = vrot.slane %v1401, %v1414
    %v1416 = vcombine.low %v1408, %v1415
    %v1418 = vunpack.c.l.s4 1966171168
    %v1419 = vunpack.c.0.s8 %v1418
    %v1420 = vlaneseq
    %v1421 = vshrl.u32 %v1420, 7
    %v1422 = vsub.s32 %v1419, %v1421
    %v1423 = vrot.slane %v1416, %v1422
    %v1425 = vmul.f32 %v1234, %v1423
    %v1426 = vsub.f32 %v1123, %v1288
    %v1427 = vsub.f32 %v1125, %v1289
    %v1428 = vsub.f32 %v1196, %v1290
    %v1429 = vsub.f32 %v1198, %v1291
    %v1430 = vsub.f32 %v1127, %v1288
    %v1431 = vsub.f32 %v1129, %v1289
    %v1432 = vsub.f32 %v1200, %v1290
    %v1433 = vsub.f32 %v1202, %v1291
    %v1434 = vsub.f32 %v1133, %v1288
    %v1435 = vsub.f32 %v1135, %v1289
    %v1436 = vsub.f32 %v1206, %v1290
    %v1437 = vsub.f32 %v1208, %v1291
    %v1438 = vsub.f32 %v1137, %v1288
    %v1439 = vsub.f32 %v1139, %v1289
    %v1440 = vsub.f32 %v1210, %v1290
    %v1441 = vsub.f32 %v1212, %v1291
    %v1442 = vsub.f32 %v1143, %v1288
    %v1443 = vsub.f32 %v1145, %v1289
    %v1444 = vsub.f32 %v1216, %v1290
    %v1445 = vsub.f32 %v1218, %v1291
    %v1446 = vsub.f32 %v1147, %v1288
    %v1447 = vsub.f32 %v1149, %v1289
    %v1448 = vsub.f32 %v1220, %v1290
    %v1449 = vsub.f32 %v1222, %v1291
    %v1450 = vsub.f32 %v1153, %v1288
    %v1451 = vsub.f32 %v1155, %v1289
    %v1452 = vsub.f32 %v1226, %v1290
    %v1453 = vsub.f32 %v1228, %v1291
    %v1454 = vsub.f32 %v1157, %v1288
    %v1455 = vsub.f32 %v1159, %v1289
    %v1456 = vsub.f32 %v1230, %v1290
    %v1457 = vsub.f32 %v1232, %v1291
    %v1459 = vlaneseq
    %v1460 = vshrl.u32 %v1459, 7
    %v1461 = vsub.s32 0, %v1460
    %v1462 = vrot.slane %v1425, %v1461
    %v1463 = vlaneseq
    %v1464 = vshrl.u32 %v1463, 7
    %v1465 = vsub.s32 1, %v1464
    %v1466 = vrot.slane %v1425, %v1465
    %v1467 = vlaneseq
    %v1468 = vshrl.u32 %v1467, 7
    %v1469 = vsub.s32 2, %v1468
    %v1470 = vrot.slane %v1425, %v1469
    %v1471 = vlaneseq
    %v1472 = vshrl.u32 %v1471, 7
    %v1473 = vsub.s32 3, %v1472
    %v1474 = vrot.slane %v1425, %v1473
    %v1479 = vmul.f32 %v1426, %v1462
    %v1480 = vmul.f32 %v1427, %v1466
    %v1481 = vmul.f32 %v1428, %v1470
    %v1482 = vmul.f32 %v1429, %v1474
    %v1483 = vmul.f32 %v1430, %v1462
    %v1484 = vmul.f32 %v1431, %v1466
    %v1485 = vmul.f32 %v1432, %v1470
    %v1486 = vmul.f32 %v1433, %v1474
    %v1487 = vmul.f32 %v1434, %v1462
    %v1488 = vmul.f32 %v1435, %v1466
    %v1489 = vmul.f32 %v1436, %v1470
    %v1490 = vmul.f32 %v1437, %v1474
    %v1491 = vmul.f32 %v1438, %v1462
    %v1492 = vmul.f32 %v1439, %v1466
    %v1493 = vmul.f32 %v1440, %v1470
    %v1494 = vmul.f32 %v1441, %v1474
    %v1495 = vmul.f32 %v1442, %v1462
    %v1496 = vmul.f32 %v1443, %v1466
    %v1497 = vmul.f32 %v1444, %v1470
    %v1498 = vmul.f32 %v1445, %v1474
    %v1499 = vmul.f32 %v1446, %v1462
    %v1500 = vmul.f32 %v1447, %v1466
    %v1501 = vmul.f32 %v1448, %v1470
    %v1502 = vmul.f32 %v1449, %v1474
    %v1503 = vmul.f32 %v1450, %v1462
    %v1504 = vmul.f32 %v1451, %v1466
    %v1505 = vmul.f32 %v1452, %v1470
    %v1506 = vmul.f32 %v1453, %v1474
    %v1507 = vmul.f32 %v1454, %v1462
    %v1508 = vmul.f32 %v1455, %v1466
    %v1509 = vmul.f32 %v1456, %v1470
    %v1510 = vmul.f32 %v1457, %v1474
    %v1512 = vlaneseq
    %v1513 = vshrl.u32 %v1512, 7
    %v1514 = vsub.s32 0, %v1513
    %v1515 = vrot.slane %v1235, %v1514
    %v1516 = vlaneseq
    %v1517 = vshrl.u32 %v1516, 7
    %v1518 = vsub.s32 1, %v1517
    %v1519 = vrot.slane %v1235, %v1518
    %v1520 = vlaneseq
    %v1521 = vshrl.u32 %v1520, 7
    %v1522 = vsub.s32 2, %v1521
    %v1523 = vrot.slane %v1235, %v1522
    %v1524 = vlaneseq
    %v1525 = vshrl.u32 %v1524, 7
    %v1526 = vsub.s32 3, %v1525
    %v1527 = vrot.slane %v1235, %v1526
    %v1532 = vadd.f32 %v1479, %v1515
    %v1533 = vadd.f32 %v1480, %v1519
    %v1534 = vadd.f32 %v1481, %v1523
    %v1535 = vadd.f32 %v1482, %v1527
    %v1536 = vadd.f32 %v1483, %v1515
    %v1537 = vadd.f32 %v1484, %v1519
    %v1538 = vadd.f32 %v1485, %v1523
    %v1539 = vadd.f32 %v1486, %v1527
    %v1540 = vadd.f32 %v1487, %v1515
    %v1541 = vadd.f32 %v1488, %v1519
    %v1542 = vadd.f32 %v1489, %v1523
    %v1543 = vadd.f32 %v1490, %v1527
    %v1544 = vadd.f32 %v1491, %v1515
    %v1545 = vadd.f32 %v1492, %v1519
    %v1546 = vadd.f32 %v1493, %v1523
    %v1547 = vadd.f32 %v1494, %v1527
    %v1548 = vadd.f32 %v1495, %v1515
    %v1549 = vadd.f32 %v1496, %v1519
    %v1550 = vadd.f32 %v1497, %v1523
    %v1551 = vadd.f32 %v1498, %v1527
    %v1552 = vadd.f32 %v1499, %v1515
    %v1553 = vadd.f32 %v1500, %v1519
    %v1554 = vadd.f32 %v1501, %v1523
    %v1555 = vadd.f32 %v1502, %v1527
    %v1556 = vadd.f32 %v1503, %v1515
    %v1557 = vadd.f32 %v1504, %v1519
    %v1558 = vadd.f32 %v1505, %v1523
    %v1559 = vadd.f32 %v1506, %v1527
    %v1560 = vadd.f32 %v1507, %v1515
    %v1561 = vadd.f32 %v1508, %v1519
    %v1562 = vadd.f32 %v1509, %v1523
    %v1563 = vadd.f32 %v1510, %v1527
    %v1564 = vmul.f32 %v1532, 0.2
    %v1565 = vmul.f32 %v1533, 0.2
    %v1566 = vmul.f32 %v1534, 0.2
    %v1567 = vmul.f32 %v1535, 0.2
    %v1568 = vmul.f32 %v1536, 0.2
    %v1569 = vmul.f32 %v1537, 0.2
    %v1570 = vmul.f32 %v1538, 0.2
    %v1571 = vmul.f32 %v1539, 0.2
    %v1572 = vmul.f32 %v1540, 0.2
    %v1573 = vmul.f32 %v1541, 0.2
    %v1574 = vmul.f32 %v1542, 0.2
    %v1575 = vmul.f32 %v1543, 0.2
    %v1576 = vmul.f32 %v1544, 0.2
    %v1577 = vmul.f32 %v1545, 0.2
    %v1578 = vmul.f32 %v1546, 0.2
    %v1579 = vmul.f32 %v1547, 0.2
    %v1580 = vmul.f32 %v1548, 0.2
    %v1581 = vmul.f32 %v1549, 0.2
    %v1582 = vmul.f32 %v1550, 0.2
    %v1583 = vmul.f32 %v1551, 0.2
    %v1584 = vmul.f32 %v1552, 0.2
    %v1585 = vmul.f32 %v1553, 0.2
    %v1586 = vmul.f32 %v1554, 0.2
    %v1587 = vmul.f32 %v1555, 0.2
    %v1588 = vmul.f32 %v1556, 0.2
    %v1589 = vmul.f32 %v1557, 0.2
    %v1590 = vmul.f32 %v1558, 0.2
    %v1591 = vmul.f32 %v1559, 0.2
    %v1592 = vmul.f32 %v1560, 0.2
    %v1593 = vmul.f32 %v1561, 0.2
    %v1594 = vmul.f32 %v1562, 0.2
    %v1595 = vmul.f32 %v1563, 0.2
    %v1596 = vmax.f32 %v1532, %v1564
    %v1597 = vmax.f32 %v1533, %v1565
    %v1598 = vmax.f32 %v1534, %v1566
    %v1599 = vmax.f32 %v1535, %v1567
    %v1600 = vmax.f32 %v1536, %v1568
    %v1601 = vmax.f32 %v1537, %v1569
    %v1602 = vmax.f32 %v1538, %v1570
    %v1603 = vmax.f32 %v1539, %v1571
    %v1604 = vmax.f32 %v1540, %v1572
    %v1605 = vmax.f32 %v1541, %v1573
    %v1606 = vmax.f32 %v1542, %v1574
    %v1607 = vmax.f32 %v1543, %v1575
    %v1608 = vmax.f32 %v1544, %v1576
    %v1609 = vmax.f32 %v1545, %v1577
    %v1610 = vmax.f32 %v1546, %v1578
    %v1611 = vmax.f32 %v1547, %v1579
    %v1612 = vmax.f32 %v1548, %v1580
    %v1613 = vmax.f32 %v1549, %v1581
    %v1614 = vmax.f32 %v1550, %v1582
    %v1615 = vmax.f32 %v1551, %v1583
    %v1616 = vmax.f32 %v1552, %v1584
    %v1617 = vmax.f32 %v1553, %v1585
    %v1618 = vmax.f32 %v1554, %v1586
    %v1619 = vmax.f32 %v1555, %v1587
    %v1620 = vmax.f32 %v1556, %v1588
    %v1621 = vmax.f32 %v1557, %v1589
    %v1622 = vmax.f32 %v1558, %v1590
    %v1623 = vmax.f32 %v1559, %v1591
    %v1624 = vmax.f32 %v1560, %v1592
    %v1625 = vmax.f32 %v1561, %v1593
    %v1626 = vmax.f32 %v1562, %v1594
    %v1627 = vmax.f32 %v1563, %v1595
    %v1628 = vpack.c.bf16 %v1600, %v1596
    %v1629 = vpack.c.bf16 %v1601, %v1597
    %v1630 = vpack.c.bf16 %v1602, %v1598
    %v1631 = vpack.c.bf16 %v1603, %v1599
    %v1632 = vpack.c.bf16 %v1608, %v1604
    %v1633 = vpack.c.bf16 %v1609, %v1605
    %v1634 = vpack.c.bf16 %v1610, %v1606
    %v1635 = vpack.c.bf16 %v1611, %v1607
    %v1636 = vpack.c.bf16 %v1616, %v1612
    %v1637 = vpack.c.bf16 %v1617, %v1613
    %v1638 = vpack.c.bf16 %v1618, %v1614
    %v1639 = vpack.c.bf16 %v1619, %v1615
    %v1640 = vpack.c.bf16 %v1624, %v1620
    %v1641 = vpack.c.bf16 %v1625, %v1621
    %v1642 = vpack.c.bf16 %v1626, %v1622
    %v1643 = vpack.c.bf16 %v1627, %v1623
    %v1660 = vunpack.c.l.b16 %v1628
    %v1661 = vunpack.c.l.b16 %v1629
    %v1662 = vunpack.c.l.b16 %v1630
    %v1663 = vunpack.c.l.b16 %v1631
    %v1664 = vunpack.c.h.b16 %v1628
    %v1665 = vunpack.c.h.b16 %v1629
    %v1666 = vunpack.c.h.b16 %v1630
    %v1667 = vunpack.c.h.b16 %v1631
    %v1668 = vunpack.c.l.b16 %v1632
    %v1669 = vunpack.c.l.b16 %v1633
    %v1670 = vunpack.c.l.b16 %v1634
    %v1671 = vunpack.c.l.b16 %v1635
    %v1672 = vunpack.c.h.b16 %v1632
    %v1673 = vunpack.c.h.b16 %v1633
    %v1674 = vunpack.c.h.b16 %v1634
    %v1675 = vunpack.c.h.b16 %v1635
    %v1676 = vunpack.c.l.b16 %v1636
    %v1677 = vunpack.c.l.b16 %v1637
    %v1678 = vunpack.c.l.b16 %v1638
    %v1679 = vunpack.c.l.b16 %v1639
    %v1680 = vunpack.c.h.b16 %v1636
    %v1681 = vunpack.c.h.b16 %v1637
    %v1682 = vunpack.c.h.b16 %v1638
    %v1683 = vunpack.c.h.b16 %v1639
    %v1684 = vunpack.c.l.b16 %v1640
    %v1685 = vunpack.c.l.b16 %v1641
    %v1686 = vunpack.c.l.b16 %v1642
    %v1687 = vunpack.c.l.b16 %v1643
    %v1688 = vunpack.c.h.b16 %v1640
    %v1689 = vunpack.c.h.b16 %v1641
    %v1690 = vunpack.c.h.b16 %v1642
    %v1691 = vunpack.c.h.b16 %v1643
    %v1692 = vpack.c.b16 %v1661, %v1660
    %v1693 = vpack.c.b16 %v1663, %v1662
    %v1694 = vpack.c.b16 %v1665, %v1664
    %v1695 = vpack.c.b16 %v1667, %v1666
    %v1696 = vpack.c.b16 %v1669, %v1668
    %v1697 = vpack.c.b16 %v1671, %v1670
    %v1698 = vpack.c.b16 %v1673, %v1672
    %v1699 = vpack.c.b16 %v1675, %v1674
    %v1700 = vpack.c.b16 %v1677, %v1676
    %v1701 = vpack.c.b16 %v1679, %v1678
    %v1702 = vpack.c.b16 %v1681, %v1680
    %v1703 = vpack.c.b16 %v1683, %v1682
    %v1704 = vpack.c.b16 %v1685, %v1684
    %v1705 = vpack.c.b16 %v1687, %v1686
    %v1706 = vpack.c.b16 %v1689, %v1688
    %v1707 = vpack.c.b16 %v1691, %v1690
    %1724 = vst [vmem:[%s10] sm:$0xff] %v1692
    %1725 = vst [vmem:[%s10 + $0x8] sm:$0xff] %v1693
    %1726 = vst [vmem:[%s10 + $0x10] sm:$0xff] %v1694
    %1727 = vst [vmem:[%s10 + $0x18] sm:$0xff] %v1695
    %1728 = vst [vmem:[%s10 + $0x20] sm:$0xff] %v1696
    %1729 = vst [vmem:[%s10 + $0x28] sm:$0xff] %v1697
    %1730 = vst [vmem:[%s10 + $0x30] sm:$0xff] %v1698
    %1731 = vst [vmem:[%s10 + $0x38] sm:$0xff] %v1699
    %1732 = vst [vmem:[%s10 + $0x40] sm:$0xff] %v1700
    %1733 = vst [vmem:[%s10 + $0x48] sm:$0xff] %v1701
    %1734 = vst [vmem:[%s10 + $0x50] sm:$0xff] %v1702
    %1735 = vst [vmem:[%s10 + $0x58] sm:$0xff] %v1703
    %1736 = vst [vmem:[%s10 + $0x60] sm:$0xff] %v1704
    %1737 = vst [vmem:[%s10 + $0x68] sm:$0xff] %v1705
    %1738 = vst [vmem:[%s10 + $0x70] sm:$0xff] %v1706
    %1739 = vst [vmem:[%s10 + $0x78] sm:$0xff] %v1707
    // Predicated region
    $region50: #{generator_forward.2} parent=1 // pred_check
      _
    $region51: #{generator_forward.2} parent=1 // pred_check_branch
      %1741 = sbr.rel (0) target = $region53
    $region52: #{generator_forward.2} parent=1 // pred_region
      _
    $region53: #{generator_forward.2} parent=1 // pred_fallthru
      _
    // Predicated region
    $region54: #{generator_forward.2} parent=1 // pred_check
      _
    $region55: #{generator_forward.2} parent=1 // pred_check_branch
      %1743 = sbr.rel (0) target = $region57
    $region56: #{generator_forward.2} parent=1 // pred_region
      _
    $region57: #{generator_forward.2} parent=1 // pred_fallthru
      _
    %1744 = vsyncpa [#allocation3], 1
    %1745 = vsyncpa [#allocation5], 1

// kernel: generator_forward.3
$region0: #{generator_forward.3}
  #allocation0 [shape = 'u32[]', space=smem, size = 0x4, offset = 0x4, fixed_abs, tag = 'smem constant byte address 0x4 - core index']
  #allocation1 [shape = 'u32[144,128]{1,0:T(1,128)}', space=vmem, size = 0x12000, scoped, tag = 'internal scratch']
  %s0 = inlined_call_operand.vmem [shape: bf16[64,512], index: 0, kind: input, shape index: {}]
  %s1 = inlined_call_operand.hbm [shape: bf16[512,896], index: 1, kind: input, shape index: {}]
  %s2 = inlined_call_operand.vmem [shape: f32[1,896], index: 2, kind: input, shape index: {}]
  %s3 = inlined_call_operand.vmem [shape: bf16[64,896], index: 3, kind: output, shape index: {}]
  %s4 = sld [smem:[#allocation0]]
  $region49: #{generator_forward.3} parent=0
    _
  %s6 = ssub.s32 1, %s4
  %s7 = scalar_select 0, %s6, %s4
  $region1: #{generator_forward.3} parent=0
    #allocation2 [shape = 'u8[917504]{0}', space=vmem, size = 0xe0000, scoped, tag = 'input window, operand 1, single buffered']
    #allocation3 [shape = 's32[2]{0}', space=sflag, size = 0x8, scoped, tag = 'scoped memory for generator_forward.3']
    %8 = vsyncpa [#allocation3], 0
    loop: start=0, step=1, limit=4
    $region2: #{generator_forward.3} parent=1 // loop_pre_header
      _
    $region3: #{generator_forward.3} parent=1 // loop_header
      %s10 = sphi 0, %s14
      %p11 = scmp.ge.s32.totalorder %s10, 4
      %s20 = sphi 0, %s22
      %s23 = sphi 0, %s20
      %s24 = sphi 0, %s23
      %s40 = sphi 0, %s24
      %s44 = sphi 0, %s44
      %s46 = sphi 0, %s44
      %s47 = sphi 0, %s46
      %s61 = sphi 0, %s47
      %s65 = sphi 0, %s65
      %s67 = sphi 0, %s65
      %s68 = sphi 0, %s67
      %s82 = sphi 0, %s68
      %s88 = sphi 0, %s90
      %s91 = sphi 0, %s88
      %s92 = sphi 0, %s91
      %s108 = sphi 0, %s92
    $region4: #{generator_forward.3} parent=1 // loop_header_branch
      %13 = sbr.rel (%p11) target = $region8
    $region5: #{generator_forward.3} parent=1 // loop_body
      %s15 = ssub.s32 %s10, 1
      %s16 = ssub.s32 %s10, 2
      %s17 = sadd.s32 %s10, 1
      %s18 = ssub.s32 %s10, %s17
      %p19 = scmp.eq.s32.totalorder %s18, 0
      %s21 = sadd.s32 %s20, 1
      %s22 = scalar_select %p19, %s20, %s21
      %p25 = pneg %p19
      %p26 = scmp.eq.s32.totalorder %s10, 1
      %p27 = por %p25, %p26
      %p28 = scmp.ne.s32.totalorder %s20, %s23
      %p29 = scmp.eq.s32.totalorder %s10, 0
      %p30 = por %p28, %p29
      %p31 = scmp.ne.s32.totalorder %s20, %s23
      %p32 = scmp.eq.s32.totalorder %s15, 1
      %p33 = por %p31, %p32
      %p34 = scmp.ne.s32.totalorder %s23, %s24
      %p35 = scmp.eq.s32.totalorder %s15, 0
      %p36 = por %p34, %p35
      %p37 = scmp.ne.s32.totalorder %s23, %s24
      %p38 = scmp.eq.s32.totalorder %s16, 1
      %p39 = por %p37, %p38
      %p41 = scmp.ne.s32.totalorder %s24, %s40
      %p42 = scmp.eq.s32.totalorder %s16, 0
      %p43 = por %p41, %p42
      %s45 = sadd.s32 %s44, 1
      %p48 = scmp.eq.s32.totalorder %s10, 1
      %p49 = scmp.ne.s32.totalorder %s44, %s46
      %p50 = scmp.eq.s32.totalorder %s10, 0
      %p51 = por %p49, %p50
      %p52 = scmp.ne.s32.totalorder %s44, %s46
      %p53 = scmp.eq.s32.totalorder %s15, 1
      %p54 = por %p52, %p53
      %p55 = scmp.ne.s32.totalorder %s46, %s47
      %p56 = scmp.eq.s32.totalorder %s15, 0
      %p57 = por %p55, %p56
      %p58 = scmp.ne.s32.totalorder %s46, %s47
      %p59 = scmp.eq.s32.totalorder %s16, 1
      %p60 = por %p58, %p59
      %p62 = scmp.ne.s32.totalorder %s47, %s61
      %p63 = scmp.eq.s32.totalorder %s16, 0
      %p64 = por %p62, %p63
      %s66 = sadd.s32 %s65, 1
      %p69 = scmp.eq.s32.totalorder %s10, 1
      %p70 = scmp.ne.s32.totalorder %s65, %s67
      %p71 = scmp.eq.s32.totalorder %s10, 0
      %p72 = por %p70, %p71
      %p73 = scmp.ne.s32.totalorder %s65, %s67
      %p74 = scmp.eq.s32.totalorder %s15, 1
      %p75 = por %p73, %p74
      %p76 = scmp.ne.s32.totalorder %s67, %s68
      %p77 = scmp.eq.s32.totalorder %s15, 0
      %p78 = por %p76, %p77
      %p79 = scmp.ne.s32.totalorder %s67, %s68
      %p80 = scmp.eq.s32.totalorder %s16, 1
      %p81 = por %p79, %p80
      %p83 = scmp.ne.s32.totalorder %s68, %s82
      %p84 = scmp.eq.s32.totalorder %s16, 0
      %p85 = por %p83, %p84
      %s86 = ssub.s32 %s10, %s17
      %p87 = scmp.eq.s32.totalorder %s86, 0
      %s89 = sadd.s32 %s88, 1
      %s90 = scalar_select %p87, %s88, %s89
      %p93 = pneg %p87
      %p94 = scmp.eq.s32.totalorder %s10, 1
      %p95 = por %p93, %p94
      %p96 = scmp.ne.s32.totalorder %s88, %s91
      %p97 = scmp.eq.s32.totalorder %s10, 0
      %p98 = por %p96, %p97
      %p99 = scmp.ne.s32.totalorder %s88, %s91
      %p100 = scmp.eq.s32.totalorder %s15, 1
      %p101 = por %p99, %p100
      %p102 = scmp.ne.s32.totalorder %s91, %s92
      %p103 = scmp.eq.s32.totalorder %s15, 0
      %p104 = por %p102, %p103
      %p105 = scmp.ne.s32.totalorder %s91, %s92
      %p106 = scmp.eq.s32.totalorder %s16, 1
      %p107 = por %p105, %p106
      %p109 = scmp.ne.s32.totalorder %s92, %s108
      %p110 = scmp.eq.s32.totalorder %s16, 0
      %p111 = por %p109, %p110
      %p112 = scmp.le.s32.totalorder 1, %s10
      %p113 = scmp.lt.s32.totalorder %s10, 3
      %p114 = pnand %p112, %p113
      %p115 = pneg %p114
      // Predicated region
      $region9: #{generator_forward.3} parent=5 // pred_check
        _
      $region10: #{generator_forward.3} parent=5 // pred_check_branch
        %117 = sbr.rel (%p114) target = $region12
      $region11: #{generator_forward.3} parent=5 // pred_region
        %s118 = ssub.s32 %s10, 1
        // Predicated region
        $region13: #{generator_forward.3} parent=11 // pred_check
          %p119 = pneg %p57
        $region14: #{generator_forward.3} parent=11 // pred_check_branch
          %121 = sbr.rel (%p119) target = $region16
        $region15: #{generator_forward.3} parent=11 // pred_region
          %s123 = ssub.s32 28672, 28672
          %124 = vsyncadd [#allocation3], %s123
          %s125 = sshll.u32 [#allocation2], 4
          %s126 = int_to_ptr.vmem [resolvable:$true] %s125
          %131 = dma.hbm_to_vmem [thread:$0]  %s1, 28672, %s126, [#allocation3], 448, 448, 28
        $region16: #{generator_forward.3} parent=11 // pred_fallthru
          _
        // Predicated region
        $region17: #{generator_forward.3} parent=11 // pred_check
          %p132 = pneg %p78
        $region18: #{generator_forward.3} parent=11 // pred_check_branch
          %134 = sbr.rel (%p132) target = $region20
        $region19: #{generator_forward.3} parent=11 // pred_region
          _
        $region20: #{generator_forward.3} parent=11 // pred_fallthru
          _
      $region12: #{generator_forward.3} parent=5 // pred_fallthru
        _
      %p135 = scmp.lt.s32.totalorder %s10, 2
      // Predicated region
      $region21: #{generator_forward.3} parent=5 // pred_check
        %p136 = pneg %p135
      $region22: #{generator_forward.3} parent=5 // pred_check_branch
        %138 = sbr.rel (%p136) target = $region24
      $region23: #{generator_forward.3} parent=5 // pred_region
        // Predicated region
        $region25: #{generator_forward.3} parent=23 // pred_check
          %p139 = pneg %p30
        $region26: #{generator_forward.3} parent=23 // pred_check_branch
          %141 = sbr.rel (%p139) target = $region28
        $region27: #{generator_forward.3} parent=23 // pred_region
          %s142 = smul.u32 4, %s10
          %p143 = scmp.lt.s32.totalorder %s142, 7
          %s144 = scalar_select %p143, %s142, 7
          %s145 = smul.addr %s144, 4
          %s146 = smul.addr %s145, 4
          %s147 = scalar_lea.vmem %s0, %s146
          %s148 = smul.u32 4, %s10
        $region28: #{generator_forward.3} parent=23 // pred_fallthru
          _
      $region24: #{generator_forward.3} parent=5 // pred_fallthru
        _
      %p149 = scmp.le.s32.totalorder 1, %s10
      %p150 = scmp.lt.s32.totalorder %s10, 3
      %p151 = pnand %p149, %p150
      %p152 = pneg %p151
      // Predicated region
      $region29: #{generator_forward.3} parent=5 // pred_check
        _
      $region30: #{generator_forward.3} parent=5 // pred_check_branch
        %154 = sbr.rel (%p151) target = $region32
      $region31: #{generator_forward.3} parent=5 // pred_region
        %s155 = ssub.s32 %s10, 1
        // Predicated region
        $region33: #{generator_forward.3} parent=31 // pred_check
          %p156 = pneg %p57
        $region34: #{generator_forward.3} parent=31 // pred_check_branch
          %158 = sbr.rel (%p156) target = $region36
        $region35: #{generator_forward.3} parent=31 // pred_region
          %159 = dma.done [#allocation3], 28672
        $region36: #{generator_forward.3} parent=31 // pred_fallthru
          _
        %s160 = smul.u32 4, %s15
        %p161 = scmp.lt.s32.totalorder %s160, 7
        %s162 = scalar_select %p161, %s160, 7
        %s163 = smul.addr %s162, 4
        %s164 = smul.addr %s163, 4
        %s165 = scalar_lea.vmem %s0, %s164
        %p166 = pneg %p36
        %p167 = pneg %p33
        %p168 = pneg %p57
        %p169 = pneg %p54
        %p170 = pneg %p78
        %p171 = pneg %p75
        %p172 = pneg %p104
        %p173 = pneg %p101
        %s174 = smul.u32 4, %s15
        %p175 = scmp.lt.s32.totalorder %s174, 7
        %s176 = scalar_select %p175, %s174, 7
        %s177 = smul.addr %s176, 7
        %s178 = smul.addr %s177, 4
        %s179 = scalar_lea.vmem %s3, %s178
        %s180 = smul.u32 4, %s15
        %p181 = scmp.lt.s32.totalorder %s180, 7
        %s182 = scalar_select %p181, %s180, 7
        %s183 = smul.addr %s182, 4
        %s184 = smul.addr %s183, 4
        %s185 = scalar_lea.vmem %s0, %s184
        %s186 = smul.u32 4, %s15
        %s187 = smul.u32 4, %s15
        %p188 = scmp.lt.s32.totalorder %s187, 7
        %s189 = scalar_select %p188, %s187, 7
        %s190 = smul.addr %s189, 7
        %s191 = smul.addr %s190, 4
        %s192 = scalar_lea.vmem %s3, %s191
        %s193 = smul.u32 4, %s15
        %v195 = vld [vmem:[%s185] sm:$0xff]
        %v196 = vld [vmem:[%s185 + $0x8] sm:$0xff]
        %v197 = vld [vmem:[%s185 + $0x10] sm:$0xff]
        %v198 = vld [vmem:[%s185 + $0x18] sm:$0xff]
        %v199 = vld [vmem:[%s185 + $0x20] sm:$0xff]
        %v200 = vld [vmem:[%s185 + $0x28] sm:$0xff]
        %v201 = vld [vmem:[%s185 + $0x30] sm:$0xff]
        %v202 = vld [vmem:[%s185 + $0x38] sm:$0xff]
        %v203 = vld [vmem:[#allocation2] sm:$0xff]
        %v204 = vld [vmem:[#allocation2 + $0x8] sm:$0xff]
        %v205 = vld [vmem:[#allocation2 + $0x10] sm:$0xff]
        %v206 = vld [vmem:[#allocation2 + $0x18] sm:$0xf]
        %v207 = vld [vmem:[#allocation2 + $0x1c] sm:$0xff]
        %v208 = vld [vmem:[#allocation2 + $0x24] sm:$0xff]
        %v209 = vld [vmem:[#allocation2 + $0x2c] sm:$0xff]
        %v210 = vld [vmem:[#allocation2 + $0x34] sm:$0xf]
        %v211 = vld [vmem:[#allocation2 + $0x38] sm:$0xff]
        %v212 = vld [vmem:[#allocation2 + $0x40] sm:$0xff]
        %v213 = vld [vmem:[#allocation2 + $0x48] sm:$0xff]
        %v214 = vld [vmem:[#allocation2 + $0x50] sm:$0xf]
        %v215 = vld [vmem:[#allocation2 + $0x54] sm:$0xff]
        %v216 = vld [vmem:[#allocation2 + $0x5c] sm:$0xff]
        %v217 = vld [vmem:[#allocation2 + $0x64] sm:$0xff]
        %v218 = vld [vmem:[#allocation2 + $0x6c] sm:$0xf]
        %v219 = vld [vmem:[#allocation2 + $0x70] sm:$0xff]
        %v220 = vld [vmem:[#allocation2 + $0x78] sm:$0xff]
        %v221 = vld [vmem:[#allocation2 + $0x80] sm:$0xff]
        %v222 = vld [vmem:[#allocation2 + $0x88] sm:$0xf]
        %v223 = vld [vmem:[#allocation2 + $0x8c] sm:$0xff]
        %v224 = vld [vmem:[#allocation2 + $0x94] sm:$0xff]
        %v225 = vld [vmem:[#allocation2 + $0x9c] sm:$0xff]
        %v226 = vld [vmem:[#allocation2 + $0xa4] sm:$0xf]
        %v227 = vld [vmem:[#allocation2 + $0xa8] sm:$0xff]
        %v228 = vld [vmem:[#allocation2 + $0xb0] sm:$0xff]
        %v229 = vld [vmem:[#allocation2 + $0xb8] sm:$0xff]
        %v230 = vld [vmem:[#allocation2 + $0xc0] sm:$0xf]
        %v231 = vld [vmem:[#allocation2 + $0xc4] sm:$0xff]
        %v232 = vld [vmem:[#allocation2 + $0xcc] sm:$0xff]
        %v233 = vld [vmem:[#allocation2 + $0xd4] sm:$0xff]
        %v234 = vld [vmem:[#allocation2 + $0xdc] sm:$0xf]
        %v235 = vld [vmem:[#allocation2 + $0xe0] sm:$0xff]
        %v236 = vld [vmem:[#allocation2 + $0xe8] sm:$0xff]
        %v237 = vld [vmem:[#allocation2 + $0xf0] sm:$0xff]
        %v238 = vld [vmem:[#allocation2 + $0xf8] sm:$0xf]
        %v239 = vld [vmem:[#allocation2 + $0xfc] sm:$0xff]
        %v240 = vld [vmem:[#allocation2 + $0x104] sm:$0xff]
        %v241 = vld [vmem:[#allocation2 + $0x10c] sm:$0xff]
        %v242 = vld [vmem:[#allocation2 + $0x114] sm:$0xf]
        %v243 = vld [vmem:[#allocation2 + $0x118] sm:$0xff]
        %v244 = vld [vmem:[#allocation2 + $0x120] sm:$0xff]
        %v245 = vld [vmem:[#allocation2 + $0x128] sm:$0xff]
        %v246 = vld [vmem:[#allocation2 + $0x130] sm:$0xf]
        %v247 = vld [vmem:[#allocation2 + $0x134] sm:$0xff]
        %v248 = vld [vmem:[#allocation2 + $0x13c] sm:$0xff]
        %v249 = vld [vmem:[#allocation2 + $0x144] sm:$0xff]
        %v250 = vld [vmem:[#allocation2 + $0x14c] sm:$0xf]
        %v251 = vld [vmem:[#allocation2 + $0x150] sm:$0xff]
        %v252 = vld [vmem:[#allocation2 + $0x158] sm:$0xff]
        %v253 = vld [vmem:[#allocation2 + $0x160] sm:$0xff]
        %v254 = vld [vmem:[#allocation2 + $0x168] sm:$0xf]
        %v255 = vld [vmem:[#allocation2 + $0x16c] sm:$0xff]
        %v256 = vld [vmem:[#allocation2 + $0x174] sm:$0xff]
        %v257 = vld [vmem:[#allocation2 + $0x17c] sm:$0xff]
        %v258 = vld [vmem:[#allocation2 + $0x184] sm:$0xf]
        %v259 = vld [vmem:[#allocation2 + $0x188] sm:$0xff]
        %v260 = vld [vmem:[#allocation2 + $0x190] sm:$0xff]
        %v261 = vld [vmem:[#allocation2 + $0x198] sm:$0xff]
        %v262 = vld [vmem:[#allocation2 + $0x1a0] sm:$0xf]
        %v263 = vld [vmem:[#allocation2 + $0x1a4] sm:$0xff]
        %v264 = vld [vmem:[#allocation2 + $0x1ac] sm:$0xff]
        %v265 = vld [vmem:[#allocation2 + $0x1b4] sm:$0xff]
        %v266 = vld [vmem:[#allocation2 + $0x1bc] sm:$0xf]
        %v267 = vld [vmem:[#allocation2 + $0x1c0] sm:$0xff]
        %v268 = vld [vmem:[#allocation2 + $0x1c8] sm:$0xff]
        %v269 = vld [vmem:[#allocation2 + $0x1d0] sm:$0xff]
        %v270 = vld [vmem:[#allocation2 + $0x1d8] sm:$0xf]
        %v271 = vld [vmem:[#allocation2 + $0x1dc] sm:$0xff]
        %v272 = vld [vmem:[#allocation2 + $0x1e4] sm:$0xff]
        %v273 = vld [vmem:[#allocation2 + $0x1ec] sm:$0xff]
        %v274 = vld [vmem:[#allocation2 + $0x1f4] sm:$0xf]
        %v275 = vld [vmem:[#allocation2 + $0x1f8] sm:$0xff]
        %v276 = vld [vmem:[#allocation2 + $0x200] sm:$0xff]
        %v277 = vld [vmem:[#allocation2 + $0x208] sm:$0xff]
        %v278 = vld [vmem:[#allocation2 + $0x210] sm:$0xf]
        %v279 = vld [vmem:[#allocation2 + $0x214] sm:$0xff]
        %v280 = vld [vmem:[#allocation2 + $0x21c] sm:$0xff]
        %v281 = vld [vmem:[#allocation2 + $0x224] sm:$0xff]
        %v282 = vld [vmem:[#allocation2 + $0x22c] sm:$0xf]
        %v283 = vld [vmem:[#allocation2 + $0x230] sm:$0xff]
        %v284 = vld [vmem:[#allocation2 + $0x238] sm:$0xff]
        %v285 = vld [vmem:[#allocation2 + $0x240] sm:$0xff]
        %v286 = vld [vmem:[#allocation2 + $0x248] sm:$0xf]
        %v287 = vld [vmem:[#allocation2 + $0x24c] sm:$0xff]
        %v288 = vld [vmem:[#allocation2 + $0x254] sm:$0xff]
        %v289 = vld [vmem:[#allocation2 + $0x25c] sm:$0xff]
        %v290 = vld [vmem:[#allocation2 + $0x264] sm:$0xf]
        %v291 = vld [vmem:[#allocation2 + $0x268] sm:$0xff]
        %v292 = vld [vmem:[#allocation2 + $0x270] sm:$0xff]
        %v293 = vld [vmem:[#allocation2 + $0x278] sm:$0xff]
        %v294 = vld [vmem:[#allocation2 + $0x280] sm:$0xf]
        %v295 = vld [vmem:[#allocation2 + $0x284] sm:$0xff]
        %v296 = vld [vmem:[#allocation2 + $0x28c] sm:$0xff]
        %v297 = vld [vmem:[#allocation2 + $0x294] sm:$0xff]
        %v298 = vld [vmem:[#allocation2 + $0x29c] sm:$0xf]
        %v299 = vld [vmem:[#allocation2 + $0x2a0] sm:$0xff]
        %v300 = vld [vmem:[#allocation2 + $0x2a8] sm:$0xff]
        %v301 = vld [vmem:[#allocation2 + $0x2b0] sm:$0xff]
        %v302 = vld [vmem:[#allocation2 + $0x2b8] sm:$0xf]
        %v303 = vld [vmem:[#allocation2 + $0x2bc] sm:$0xff]
        %v304 = vld [vmem:[#allocation2 + $0x2c4] sm:$0xff]
        %v305 = vld [vmem:[#allocation2 + $0x2cc] sm:$0xff]
        %v306 = vld [vmem:[#allocation2 + $0x2d4] sm:$0xf]
        %v307 = vld [vmem:[#allocation2 + $0x2d8] sm:$0xff]
        %v308 = vld [vmem:[#allocation2 + $0x2e0] sm:$0xff]
        %v309 = vld [vmem:[#allocation2 + $0x2e8] sm:$0xff]
        %v310 = vld [vmem:[#allocation2 + $0x2f0] sm:$0xf]
        %v311 = vld [vmem:[#allocation2 + $0x2f4] sm:$0xff]
        %v312 = vld [vmem:[#allocation2 + $0x2fc] sm:$0xff]
        %v313 = vld [vmem:[#allocation2 + $0x304] sm:$0xff]
        %v314 = vld [vmem:[#allocation2 + $0x30c] sm:$0xf]
        %v315 = vld [vmem:[#allocation2 + $0x310] sm:$0xff]
        %v316 = vld [vmem:[#allocation2 + $0x318] sm:$0xff]
        %v317 = vld [vmem:[#allocation2 + $0x320] sm:$0xff]
        %v318 = vld [vmem:[#allocation2 + $0x328] sm:$0xf]
        %v319 = vld [vmem:[#allocation2 + $0x32c] sm:$0xff]
        %v320 = vld [vmem:[#allocation2 + $0x334] sm:$0xff]
        %v321 = vld [vmem:[#allocation2 + $0x33c] sm:$0xff]
        %v322 = vld [vmem:[#allocation2 + $0x344] sm:$0xf]
        %v323 = vld [vmem:[#allocation2 + $0x348] sm:$0xff]
        %v324 = vld [vmem:[#allocation2 + $0x350] sm:$0xff]
        %v325 = vld [vmem:[#allocation2 + $0x358] sm:$0xff]
        %v326 = vld [vmem:[#allocation2 + $0x360] sm:$0xf]
        %v327 = vld [vmem:[#allocation2 + $0x364] sm:$0xff]
        %v328 = vld [vmem:[#allocation2 + $0x36c] sm:$0xff]
        %v329 = vld [vmem:[#allocation2 + $0x374] sm:$0xff]
        %v330 = vld [vmem:[#allocation2 + $0x37c] sm:$0xf]
        %v331 = vld [vmem:[#allocation2 + $0x380] sm:$0xff]
        %v332 = vld [vmem:[#allocation2 + $0x388] sm:$0xff]
        %v333 = vld [vmem:[#allocation2 + $0x390] sm:$0xff]
        %v334 = vld [vmem:[#allocation2 + $0x398] sm:$0xf]
        %v335 = vld [vmem:[#allocation2 + $0x39c] sm:$0xff]
        %v336 = vld [vmem:[#allocation2 + $0x3a4] sm:$0xff]
        %v337 = vld [vmem:[#allocation2 + $0x3ac] sm:$0xff]
        %v338 = vld [vmem:[#allocation2 + $0x3b4] sm:$0xf]
        %v339 = vld [vmem:[#allocation2 + $0x3b8] sm:$0xff]
        %v340 = vld [vmem:[#allocation2 + $0x3c0] sm:$0xff]
        %v341 = vld [vmem:[#allocation2 + $0x3c8] sm:$0xff]
        %v342 = vld [vmem:[#allocation2 + $0x3d0] sm:$0xf]
        %v343 = vld [vmem:[#allocation2 + $0x3d4] sm:$0xff]
        %v344 = vld [vmem:[#allocation2 + $0x3dc] sm:$0xff]
        %v345 = vld [vmem:[#allocation2 + $0x3e4] sm:$0xff]
        %v346 = vld [vmem:[#allocation2 + $0x3ec] sm:$0xf]
        %v347 = vld [vmem:[#allocation2 + $0x3f0] sm:$0xff]
        %v348 = vld [vmem:[#allocation2 + $0x3f8] sm:$0xff]
        %v349 = vld [vmem:[#allocation2 + $0x400] sm:$0xff]
        %v350 = vld [vmem:[#allocation2 + $0x408] sm:$0xf]
        %v351 = vld [vmem:[#allocation2 + $0x40c] sm:$0xff]
        %v352 = vld [vmem:[#allocation2 + $0x414] sm:$0xff]
        %v353 = vld [vmem:[#allocation2 + $0x41c] sm:$0xff]
        %v354 = vld [vmem:[#allocation2 + $0x424] sm:$0xf]
        %v355 = vld [vmem:[#allocation2 + $0x428] sm:$0xff]
        %v356 = vld [vmem:[#allocation2 + $0x430] sm:$0xff]
        %v357 = vld [vmem:[#allocation2 + $0x438] sm:$0xff]
        %v358 = vld [vmem:[#allocation2 + $0x440] sm:$0xf]
        %v359 = vld [vmem:[#allocation2 + $0x444] sm:$0xff]
        %v360 = vld [vmem:[#allocation2 + $0x44c] sm:$0xff]
        %v361 = vld [vmem:[#allocation2 + $0x454] sm:$0xff]
        %v362 = vld [vmem:[#allocation2 + $0x45c] sm:$0xf]
        %v363 = vld [vmem:[#allocation2 + $0x460] sm:$0xff]
        %v364 = vld [vmem:[#allocation2 + $0x468] sm:$0xff]
        %v365 = vld [vmem:[#allocation2 + $0x470] sm:$0xff]
        %v366 = vld [vmem:[#allocation2 + $0x478] sm:$0xf]
        %v367 = vld [vmem:[#allocation2 + $0x47c] sm:$0xff]
        %v368 = vld [vmem:[#allocation2 + $0x484] sm:$0xff]
        %v369 = vld [vmem:[#allocation2 + $0x48c] sm:$0xff]
        %v370 = vld [vmem:[#allocation2 + $0x494] sm:$0xf]
        %v371 = vld [vmem:[#allocation2 + $0x498] sm:$0xff]
        %v372 = vld [vmem:[#allocation2 + $0x4a0] sm:$0xff]
        %v373 = vld [vmem:[#allocation2 + $0x4a8] sm:$0xff]
        %v374 = vld [vmem:[#allocation2 + $0x4b0] sm:$0xf]
        %v375 = vld [vmem:[#allocation2 + $0x4b4] sm:$0xff]
        %v376 = vld [vmem:[#allocation2 + $0x4bc] sm:$0xff]
        %v377 = vld [vmem:[#allocation2 + $0x4c4] sm:$0xff]
        %v378 = vld [vmem:[#allocation2 + $0x4cc] sm:$0xf]
        %v379 = vld [vmem:[#allocation2 + $0x4d0] sm:$0xff]
        %v380 = vld [vmem:[#allocation2 + $0x4d8] sm:$0xff]
        %v381 = vld [vmem:[#allocation2 + $0x4e0] sm:$0xff]
        %v382 = vld [vmem:[#allocation2 + $0x4e8] sm:$0xf]
        %v383 = vld [vmem:[#allocation2 + $0x4ec] sm:$0xff]
        %v384 = vld [vmem:[#allocation2 + $0x4f4] sm:$0xff]
        %v385 = vld [vmem:[#allocation2 + $0x4fc] sm:$0xff]
        %v386 = vld [vmem:[#allocation2 + $0x504] sm:$0xf]
        %v387 = vld [vmem:[#allocation2 + $0x508] sm:$0xff]
        %v388 = vld [vmem:[#allocation2 + $0x510] sm:$0xff]
        %v389 = vld [vmem:[#allocation2 + $0x518] sm:$0xff]
        %v390 = vld [vmem:[#allocation2 + $0x520] sm:$0xf]
        %v391 = vld [vmem:[#allocation2 + $0x524] sm:$0xff]
        %v392 = vld [vmem:[#allocation2 + $0x52c] sm:$0xff]
        %v393 = vld [vmem:[#allocation2 + $0x534] sm:$0xff]
        %v394 = vld [vmem:[#allocation2 + $0x53c] sm:$0xf]
        %v395 = vld [vmem:[#allocation2 + $0x540] sm:$0xff]
        %v396 = vld [vmem:[#allocation2 + $0x548] sm:$0xff]
        %v397 = vld [vmem:[#allocation2 + $0x550] sm:$0xff]
        %v398 = vld [vmem:[#allocation2 + $0x558] sm:$0xf]
        %v399 = vld [vmem:[#allocation2 + $0x55c] sm:$0xff]
        %v400 = vld [vmem:[#allocation2 + $0x564] sm:$0xff]
        %v401 = vld [vmem:[#allocation2 + $0x56c] sm:$0xff]
        %v402 = vld [vmem:[#allocation2 + $0x574] sm:$0xf]
        %v403 = vld [vmem:[#allocation2 + $0x578] sm:$0xff]
        %v404 = vld [vmem:[#allocation2 + $0x580] sm:$0xff]
        %v405 = vld [vmem:[#allocation2 + $0x588] sm:$0xff]
        %v406 = vld [vmem:[#allocation2 + $0x590] sm:$0xf]
        %v407 = vld [vmem:[#allocation2 + $0x594] sm:$0xff]
        %v408 = vld [vmem:[#allocation2 + $0x59c] sm:$0xff]
        %v409 = vld [vmem:[#allocation2 + $0x5a4] sm:$0xff]
        %v410 = vld [vmem:[#allocation2 + $0x5ac] sm:$0xf]
        %v411 = vld [vmem:[#allocation2 + $0x5b0] sm:$0xff]
        %v412 = vld [vmem:[#allocation2 + $0x5b8] sm:$0xff]
        %v413 = vld [vmem:[#allocation2 + $0x5c0] sm:$0xff]
        %v414 = vld [vmem:[#allocation2 + $0x5c8] sm:$0xf]
        %v415 = vld [vmem:[#allocation2 + $0x5cc] sm:$0xff]
        %v416 = vld [vmem:[#allocation2 + $0x5d4] sm:$0xff]
        %v417 = vld [vmem:[#allocation2 + $0x5dc] sm:$0xff]
        %v418 = vld [vmem:[#allocation2 + $0x5e4] sm:$0xf]
        %v419 = vld [vmem:[#allocation2 + $0x5e8] sm:$0xff]
        %v420 = vld [vmem:[#allocation2 + $0x5f0] sm:$0xff]
        %v421 = vld [vmem:[#allocation2 + $0x5f8] sm:$0xff]
        %v422 = vld [vmem:[#allocation2 + $0x600] sm:$0xf]
        %v423 = vld [vmem:[#allocation2 + $0x604] sm:$0xff]
        %v424 = vld [vmem:[#allocation2 + $0x60c] sm:$0xff]
        %v425 = vld [vmem:[#allocation2 + $0x614] sm:$0xff]
        %v426 = vld [vmem:[#allocation2 + $0x61c] sm:$0xf]
        %v427 = vld [vmem:[#allocation2 + $0x620] sm:$0xff]
        %v428 = vld [vmem:[#allocation2 + $0x628] sm:$0xff]
        %v429 = vld [vmem:[#allocation2 + $0x630] sm:$0xff]
        %v430 = vld [vmem:[#allocation2 + $0x638] sm:$0xf]
        %v431 = vld [vmem:[#allocation2 + $0x63c] sm:$0xff]
        %v432 = vld [vmem:[#allocation2 + $0x644] sm:$0xff]
        %v433 = vld [vmem:[#allocation2 + $0x64c] sm:$0xff]
        %v434 = vld [vmem:[#allocation2 + $0x654] sm:$0xf]
        %v435 = vld [vmem:[#allocation2 + $0x658] sm:$0xff]
        %v436 = vld [vmem:[#allocation2 + $0x660] sm:$0xff]
        %v437 = vld [vmem:[#allocation2 + $0x668] sm:$0xff]
        %v438 = vld [vmem:[#allocation2 + $0x670] sm:$0xf]
        %v439 = vld [vmem:[#allocation2 + $0x674] sm:$0xff]
        %v440 = vld [vmem:[#allocation2 + $0x67c] sm:$0xff]
        %v441 = vld [vmem:[#allocation2 + $0x684] sm:$0xff]
        %v442 = vld [vmem:[#allocation2 + $0x68c] sm:$0xf]
        %v443 = vld [vmem:[#allocation2 + $0x690] sm:$0xff]
        %v444 = vld [vmem:[#allocation2 + $0x698] sm:$0xff]
        %v445 = vld [vmem:[#allocation2 + $0x6a0] sm:$0xff]
        %v446 = vld [vmem:[#allocation2 + $0x6a8] sm:$0xf]
        %v447 = vld [vmem:[#allocation2 + $0x6ac] sm:$0xff]
        %v448 = vld [vmem:[#allocation2 + $0x6b4] sm:$0xff]
        %v449 = vld [vmem:[#allocation2 + $0x6bc] sm:$0xff]
        %v450 = vld [vmem:[#allocation2 + $0x6c4] sm:$0xf]
        %v451 = vld [vmem:[#allocation2 + $0x6c8] sm:$0xff]
        %v452 = vld [vmem:[#allocation2 + $0x6d0] sm:$0xff]
        %v453 = vld [vmem:[#allocation2 + $0x6d8] sm:$0xff]
        %v454 = vld [vmem:[#allocation2 + $0x6e0] sm:$0xf]
        %v455 = vld [vmem:[#allocation2 + $0x6e4] sm:$0xff]
        %v456 = vld [vmem:[#allocation2 + $0x6ec] sm:$0xff]
        %v457 = vld [vmem:[#allocation2 + $0x6f4] sm:$0xff]
        %v458 = vld [vmem:[#allocation2 + $0x6fc] sm:$0xf]
        %v459 = vld [vmem:[%s2] sm:$0xff]
        %v461 = vlaneseq
        %v462 = vshrl.u32 %v461, 7
        %v463 = vsub.s32 0, %v462
        %v464 = vrot.slane %v459, %v463
        %v465 = vlaneseq
        %v466 = vshrl.u32 %v465, 7
        %v467 = vsub.s32 1, %v466
        %v468 = vrot.slane %v459, %v467
        %v469 = vlaneseq
        %v470 = vshrl.u32 %v469, 7
        %v471 = vsub.s32 2, %v470
        %v472 = vrot.slane %v459, %v471
        %v473 = vlaneseq
        %v474 = vshrl.u32 %v473, 7
        %v475 = vsub.s32 3, %v474
        %v476 = vrot.slane %v459, %v475
        %v477 = vlaneseq
        %v478 = vshrl.u32 %v477, 7
        %v479 = vsub.s32 4, %v478
        %v480 = vrot.slane %v459, %v479
        %v481 = vlaneseq
        %v482 = vshrl.u32 %v481, 7
        %v483 = vsub.s32 5, %v482
        %v484 = vrot.slane %v459, %v483
        %v485 = vlaneseq
        %v486 = vshrl.u32 %v485, 7
        %v487 = vsub.s32 6, %v486
        %v488 = vrot.slane %v459, %v487
        %v504 = vunpack.c.l.b16 %v195
        %v505 = vunpack.c.h.b16 %v195
        %v506 = vunpack.c.l.b16 %v196
        %v507 = vunpack.c.h.b16 %v196
        %v508 = vunpack.c.l.b16 %v197
        %v509 = vunpack.c.h.b16 %v197
        %v510 = vunpack.c.l.b16 %v198
        %v511 = vunpack.c.h.b16 %v198
        %v512 = vunpack.c.l.b16 %v199
        %v513 = vunpack.c.h.b16 %v199
        %v514 = vunpack.c.l.b16 %v200
        %v515 = vunpack.c.h.b16 %v200
        %v516 = vunpack.c.l.b16 %v201
        %v517 = vunpack.c.h.b16 %v201
        %v518 = vunpack.c.l.b16 %v202
        %v519 = vunpack.c.h.b16 %v202
        %v520 = vpack.c.b16 %v508, %v504
        %v521 = vpack.c.b16 %v509, %v505
        %v522 = vpack.c.b16 %v510, %v506
        %v523 = vpack.c.b16 %v511, %v507
        %v524 = vpack.c.b16 %v516, %v512
        %v525 = vpack.c.b16 %v517, %v513
        %v526 = vpack.c.b16 %v518, %v514
        %v527 = vpack.c.b16 %v519, %v515
        %v792 = vunpack.c.l.b16 %v203
        %v793 = vunpack.c.h.b16 %v203
        %v794 = vunpack.c.l.b16 %v204
        %v795 = vunpack.c.h.b16 %v204
        %v796 = vunpack.c.l.b16 %v205
        %v797 = vunpack.c.h.b16 %v205
        %v798 = vunpack.c.l.b16 %v206
        %v799 = vunpack.c.l.b16 %v207
        %v800 = vunpack.c.h.b16 %v207
        %v801 = vunpack.c.l.b16 %v208
        %v802 = vunpack.c.h.b16 %v208
        %v803 = vunpack.c.l.b16 %v209
        %v804 = vunpack.c.h.b16 %v209
        %v805 = vunpack.c.l.b16 %v210
        %v806 = vunpack.c.l.b16 %v211
        %v807 = vunpack.c.h.b16 %v211
        %v808 = vunpack.c.l.b16 %v212
        %v809 = vunpack.c.h.b16 %v212
        %v810 = vunpack.c.l.b16 %v213
        %v811 = vunpack.c.h.b16 %v213
        %v812 = vunpack.c.l.b16 %v214
        %v813 = vunpack.c.l.b16 %v215
        %v814 = vunpack.c.h.b16 %v215
        %v815 = vunpack.c.l.b16 %v216
        %v816 = vunpack.c.h.b16 %v216
        %v817 = vunpack.c.l.b16 %v217
        %v818 = vunpack.c.h.b16 %v217
        %v819 = vunpack.c.l.b16 %v218
        %v820 = vunpack.c.l.b16 %v219
        %v821 = vunpack.c.h.b16 %v219
        %v822 = vunpack.c.l.b16 %v220
        %v823 = vunpack.c.h.b16 %v220
        %v824 = vunpack.c.l.b16 %v221
        %v825 = vunpack.c.h.b16 %v221
        %v826 = vunpack.c.l.b16 %v222
        %v827 = vunpack.c.l.b16 %v223
        %v828 = vunpack.c.h.b16 %v223
        %v829 = vunpack.c.l.b16 %v224
        %v830 = vunpack.c.h.b16 %v224
        %v831 = vunpack.c.l.b16 %v225
        %v832 = vunpack.c.h.b16 %v225
        %v833 = vunpack.c.l.b16 %v226
        %v834 = vunpack.c.l.b16 %v227
        %v835 = vunpack.c.h.b16 %v227
        %v836 = vunpack.c.l.b16 %v228
        %v837 = vunpack.c.h.b16 %v228
        %v838 = vunpack.c.l.b16 %v229
        %v839 = vunpack.c.h.b16 %v229
        %v840 = vunpack.c.l.b16 %v230
        %v841 = vunpack.c.l.b16 %v231
        %v842 = vunpack.c.h.b16 %v231
        %v843 = vunpack.c.l.b16 %v232
        %v844 = vunpack.c.h.b16 %v232
        %v845 = vunpack.c.l.b16 %v233
        %v846 = vunpack.c.h.b16 %v233
        %v847 = vunpack.c.l.b16 %v234
        %v848 = vunpack.c.l.b16 %v235
        %v849 = vunpack.c.h.b16 %v235
        %v850 = vunpack.c.l.b16 %v236
        %v851 = vunpack.c.h.b16 %v236
        %v852 = vunpack.c.l.b16 %v237
        %v853 = vunpack.c.h.b16 %v237
        %v854 = vunpack.c.l.b16 %v238
        %v855 = vunpack.c.l.b16 %v239
        %v856 = vunpack.c.h.b16 %v239
        %v857 = vunpack.c.l.b16 %v240
        %v858 = vunpack.c.h.b16 %v240
        %v859 = vunpack.c.l.b16 %v241
        %v860 = vunpack.c.h.b16 %v241
        %v861 = vunpack.c.l.b16 %v242
        %v862 = vunpack.c.l.b16 %v243
        %v863 = vunpack.c.h.b16 %v243
        %v864 = vunpack.c.l.b16 %v244
        %v865 = vunpack.c.h.b16 %v244
        %v866 = vunpack.c.l.b16 %v245
        %v867 = vunpack.c.h.b16 %v245
        %v868 = vunpack.c.l.b16 %v246
        %v869 = vunpack.c.l.b16 %v247
        %v870 = vunpack.c.h.b16 %v247
        %v871 = vunpack.c.l.b16 %v248
        %v872 = vunpack.c.h.b16 %v248
        %v873 = vunpack.c.l.b16 %v249
        %v874 = vunpack.c.h.b16 %v249
        %v875 = vunpack.c.l.b16 %v250
        %v876 = vunpack.c.l.b16 %v251
        %v877 = vunpack.c.h.b16 %v251
        %v878 = vunpack.c.l.b16 %v252
        %v879 = vunpack.c.h.b16 %v252
        %v880 = vunpack.c.l.b16 %v253
        %v881 = vunpack.c.h.b16 %v253
        %v882 = vunpack.c.l.b16 %v254
        %v883 = vunpack.c.l.b16 %v255
        %v884 = vunpack.c.h.b16 %v255
        %v885 = vunpack.c.l.b16 %v256
        %v886 = vunpack.c.h.b16 %v256
        %v887 = vunpack.c.l.b16 %v257
        %v888 = vunpack.c.h.b16 %v257
        %v889 = vunpack.c.l.b16 %v258
        %v890 = vunpack.c.l.b16 %v259
        %v891 = vunpack.c.h.b16 %v259
        %v892 = vunpack.c.l.b16 %v260
        %v893 = vunpack.c.h.b16 %v260
        %v894 = vunpack.c.l.b16 %v261
        %v895 = vunpack.c.h.b16 %v261
        %v896 = vunpack.c.l.b16 %v262
        %v897 = vunpack.c.l.b16 %v263
        %v898 = vunpack.c.h.b16 %v263
        %v899 = vunpack.c.l.b16 %v264
        %v900 = vunpack.c.h.b16 %v264
        %v901 = vunpack.c.l.b16 %v265
        %v902 = vunpack.c.h.b16 %v265
        %v903 = vunpack.c.l.b16 %v266
        %v904 = vunpack.c.l.b16 %v267
        %v905 = vunpack.c.h.b16 %v267
        %v906 = vunpack.c.l.b16 %v268
        %v907 = vunpack.c.h.b16 %v268
        %v908 = vunpack.c.l.b16 %v269
        %v909 = vunpack.c.h.b16 %v269
        %v910 = vunpack.c.l.b16 %v270
        %v911 = vunpack.c.l.b16 %v271
        %v912 = vunpack.c.h.b16 %v271
        %v913 = vunpack.c.l.b16 %v272
        %v914 = vunpack.c.h.b16 %v272
        %v915 = vunpack.c.l.b16 %v273
        %v916 = vunpack.c.h.b16 %v273
        %v917 = vunpack.c.l.b16 %v274
        %v918 = vunpack.c.l.b16 %v275
        %v919 = vunpack.c.h.b16 %v275
        %v920 = vunpack.c.l.b16 %v276
        %v921 = vunpack.c.h.b16 %v276
        %v922 = vunpack.c.l.b16 %v277
        %v923 = vunpack.c.h.b16 %v277
        %v924 = vunpack.c.l.b16 %v278
        %v925 = vunpack.c.l.b16 %v279
        %v926 = vunpack.c.h.b16 %v279
        %v927 = vunpack.c.l.b16 %v280
        %v928 = vunpack.c.h.b16 %v280
        %v929 = vunpack.c.l.b16 %v281
        %v930 = vunpack.c.h.b16 %v281
        %v931 = vunpack.c.l.b16 %v282
        %v932 = vunpack.c.l.b16 %v283
        %v933 = vunpack.c.h.b16 %v283
        %v934 = vunpack.c.l.b16 %v284
        %v935 = vunpack.c.h.b16 %v284
        %v936 = vunpack.c.l.b16 %v285
        %v937 = vunpack.c.h.b16 %v285
        %v938 = vunpack.c.l.b16 %v286
        %v939 = vunpack.c.l.b16 %v287
        %v940 = vunpack.c.h.b16 %v287
        %v941 = vunpack.c.l.b16 %v288
        %v942 = vunpack.c.h.b16 %v288
        %v943 = vunpack.c.l.b16 %v289
        %v944 = vunpack.c.h.b16 %v289
        %v945 = vunpack.c.l.b16 %v290
        %v946 = vunpack.c.l.b16 %v291
        %v947 = vunpack.c.h.b16 %v291
        %v948 = vunpack.c.l.b16 %v292
        %v949 = vunpack.c.h.b16 %v292
        %v950 = vunpack.c.l.b16 %v293
        %v951 = vunpack.c.h.b16 %v293
        %v952 = vunpack.c.l.b16 %v294
        %v953 = vunpack.c.l.b16 %v295
        %v954 = vunpack.c.h.b16 %v295
        %v955 = vunpack.c.l.b16 %v296
        %v956 = vunpack.c.h.b16 %v296
        %v957 = vunpack.c.l.b16 %v297
        %v958 = vunpack.c.h.b16 %v297
        %v959 = vunpack.c.l.b16 %v298
        %v960 = vunpack.c.l.b16 %v299
        %v961 = vunpack.c.h.b16 %v299
        %v962 = vunpack.c.l.b16 %v300
        %v963 = vunpack.c.h.b16 %v300
        %v964 = vunpack.c.l.b16 %v301
        %v965 = vunpack.c.h.b16 %v301
        %v966 = vunpack.c.l.b16 %v302
        %v967 = vunpack.c.l.b16 %v303
        %v968 = vunpack.c.h.b16 %v303
        %v969 = vunpack.c.l.b16 %v304
        %v970 = vunpack.c.h.b16 %v304
        %v971 = vunpack.c.l.b16 %v305
        %v972 = vunpack.c.h.b16 %v305
        %v973 = vunpack.c.l.b16 %v306
        %v974 = vunpack.c.l.b16 %v307
        %v975 = vunpack.c.h.b16 %v307
        %v976 = vunpack.c.l.b16 %v308
        %v977 = vunpack.c.h.b16 %v308
        %v978 = vunpack.c.l.b16 %v309
        %v979 = vunpack.c.h.b16 %v309
        %v980 = vunpack.c.l.b16 %v310
        %v981 = vunpack.c.l.b16 %v311
        %v982 = vunpack.c.h.b16 %v311
        %v983 = vunpack.c.l.b16 %v312
        %v984 = vunpack.c.h.b16 %v312
        %v985 = vunpack.c.l.b16 %v313
        %v986 = vunpack.c.h.b16 %v313
        %v987 = vunpack.c.l.b16 %v314
        %v988 = vunpack.c.l.b16 %v315
        %v989 = vunpack.c.h.b16 %v315
        %v990 = vunpack.c.l.b16 %v316
        %v991 = vunpack.c.h.b16 %v316
        %v992 = vunpack.c.l.b16 %v317
        %v993 = vunpack.c.h.b16 %v317
        %v994 = vunpack.c.l.b16 %v318
        %v995 = vunpack.c.l.b16 %v319
        %v996 = vunpack.c.h.b16 %v319
        %v997 = vunpack.c.l.b16 %v320
        %v998 = vunpack.c.h.b16 %v320
        %v999 = vunpack.c.l.b16 %v321
        %v1000 = vunpack.c.h.b16 %v321
        %v1001 = vunpack.c.l.b16 %v322
        %v1002 = vunpack.c.l.b16 %v323
        %v1003 = vunpack.c.h.b16 %v323
        %v1004 = vunpack.c.l.b16 %v324
        %v1005 = vunpack.c.h.b16 %v324
        %v1006 = vunpack.c.l.b16 %v325
        %v1007 = vunpack.c.h.b16 %v325
        %v1008 = vunpack.c.l.b16 %v326
        %v1009 = vunpack.c.l.b16 %v327
        %v1010 = vunpack.c.h.b16 %v327
        %v1011 = vunpack.c.l.b16 %v328
        %v1012 = vunpack.c.h.b16 %v328
        %v1013 = vunpack.c.l.b16 %v329
        %v1014 = vunpack.c.h.b16 %v329
        %v1015 = vunpack.c.l.b16 %v330
        %v1016 = vunpack.c.l.b16 %v331
        %v1017 = vunpack.c.h.b16 %v331
        %v1018 = vunpack.c.l.b16 %v332
        %v1019 = vunpack.c.h.b16 %v332
        %v1020 = vunpack.c.l.b16 %v333
        %v1021 = vunpack.c.h.b16 %v333
        %v1022 = vunpack.c.l.b16 %v334
        %v1023 = vunpack.c.l.b16 %v335
        %v1024 = vunpack.c.h.b16 %v335
        %v1025 = vunpack.c.l.b16 %v336
        %v1026 = vunpack.c.h.b16 %v336
        %v1027 = vunpack.c.l.b16 %v337
        %v1028 = vunpack.c.h.b16 %v337
        %v1029 = vunpack.c.l.b16 %v338
        %v1030 = vunpack.c.l.b16 %v339
        %v1031 = vunpack.c.h.b16 %v339
        %v1032 = vunpack.c.l.b16 %v340
        %v1033 = vunpack.c.h.b16 %v340
        %v1034 = vunpack.c.l.b16 %v341
        %v1035 = vunpack.c.h.b16 %v341
        %v1036 = vunpack.c.l.b16 %v342
        %v1037 = vunpack.c.l.b16 %v343
        %v1038 = vunpack.c.h.b16 %v343
        %v1039 = vunpack.c.l.b16 %v344
        %v1040 = vunpack.c.h.b16 %v344
        %v1041 = vunpack.c.l.b16 %v345
        %v1042 = vunpack.c.h.b16 %v345
        %v1043 = vunpack.c.l.b16 %v346
        %v1044 = vunpack.c.l.b16 %v347
        %v1045 = vunpack.c.h.b16 %v347
        %v1046 = vunpack.c.l.b16 %v348
        %v1047 = vunpack.c.h.b16 %v348
        %v1048 = vunpack.c.l.b16 %v349
        %v1049 = vunpack.c.h.b16 %v349
        %v1050 = vunpack.c.l.b16 %v350
        %v1051 = vunpack.c.l.b16 %v351
        %v1052 = vunpack.c.h.b16 %v351
        %v1053 = vunpack.c.l.b16 %v352
        %v1054 = vunpack.c.h.b16 %v352
        %v1055 = vunpack.c.l.b16 %v353
        %v1056 = vunpack.c.h.b16 %v353
        %v1057 = vunpack.c.l.b16 %v354
        %v1058 = vunpack.c.l.b16 %v355
        %v1059 = vunpack.c.h.b16 %v355
        %v1060 = vunpack.c.l.b16 %v356
        %v1061 = vunpack.c.h.b16 %v356
        %v1062 = vunpack.c.l.b16 %v357
        %v1063 = vunpack.c.h.b16 %v357
        %v1064 = vunpack.c.l.b16 %v358
        %v1065 = vunpack.c.l.b16 %v359
        %v1066 = vunpack.c.h.b16 %v359
        %v1067 = vunpack.c.l.b16 %v360
        %v1068 = vunpack.c.h.b16 %v360
        %v1069 = vunpack.c.l.b16 %v361
        %v1070 = vunpack.c.h.b16 %v361
        %v1071 = vunpack.c.l.b16 %v362
        %v1072 = vunpack.c.l.b16 %v363
        %v1073 = vunpack.c.h.b16 %v363
        %v1074 = vunpack.c.l.b16 %v364
        %v1075 = vunpack.c.h.b16 %v364
        %v1076 = vunpack.c.l.b16 %v365
        %v1077 = vunpack.c.h.b16 %v365
        %v1078 = vunpack.c.l.b16 %v366
        %v1079 = vunpack.c.l.b16 %v367
        %v1080 = vunpack.c.h.b16 %v367
        %v1081 = vunpack.c.l.b16 %v368
        %v1082 = vunpack.c.h.b16 %v368
        %v1083 = vunpack.c.l.b16 %v369
        %v1084 = vunpack.c.h.b16 %v369
        %v1085 = vunpack.c.l.b16 %v370
        %v1086 = vunpack.c.l.b16 %v371
        %v1087 = vunpack.c.h.b16 %v371
        %v1088 = vunpack.c.l.b16 %v372
        %v1089 = vunpack.c.h.b16 %v372
        %v1090 = vunpack.c.l.b16 %v373
        %v1091 = vunpack.c.h.b16 %v373
        %v1092 = vunpack.c.l.b16 %v374
        %v1093 = vunpack.c.l.b16 %v375
        %v1094 = vunpack.c.h.b16 %v375
        %v1095 = vunpack.c.l.b16 %v376
        %v1096 = vunpack.c.h.b16 %v376
        %v1097 = vunpack.c.l.b16 %v377
        %v1098 = vunpack.c.h.b16 %v377
        %v1099 = vunpack.c.l.b16 %v378
        %v1100 = vunpack.c.l.b16 %v379
        %v1101 = vunpack.c.h.b16 %v379
        %v1102 = vunpack.c.l.b16 %v380
        %v1103 = vunpack.c.h.b16 %v380
        %v1104 = vunpack.c.l.b16 %v381
        %v1105 = vunpack.c.h.b16 %v381
        %v1106 = vunpack.c.l.b16 %v382
        %v1107 = vunpack.c.l.b16 %v383
        %v1108 = vunpack.c.h.b16 %v383
        %v1109 = vunpack.c.l.b16 %v384
        %v1110 = vunpack.c.h.b16 %v384
        %v1111 = vunpack.c.l.b16 %v385
        %v1112 = vunpack.c.h.b16 %v385
        %v1113 = vunpack.c.l.b16 %v386
        %v1114 = vunpack.c.l.b16 %v387
        %v1115 = vunpack.c.h.b16 %v387
        %v1116 = vunpack.c.l.b16 %v388
        %v1117 = vunpack.c.h.b16 %v388
        %v1118 = vunpack.c.l.b16 %v389
        %v1119 = vunpack.c.h.b16 %v389
        %v1120 = vunpack.c.l.b16 %v390
        %v1121 = vunpack.c.l.b16 %v391
        %v1122 = vunpack.c.h.b16 %v391
        %v1123 = vunpack.c.l.b16 %v392
        %v1124 = vunpack.c.h.b16 %v392
        %v1125 = vunpack.c.l.b16 %v393
        %v1126 = vunpack.c.h.b16 %v393
        %v1127 = vunpack.c.l.b16 %v394
        %v1128 = vunpack.c.l.b16 %v395
        %v1129 = vunpack.c.h.b16 %v395
        %v1130 = vunpack.c.l.b16 %v396
        %v1131 = vunpack.c.h.b16 %v396
        %v1132 = vunpack.c.l.b16 %v397
        %v1133 = vunpack.c.h.b16 %v397
        %v1134 = vunpack.c.l.b16 %v398
        %v1135 = vunpack.c.l.b16 %v399
        %v1136 = vunpack.c.h.b16 %v399
        %v1137 = vunpack.c.l.b16 %v400
        %v1138 = vunpack.c.h.b16 %v400
        %v1139 = vunpack.c.l.b16 %v401
        %v1140 = vunpack.c.h.b16 %v401
        %v1141 = vunpack.c.l.b16 %v402
        %v1142 = vunpack.c.l.b16 %v403
        %v1143 = vunpack.c.h.b16 %v403
        %v1144 = vunpack.c.l.b16 %v404
        %v1145 = vunpack.c.h.b16 %v404
        %v1146 = vunpack.c.l.b16 %v405
        %v1147 = vunpack.c.h.b16 %v405
        %v1148 = vunpack.c.l.b16 %v406
        %v1149 = vunpack.c.l.b16 %v407
        %v1150 = vunpack.c.h.b16 %v407
        %v1151 = vunpack.c.l.b16 %v408
        %v1152 = vunpack.c.h.b16 %v408
        %v1153 = vunpack.c.l.b16 %v409
        %v1154 = vunpack.c.h.b16 %v409
        %v1155 = vunpack.c.l.b16 %v410
        %v1156 = vunpack.c.l.b16 %v411
        %v1157 = vunpack.c.h.b16 %v411
        %v1158 = vunpack.c.l.b16 %v412
        %v1159 = vunpack.c.h.b16 %v412
        %v1160 = vunpack.c.l.b16 %v413
        %v1161 = vunpack.c.h.b16 %v413
        %v1162 = vunpack.c.l.b16 %v414
        %v1163 = vunpack.c.l.b16 %v415
        %v1164 = vunpack.c.h.b16 %v415
        %v1165 = vunpack.c.l.b16 %v416
        %v1166 = vunpack.c.h.b16 %v416
        %v1167 = vunpack.c.l.b16 %v417
        %v1168 = vunpack.c.h.b16 %v417
        %v1169 = vunpack.c.l.b16 %v418
        %v1170 = vunpack.c.l.b16 %v419
        %v1171 = vunpack.c.h.b16 %v419
        %v1172 = vunpack.c.l.b16 %v420
        %v1173 = vunpack.c.h.b16 %v420
        %v1174 = vunpack.c.l.b16 %v421
        %v1175 = vunpack.c.h.b16 %v421
        %v1176 = vunpack.c.l.b16 %v422
        %v1177 = vunpack.c.l.b16 %v423
        %v1178 = vunpack.c.h.b16 %v423
        %v1179 = vunpack.c.l.b16 %v424
        %v1180 = vunpack.c.h.b16 %v424
        %v1181 = vunpack.c.l.b16 %v425
        %v1182 = vunpack.c.h.b16 %v425
        %v1183 = vunpack.c.l.b16 %v426
        %v1184 = vunpack.c.l.b16 %v427
        %v1185 = vunpack.c.h.b16 %v427
        %v1186 = vunpack.c.l.b16 %v428
        %v1187 = vunpack.c.h.b16 %v428
        %v1188 = vunpack.c.l.b16 %v429
        %v1189 = vunpack.c.h.b16 %v429
        %v1190 = vunpack.c.l.b16 %v430
        %v1191 = vunpack.c.l.b16 %v431
        %v1192 = vunpack.c.h.b16 %v431
        %v1193 = vunpack.c.l.b16 %v432
        %v1194 = vunpack.c.h.b16 %v432
        %v1195 = vunpack.c.l.b16 %v433
        %v1196 = vunpack.c.h.b16 %v433
        %v1197 = vunpack.c.l.b16 %v434
        %v1198 = vunpack.c.l.b16 %v435
        %v1199 = vunpack.c.h.b16 %v435
        %v1200 = vunpack.c.l.b16 %v436
        %v1201 = vunpack.c.h.b16 %v436
        %v1202 = vunpack.c.l.b16 %v437
        %v1203 = vunpack.c.h.b16 %v437
        %v1204 = vunpack.c.l.b16 %v438
        %v1205 = vunpack.c.l.b16 %v439
        %v1206 = vunpack.c.h.b16 %v439
        %v1207 = vunpack.c.l.b16 %v440
        %v1208 = vunpack.c.h.b16 %v440
        %v1209 = vunpack.c.l.b16 %v441
        %v1210 = vunpack.c.h.b16 %v441
        %v1211 = vunpack.c.l.b16 %v442
        %v1212 = vunpack.c.l.b16 %v443
        %v1213 = vunpack.c.h.b16 %v443
        %v1214 = vunpack.c.l.b16 %v444
        %v1215 = vunpack.c.h.b16 %v444
        %v1216 = vunpack.c.l.b16 %v445
        %v1217 = vunpack.c.h.b16 %v445
        %v1218 = vunpack.c.l.b16 %v446
        %v1219 = vunpack.c.l.b16 %v447
        %v1220 = vunpack.c.h.b16 %v447
        %v1221 = vunpack.c.l.b16 %v448
        %v1222 = vunpack.c.h.b16 %v448
        %v1223 = vunpack.c.l.b16 %v449
        %v1224 = vunpack.c.h.b16 %v449
        %v1225 = vunpack.c.l.b16 %v450
        %v1226 = vunpack.c.l.b16 %v451
        %v1227 = vunpack.c.h.b16 %v451
        %v1228 = vunpack.c.l.b16 %v452
        %v1229 = vunpack.c.h.b16 %v452
        %v1230 = vunpack.c.l.b16 %v453
        %v1231 = vunpack.c.h.b16 %v453
        %v1232 = vunpack.c.l.b16 %v454
        %v1233 = vunpack.c.l.b16 %v455
        %v1234 = vunpack.c.h.b16 %v455
        %v1235 = vunpack.c.l.b16 %v456
        %v1236 = vunpack.c.h.b16 %v456
        %v1237 = vunpack.c.l.b16 %v457
        %v1238 = vunpack.c.h.b16 %v457
        %v1239 = vunpack.c.l.b16 %v458
        %v1240 = vpack.c.b16 %v799, %v792
        %v1241 = vpack.c.b16 %v800, %v793
        %v1242 = vpack.c.b16 %v801, %v794
        %v1243 = vpack.c.b16 %v802, %v795
        %v1244 = vpack.c.b16 %v803, %v796
        %v1245 = vpack.c.b16 %v804, %v797
        %v1246 = vpack.c.b16 %v805, %v798
        %v1247 = vpack.c.b16 %v813, %v806
        %v1248 = vpack.c.b16 %v814, %v807
        %v1249 = vpack.c.b16 %v815, %v808
        %v1250 = vpack.c.b16 %v816, %v809
        %v1251 = vpack.c.b16 %v817, %v810
        %v1252 = vpack.c.b16 %v818, %v811
        %v1253 = vpack.c.b16 %v819, %v812
        %v1254 = vpack.c.b16 %v827, %v820
        %v1255 = vpack.c.b16 %v828, %v821
        %v1256 = vpack.c.b16 %v829, %v822
        %v1257 = vpack.c.b16 %v830, %v823
        %v1258 = vpack.c.b16 %v831, %v824
        %v1259 = vpack.c.b16 %v832, %v825
        %v1260 = vpack.c.b16 %v833, %v826
        %v1261 = vpack.c.b16 %v841, %v834
        %v1262 = vpack.c.b16 %v842, %v835
        %v1263 = vpack.c.b16 %v843, %v836
        %v1264 = vpack.c.b16 %v844, %v837
        %v1265 = vpack.c.b16 %v845, %v838
        %v1266 = vpack.c.b16 %v846, %v839
        %v1267 = vpack.c.b16 %v847, %v840
        %v1268 = vpack.c.b16 %v855, %v848
        %v1269 = vpack.c.b16 %v856, %v849
        %v1270 = vpack.c.b16 %v857, %v850
        %v1271 = vpack.c.b16 %v858, %v851
        %v1272 = vpack.c.b16 %v859, %v852
        %v1273 = vpack.c.b16 %v860, %v853
        %v1274 = vpack.c.b16 %v861, %v854
        %v1275 = vpack.c.b16 %v869, %v862
        %v1276 = vpack.c.b16 %v870, %v863
        %v1277 = vpack.c.b16 %v871, %v864
        %v1278 = vpack.c.b16 %v872, %v865
        %v1279 = vpack.c.b16 %v873, %v866
        %v1280 = vpack.c.b16 %v874, %v867
        %v1281 = vpack.c.b16 %v875, %v868
        %v1282 = vpack.c.b16 %v883, %v876
        %v1283 = vpack.c.b16 %v884, %v877
        %v1284 = vpack.c.b16 %v885, %v878
        %v1285 = vpack.c.b16 %v886, %v879
        %v1286 = vpack.c.b16 %v887, %v880
        %v1287 = vpack.c.b16 %v888, %v881
        %v1288 = vpack.c.b16 %v889, %v882
        %v1289 = vpack.c.b16 %v897, %v890
        %v1290 = vpack.c.b16 %v898, %v891
        %v1291 = vpack.c.b16 %v899, %v892
        %v1292 = vpack.c.b16 %v900, %v893
        %v1293 = vpack.c.b16 %v901, %v894
        %v1294 = vpack.c.b16 %v902, %v895
        %v1295 = vpack.c.b16 %v903, %v896
        %v1296 = vpack.c.b16 %v911, %v904
        %v1297 = vpack.c.b16 %v912, %v905
        %v1298 = vpack.c.b16 %v913, %v906
        %v1299 = vpack.c.b16 %v914, %v907
        %v1300 = vpack.c.b16 %v915, %v908
        %v1301 = vpack.c.b16 %v916, %v909
        %v1302 = vpack.c.b16 %v917, %v910
        %v1303 = vpack.c.b16 %v925, %v918
        %v1304 = vpack.c.b16 %v926, %v919
        %v1305 = vpack.c.b16 %v927, %v920
        %v1306 = vpack.c.b16 %v928, %v921
        %v1307 = vpack.c.b16 %v929, %v922
        %v1308 = vpack.c.b16 %v930, %v923
        %v1309 = vpack.c.b16 %v931, %v924
        %v1310 = vpack.c.b16 %v939, %v932
        %v1311 = vpack.c.b16 %v940, %v933
        %v1312 = vpack.c.b16 %v941, %v934
        %v1313 = vpack.c.b16 %v942, %v935
        %v1314 = vpack.c.b16 %v943, %v936
        %v1315 = vpack.c.b16 %v944, %v937
        %v1316 = vpack.c.b16 %v945, %v938
        %v1317 = vpack.c.b16 %v953, %v946
        %v1318 = vpack.c.b16 %v954, %v947
        %v1319 = vpack.c.b16 %v955, %v948
        %v1320 = vpack.c.b16 %v956, %v949
        %v1321 = vpack.c.b16 %v957, %v950
        %v1322 = vpack.c.b16 %v958, %v951
        %v1323 = vpack.c.b16 %v959, %v952
        %v1324 = vpack.c.b16 %v967, %v960
        %v1325 = vpack.c.b16 %v968, %v961
        %v1326 = vpack.c.b16 %v969, %v962
        %v1327 = vpack.c.b16 %v970, %v963
        %v1328 = vpack.c.b16 %v971, %v964
        %v1329 = vpack.c.b16 %v972, %v965
        %v1330 = vpack.c.b16 %v973, %v966
        %v1331 = vpack.c.b16 %v981, %v974
        %v1332 = vpack.c.b16 %v982, %v975
        %v1333 = vpack.c.b16 %v983, %v976
        %v1334 = vpack.c.b16 %v984, %v977
        %v1335 = vpack.c.b16 %v985, %v978
        %v1336 = vpack.c.b16 %v986, %v979
        %v1337 = vpack.c.b16 %v987, %v980
        %v1338 = vpack.c.b16 %v995, %v988
        %v1339 = vpack.c.b16 %v996, %v989
        %v1340 = vpack.c.b16 %v997, %v990
        %v1341 = vpack.c.b16 %v998, %v991
        %v1342 = vpack.c.b16 %v999, %v992
        %v1343 = vpack.c.b16 %v1000, %v993
        %v1344 = vpack.c.b16 %v1001, %v994
        %v1345 = vpack.c.b16 %v1009, %v1002
        %v1346 = vpack.c.b16 %v1010, %v1003
        %v1347 = vpack.c.b16 %v1011, %v1004
        %v1348 = vpack.c.b16 %v1012, %v1005
        %v1349 = vpack.c.b16 %v1013, %v1006
        %v1350 = vpack.c.b16 %v1014, %v1007
        %v1351 = vpack.c.b16 %v1015, %v1008
        %v1352 = vpack.c.b16 %v1023, %v1016
        %v1353 = vpack.c.b16 %v1024, %v1017
        %v1354 = vpack.c.b16 %v1025, %v1018
        %v1355 = vpack.c.b16 %v1026, %v1019
        %v1356 = vpack.c.b16 %v1027, %v1020
        %v1357 = vpack.c.b16 %v1028, %v1021
        %v1358 = vpack.c.b16 %v1029, %v1022
        %v1359 = vpack.c.b16 %v1037, %v1030
        %v1360 = vpack.c.b16 %v1038, %v1031
        %v1361 = vpack.c.b16 %v1039, %v1032
        %v1362 = vpack.c.b16 %v1040, %v1033
        %v1363 = vpack.c.b16 %v1041, %v1034
        %v1364 = vpack.c.b16 %v1042, %v1035
        %v1365 = vpack.c.b16 %v1043, %v1036
        %v1366 = vpack.c.b16 %v1051, %v1044
        %v1367 = vpack.c.b16 %v1052, %v1045
        %v1368 = vpack.c.b16 %v1053, %v1046
        %v1369 = vpack.c.b16 %v1054, %v1047
        %v1370 = vpack.c.b16 %v1055, %v1048
        %v1371 = vpack.c.b16 %v1056, %v1049
        %v1372 = vpack.c.b16 %v1057, %v1050
        %v1373 = vpack.c.b16 %v1065, %v1058
        %v1374 = vpack.c.b16 %v1066, %v1059
        %v1375 = vpack.c.b16 %v1067, %v1060
        %v1376 = vpack.c.b16 %v1068, %v1061
        %v1377 = vpack.c.b16 %v1069, %v1062
        %v1378 = vpack.c.b16 %v1070, %v1063
        %v1379 = vpack.c.b16 %v1071, %v1064
        %v1380 = vpack.c.b16 %v1079, %v1072
        %v1381 = vpack.c.b16 %v1080, %v1073
        %v1382 = vpack.c.b16 %v1081, %v1074
        %v1383 = vpack.c.b16 %v1082, %v1075
        %v1384 = vpack.c.b16 %v1083, %v1076
        %v1385 = vpack.c.b16 %v1084, %v1077
        %v1386 = vpack.c.b16 %v1085, %v1078
        %v1387 = vpack.c.b16 %v1093, %v1086
        %v1388 = vpack.c.b16 %v1094, %v1087
        %v1389 = vpack.c.b16 %v1095, %v1088
        %v1390 = vpack.c.b16 %v1096, %v1089
        %v1391 = vpack.c.b16 %v1097, %v1090
        %v1392 = vpack.c.b16 %v1098, %v1091
        %v1393 = vpack.c.b16 %v1099, %v1092
        %v1394 = vpack.c.b16 %v1107, %v1100
        %v1395 = vpack.c.b16 %v1108, %v1101
        %v1396 = vpack.c.b16 %v1109, %v1102
        %v1397 = vpack.c.b16 %v1110, %v1103
        %v1398 = vpack.c.b16 %v1111, %v1104
        %v1399 = vpack.c.b16 %v1112, %v1105
        %v1400 = vpack.c.b16 %v1113, %v1106
        %v1401 = vpack.c.b16 %v1121, %v1114
        %v1402 = vpack.c.b16 %v1122, %v1115
        %v1403 = vpack.c.b16 %v1123, %v1116
        %v1404 = vpack.c.b16 %v1124, %v1117
        %v1405 = vpack.c.b16 %v1125, %v1118
        %v1406 = vpack.c.b16 %v1126, %v1119
        %v1407 = vpack.c.b16 %v1127, %v1120
        %v1408 = vpack.c.b16 %v1135, %v1128
        %v1409 = vpack.c.b16 %v1136, %v1129
        %v1410 = vpack.c.b16 %v1137, %v1130
        %v1411 = vpack.c.b16 %v1138, %v1131
        %v1412 = vpack.c.b16 %v1139, %v1132
        %v1413 = vpack.c.b16 %v1140, %v1133
        %v1414 = vpack.c.b16 %v1141, %v1134
        %v1415 = vpack.c.b16 %v1149, %v1142
        %v1416 = vpack.c.b16 %v1150, %v1143
        %v1417 = vpack.c.b16 %v1151, %v1144
        %v1418 = vpack.c.b16 %v1152, %v1145
        %v1419 = vpack.c.b16 %v1153, %v1146
        %v1420 = vpack.c.b16 %v1154, %v1147
        %v1421 = vpack.c.b16 %v1155, %v1148
        %v1422 = vpack.c.b16 %v1163, %v1156
        %v1423 = vpack.c.b16 %v1164, %v1157
        %v1424 = vpack.c.b16 %v1165, %v1158
        %v1425 = vpack.c.b16 %v1166, %v1159
        %v1426 = vpack.c.b16 %v1167, %v1160
        %v1427 = vpack.c.b16 %v1168, %v1161
        %v1428 = vpack.c.b16 %v1169, %v1162
        %v1429 = vpack.c.b16 %v1177, %v1170
        %v1430 = vpack.c.b16 %v1178, %v1171
        %v1431 = vpack.c.b16 %v1179, %v1172
        %v1432 = vpack.c.b16 %v1180, %v1173
        %v1433 = vpack.c.b16 %v1181, %v1174
        %v1434 = vpack.c.b16 %v1182, %v1175
        %v1435 = vpack.c.b16 %v1183, %v1176
        %v1436 = vpack.c.b16 %v1191, %v1184
        %v1437 = vpack.c.b16 %v1192, %v1185
        %v1438 = vpack.c.b16 %v1193, %v1186
        %v1439 = vpack.c.b16 %v1194, %v1187
        %v1440 = vpack.c.b16 %v1195, %v1188
        %v1441 = vpack.c.b16 %v1196, %v1189
        %v1442 = vpack.c.b16 %v1197, %v1190
        %v1443 = vpack.c.b16 %v1205, %v1198
        %v1444 = vpack.c.b16 %v1206, %v1199
        %v1445 = vpack.c.b16 %v1207, %v1200
        %v1446 = vpack.c.b16 %v1208, %v1201
        %v1447 = vpack.c.b16 %v1209, %v1202
        %v1448 = vpack.c.b16 %v1210, %v1203
        %v1449 = vpack.c.b16 %v1211, %v1204
        %v1450 = vpack.c.b16 %v1219, %v1212
        %v1451 = vpack.c.b16 %v1220, %v1213
        %v1452 = vpack.c.b16 %v1221, %v1214
        %v1453 = vpack.c.b16 %v1222, %v1215
        %v1454 = vpack.c.b16 %v1223, %v1216
        %v1455 = vpack.c.b16 %v1224, %v1217
        %v1456 = vpack.c.b16 %v1225, %v1218
        %v1457 = vpack.c.b16 %v1233, %v1226
        %v1458 = vpack.c.b16 %v1234, %v1227
        %v1459 = vpack.c.b16 %v1235, %v1228
        %v1460 = vpack.c.b16 %v1236, %v1229
        %v1461 = vpack.c.b16 %v1237, %v1230
        %v1462 = vpack.c.b16 %v1238, %v1231
        %v1463 = vpack.c.b16 %v1239, %v1232
        %1688 = vmatprep.subr.bf16.mxu0 %v1241
        %1689 = vmatpush1.bf16.msra.mxu0 %v1240
        %1690 = vmatprep.subr.bf16.mxu0 %v1248
        %1691 = vmatpush1.bf16.msra.mxu0 %v1247
        %1692 = vmatprep.subr.bf16.mxu0 %v1255
        %1693 = vmatpush1.bf16.msra.mxu0 %v1254
        %1694 = vmatprep.subr.bf16.mxu0 %v1262
        %1695 = vmatpush1.bf16.msra.mxu0 %v1261
        %1696 = vmatprep.subr.bf16.mxu0 %v1269
        %1697 = vmatpush1.bf16.msra.mxu0 %v1268
        %1698 = vmatprep.subr.bf16.mxu0 %v1276
        %1699 = vmatpush1.bf16.msra.mxu0 %v1275
        %1700 = vmatprep.subr.bf16.mxu0 %v1283
        %1701 = vmatpush1.bf16.msra.mxu0 %v1282
        %1702 = vmatprep.subr.bf16.mxu0 %v1290
        %1703 = vmatpush1.bf16.msra.mxu0 %v1289
        %1704 = vmatprep.subr.bf16.mxu0 %v1297
        %1705 = vmatpush1.bf16.msra.mxu0 %v1296
        %1706 = vmatprep.subr.bf16.mxu0 %v1304
        %1707 = vmatpush1.bf16.msra.mxu0 %v1303
        %1708 = vmatprep.subr.bf16.mxu0 %v1311
        %1709 = vmatpush1.bf16.msra.mxu0 %v1310
        %1710 = vmatprep.subr.bf16.mxu0 %v1318
        %1711 = vmatpush1.bf16.msra.mxu0 %v1317
        %1712 = vmatprep.subr.bf16.mxu0 %v1325
        %1713 = vmatpush1.bf16.msra.mxu0 %v1324
        %1714 = vmatprep.subr.bf16.mxu0 %v1332
        %1715 = vmatpush1.bf16.msra.mxu0 %v1331
        %1716 = vmatprep.subr.bf16.mxu0 %v1339
        %1717 = vmatpush1.bf16.msra.mxu0 %v1338
        %1718 = vmatprep.subr.bf16.mxu0 %v1346
        %1719 = vmatpush1.bf16.msra.mxu0 %v1345
        %1720 = vmatprep.mubr.bf16.mxu0 %v521
        %1721 = vmatmul.mubr.bf16.gmra.mrb[0].mxu0 %v520
        %v1722 = vpop.f32.mrb[0].mxu0
        %v1723 = vadd.f32 %v464, %v1722
        %v1724 = vpop.f32.mrb[0].mxu0
        %v1725 = vadd.f32 %v468, %v1724
        %v1726 = vpop.f32.mrb[0].mxu0
        %v1727 = vadd.f32 %v464, %v1726
        %v1728 = vpop.f32.mrb[0].mxu0
        %v1729 = vadd.f32 %v468, %v1728
        %1730 = vmatprep.mubr.bf16.mxu0 %v525
        %1731 = vmatmul.mubr.bf16.gmra.mrb[0].mxu0 %v524
        %v1732 = vpop.f32.mrb[0].mxu0
        %v1733 = vadd.f32 %v464, %v1732
        %v1734 = vpop.f32.mrb[0].mxu0
        %v1735 = vadd.f32 %v468, %v1734
        %v1736 = vpop.f32.mrb[0].mxu0
        %v1737 = vadd.f32 %v464, %v1736
        %v1738 = vpop.f32.mrb[0].mxu0
        %v1739 = vadd.f32 %v468, %v1738
        %1740 = vdwg.mxu0
        %1741 = vmatprep.subr.bf16.mxu0 %v1353
        %1742 = vmatpush1.bf16.msra.mxu0 %v1352
        %1743 = vmatprep.subr.bf16.mxu0 %v1360
        %1744 = vmatpush1.bf16.msra.mxu0 %v1359
        %1745 = vmatprep.subr.bf16.mxu0 %v1367
        %1746 = vmatpush1.bf16.msra.mxu0 %v1366
        %1747 = vmatprep.subr.bf16.mxu0 %v1374
        %1748 = vmatpush1.bf16.msra.mxu0 %v1373
        %1749 = vmatprep.subr.bf16.mxu0 %v1381
        %1750 = vmatpush1.bf16.msra.mxu0 %v1380
        %1751 = vmatprep.subr.bf16.mxu0 %v1388
        %1752 = vmatpush1.bf16.msra.mxu0 %v1387
        %1753 = vmatprep.subr.bf16.mxu0 %v1395
        %1754 = vmatpush1.bf16.msra.mxu0 %v1394
        %1755 = vmatprep.subr.bf16.mxu0 %v1402
        %1756 = vmatpush1.bf16.msra.mxu0 %v1401
        %1757 = vmatprep.subr.bf16.mxu0 %v1409
        %1758 = vmatpush1.bf16.msra.mxu0 %v1408
        %1759 = vmatprep.subr.bf16.mxu0 %v1416
        %1760 = vmatpush1.bf16.msra.mxu0 %v1415
        %1761 = vmatprep.subr.bf16.mxu0 %v1423
        %1762 = vmatpush1.bf16.msra.mxu0 %v1422
        %1763 = vmatprep.subr.bf16.mxu0 %v1430
        %1764 = vmatpush1.bf16.msra.mxu0 %v1429
        %1765 = vmatprep.subr.bf16.mxu0 %v1437
        %1766 = vmatpush1.bf16.msra.mxu0 %v1436
        %1767 = vmatprep.subr.bf16.mxu0 %v1444
        %1768 = vmatpush1.bf16.msra.mxu0 %v1443
        %1769 = vmatprep.subr.bf16.mxu0 %v1451
        %1770 = vmatpush1.bf16.msra.mxu0 %v1450
        %1771 = vmatprep.subr.bf16.mxu0 %v1458
        %1772 = vmatpush1.bf16.msra.mxu0 %v1457
        %1773 = vmatprep.mubr.bf16.mxu0 %v523
        %1774 = vmatmul.mubr.bf16.gmra.mrb[0].mxu0 %v522
        %v1775 = vpop.f32.mrb[0].mxu0
        %v1776 = vadd.f32 %v1723, %v1775
        %v1777 = vpop.f32.mrb[0].mxu0
        %v1778 = vadd.f32 %v1725, %v1777
        %v1779 = vpop.f32.mrb[0].mxu0
        %v1780 = vadd.f32 %v1727, %v1779
        %v1781 = vpop.f32.mrb[0].mxu0
        %v1782 = vadd.f32 %v1729, %v1781
        %1783 = vmatprep.mubr.bf16.mxu0 %v527
        %1784 = vmatmul.mubr.bf16.gmra.mrb[0].mxu0 %v526
        %v1785 = vpop.f32.mrb[0].mxu0
        %v1786 = vadd.f32 %v1733, %v1785
        %v1787 = vpop.f32.mrb[0].mxu0
        %v1788 = vadd.f32 %v1735, %v1787
        %v1789 = vpop.f32.mrb[0].mxu0
        %v1790 = vadd.f32 %v1737, %v1789
        %v1791 = vpop.f32.mrb[0].mxu0
        %v1792 = vadd.f32 %v1739, %v1791
        %1793 = vdwg.mxu0
        %1794 = vmatprep.subr.bf16.mxu0 %v1243
        %1795 = vmatpush1.bf16.msra.mxu0 %v1242
        %1796 = vmatprep.subr.bf16.mxu0 %v1250
        %1797 = vmatpush1.bf16.msra.mxu0 %v1249
        %1798 = vmatprep.subr.bf16.mxu0 %v1257
        %1799 = vmatpush1.bf16.msra.mxu0 %v1256
        %1800 = vmatprep.subr.bf16.mxu0 %v1264
        %1801 = vmatpush1.bf16.msra.mxu0 %v1263
        %1802 = vmatprep.subr.bf16.mxu0 %v1271
        %1803 = vmatpush1.bf16.msra.mxu0 %v1270
        %1804 = vmatprep.subr.bf16.mxu0 %v1278
        %1805 = vmatpush1.bf16.msra.mxu0 %v1277
        %1806 = vmatprep.subr.bf16.mxu0 %v1285
        %1807 = vmatpush1.bf16.msra.mxu0 %v1284
        %1808 = vmatprep.subr.bf16.mxu0 %v1292
        %1809 = vmatpush1.bf16.msra.mxu0 %v1291
        %1810 = vmatprep.subr.bf16.mxu0 %v1299
        %1811 = vmatpush1.bf16.msra.mxu0 %v1298
        %1812 = vmatprep.subr.bf16.mxu0 %v1306
        %1813 = vmatpush1.bf16.msra.mxu0 %v1305
        %1814 = vmatprep.subr.bf16.mxu0 %v1313
        %1815 = vmatpush1.bf16.msra.mxu0 %v1312
        %1816 = vmatprep.subr.bf16.mxu0 %v1320
        %1817 = vmatpush1.bf16.msra.mxu0 %v1319
        %1818 = vmatprep.subr.bf16.mxu0 %v1327
        %1819 = vmatpush1.bf16.msra.mxu0 %v1326
        %1820 = vmatprep.subr.bf16.mxu0 %v1334
        %1821 = vmatpush1.bf16.msra.mxu0 %v1333
        %1822 = vmatprep.subr.bf16.mxu0 %v1341
        %1823 = vmatpush1.bf16.msra.mxu0 %v1340
        %1824 = vmatprep.subr.bf16.mxu0 %v1348
        %1825 = vmatpush1.bf16.msra.mxu0 %v1347
        %1826 = vmatprep.mubr.bf16.mxu0 %v521
        %1827 = vmatmul.mubr.bf16.gmra.mrb[0].mxu0 %v520
        %v1828 = vpop.f32.mrb[0].mxu0
        %v1829 = vadd.f32 %v472, %v1828
        %v1830 = vpop.f32.mrb[0].mxu0
        %v1831 = vadd.f32 %v476, %v1830
        %v1832 = vpop.f32.mrb[0].mxu0
        %v1833 = vadd.f32 %v472, %v1832
        %v1834 = vpop.f32.mrb[0].mxu0
        %v1835 = vadd.f32 %v476, %v1834
        %1836 = vmatprep.mubr.bf16.mxu0 %v525
        %1837 = vmatmul.mubr.bf16.gmra.mrb[0].mxu0 %v524
        %v1838 = vpop.f32.mrb[0].mxu0
        %v1839 = vadd.f32 %v472, %v1838
        %v1840 = vpop.f32.mrb[0].mxu0
        %v1841 = vadd.f32 %v476, %v1840
        %v1842 = vpop.f32.mrb[0].mxu0
        %v1843 = vadd.f32 %v472, %v1842
        %v1844 = vpop.f32.mrb[0].mxu0
        %v1845 = vadd.f32 %v476, %v1844
        %1846 = vdwg.mxu0
        %1847 = vmatprep.subr.bf16.mxu0 %v1355
        %1848 = vmatpush1.bf16.msra.mxu0 %v1354
        %1849 = vmatprep.subr.bf16.mxu0 %v1362
        %1850 = vmatpush1.bf16.msra.mxu0 %v1361
        %1851 = vmatprep.subr.bf16.mxu0 %v1369
        %1852 = vmatpush1.bf16.msra.mxu0 %v1368
        %1853 = vmatprep.subr.bf16.mxu0 %v1376
        %1854 = vmatpush1.bf16.msra.mxu0 %v1375
        %1855 = vmatprep.subr.bf16.mxu0 %v1383
        %1856 = vmatpush1.bf16.msra.mxu0 %v1382
        %1857 = vmatprep.subr.bf16.mxu0 %v1390
        %1858 = vmatpush1.bf16.msra.mxu0 %v1389
        %1859 = vmatprep.subr.bf16.mxu0 %v1397
        %1860 = vmatpush1.bf16.msra.mxu0 %v1396
        %1861 = vmatprep.subr.bf16.mxu0 %v1404
        %1862 = vmatpush1.bf16.msra.mxu0 %v1403
        %1863 = vmatprep.subr.bf16.mxu0 %v1411
        %1864 = vmatpush1.bf16.msra.mxu0 %v1410
        %1865 = vmatprep.subr.bf16.mxu0 %v1418
        %1866 = vmatpush1.bf16.msra.mxu0 %v1417
        %1867 = vmatprep.subr.bf16.mxu0 %v1425
        %1868 = vmatpush1.bf16.msra.mxu0 %v1424
        %1869 = vmatprep.subr.bf16.mxu0 %v1432
        %1870 = vmatpush1.bf16.msra.mxu0 %v1431
        %1871 = vmatprep.subr.bf16.mxu0 %v1439
        %1872 = vmatpush1.bf16.msra.mxu0 %v1438
        %1873 = vmatprep.subr.bf16.mxu0 %v1446
        %1874 = vmatpush1.bf16.msra.mxu0 %v1445
        %1875 = vmatprep.subr.bf16.mxu0 %v1453
        %1876 = vmatpush1.bf16.msra.mxu0 %v1452
        %1877 = vmatprep.subr.bf16.mxu0 %v1460
        %1878 = vmatpush1.bf16.msra.mxu0 %v1459
        %1879 = vmatprep.mubr.bf16.mxu0 %v523
        %1880 = vmatmul.mubr.bf16.gmra.mrb[0].mxu0 %v522
        %v1881 = vpop.f32.mrb[0].mxu0
        %v1882 = vadd.f32 %v1829, %v1881
        %v1883 = vpop.f32.mrb[0].mxu0
        %v1884 = vadd.f32 %v1831, %v1883
        %v1885 = vpop.f32.mrb[0].mxu0
        %v1886 = vadd.f32 %v1833, %v1885
        %v1887 = vpop.f32.mrb[0].mxu0
        %v1888 = vadd.f32 %v1835, %v1887
        %1889 = vmatprep.mubr.bf16.mxu0 %v527
        %1890 = vmatmul.mubr.bf16.gmra.mrb[0].mxu0 %v526
        %v1891 = vpop.f32.mrb[0].mxu0
        %v1892 = vadd.f32 %v1839, %v1891
        %v1893 = vpop.f32.mrb[0].mxu0
        %v1894 = vadd.f32 %v1841, %v1893
        %v1895 = vpop.f32.mrb[0].mxu0
        %v1896 = vadd.f32 %v1843, %v1895
        %v1897 = vpop.f32.mrb[0].mxu0
        %v1898 = vadd.f32 %v1845, %v1897
        %1899 = vdwg.mxu0
        %1900 = vmatprep.subr.bf16.mxu0 %v1245
        %1901 = vmatpush1.bf16.msra.mxu0 %v1244
        %1902 = vmatprep.subr.bf16.mxu0 %v1252
        %1903 = vmatpush1.bf16.msra.mxu0 %v1251
        %1904 = vmatprep.subr.bf16.mxu0 %v1259
        %1905 = vmatpush1.bf16.msra.mxu0 %v1258
        %1906 = vmatprep.subr.bf16.mxu0 %v1266
        %1907 = vmatpush1.bf16.msra.mxu0 %v1265
        %1908 = vmatprep.subr.bf16.mxu0 %v1273
        %1909 = vmatpush1.bf16.msra.mxu0 %v1272
        %1910 = vmatprep.subr.bf16.mxu0 %v1280
        %1911 = vmatpush1.bf16.msra.mxu0 %v1279
        %1912 = vmatprep.subr.bf16.mxu0 %v1287
        %1913 = vmatpush1.bf16.msra.mxu0 %v1286
        %1914 = vmatprep.subr.bf16.mxu0 %v1294
        %1915 = vmatpush1.bf16.msra.mxu0 %v1293
        %1916 = vmatprep.subr.bf16.mxu0 %v1301
        %1917 = vmatpush1.bf16.msra.mxu0 %v1300
        %1918 = vmatprep.subr.bf16.mxu0 %v1308
        %1919 = vmatpush1.bf16.msra.mxu0 %v1307
        %1920 = vmatprep.subr.bf16.mxu0 %v1315
        %1921 = vmatpush1.bf16.msra.mxu0 %v1314
        %1922 = vmatprep.subr.bf16.mxu0 %v1322
        %1923 = vmatpush1.bf16.msra.mxu0 %v1321
        %1924 = vmatprep.subr.bf16.mxu0 %v1329
        %1925 = vmatpush1.bf16.msra.mxu0 %v1328
        %1926 = vmatprep.subr.bf16.mxu0 %v1336
        %1927 = vmatpush1.bf16.msra.mxu0 %v1335
        %1928 = vmatprep.subr.bf16.mxu0 %v1343
        %1929 = vmatpush1.bf16.msra.mxu0 %v1342
        %1930 = vmatprep.subr.bf16.mxu0 %v1350
        %1931 = vmatpush1.bf16.msra.mxu0 %v1349
        %1932 = vmatprep.mubr.bf16.mxu0 %v521
        %1933 = vmatmul.mubr.bf16.gmra.mrb[0].mxu0 %v520
        %v1934 = vpop.f32.mrb[0].mxu0
        %v1935 = vadd.f32 %v480, %v1934
        %v1936 = vpop.f32.mrb[0].mxu0
        %v1937 = vadd.f32 %v484, %v1936
        %v1938 = vpop.f32.mrb[0].mxu0
        %v1939 = vadd.f32 %v480, %v1938
        %v1940 = vpop.f32.mrb[0].mxu0
        %v1941 = vadd.f32 %v484, %v1940
        %1942 = vmatprep.mubr.bf16.mxu0 %v525
        %1943 = vmatmul.mubr.bf16.gmra.mrb[0].mxu0 %v524
        %v1944 = vpop.f32.mrb[0].mxu0
        %v1945 = vadd.f32 %v480, %v1944
        %v1946 = vpop.f32.mrb[0].mxu0
        %v1947 = vadd.f32 %v484, %v1946
        %v1948 = vpop.f32.mrb[0].mxu0
        %v1949 = vadd.f32 %v480, %v1948
        %v1950 = vpop.f32.mrb[0].mxu0
        %v1951 = vadd.f32 %v484, %v1950
        %1952 = vdwg.mxu0
        %1953 = vmatprep.subr.bf16.mxu0 %v1357
        %1954 = vmatpush1.bf16.msra.mxu0 %v1356
        %1955 = vmatprep.subr.bf16.mxu0 %v1364
        %1956 = vmatpush1.bf16.msra.mxu0 %v1363
        %1957 = vmatprep.subr.bf16.mxu0 %v1371
        %1958 = vmatpush1.bf16.msra.mxu0 %v1370
        %1959 = vmatprep.subr.bf16.mxu0 %v1378
        %1960 = vmatpush1.bf16.msra.mxu0 %v1377
        %1961 = vmatprep.subr.bf16.mxu0 %v1385
        %1962 = vmatpush1.bf16.msra.mxu0 %v1384
        %1963 = vmatprep.subr.bf16.mxu0 %v1392
        %1964 = vmatpush1.bf16.msra.mxu0 %v1391
        %1965 = vmatprep.subr.bf16.mxu0 %v1399
        %1966 = vmatpush1.bf16.msra.mxu0 %v1398
        %1967 = vmatprep.subr.bf16.mxu0 %v1406
        %1968 = vmatpush1.bf16.msra.mxu0 %v1405
        %1969 = vmatprep.subr.bf16.mxu0 %v1413
        %1970 = vmatpush1.bf16.msra.mxu0 %v1412
        %1971 = vmatprep.subr.bf16.mxu0 %v1420
        %1972 = vmatpush1.bf16.msra.mxu0 %v1419
        %1973 = vmatprep.subr.bf16.mxu0 %v1427
        %1974 = vmatpush1.bf16.msra.mxu0 %v1426
        %1975 = vmatprep.subr.bf16.mxu0 %v1434
        %1976 = vmatpush1.bf16.msra.mxu0 %v1433
        %1977 = vmatprep.subr.bf16.mxu0 %v1441
        %1978 = vmatpush1.bf16.msra.mxu0 %v1440
        %1979 = vmatprep.subr.bf16.mxu0 %v1448
        %1980 = vmatpush1.bf16.msra.mxu0 %v1447
        %1981 = vmatprep.subr.bf16.mxu0 %v1455
        %1982 = vmatpush1.bf16.msra.mxu0 %v1454
        %1983 = vmatprep.subr.bf16.mxu0 %v1462
        %1984 = vmatpush1.bf16.msra.mxu0 %v1461
        %1985 = vmatprep.mubr.bf16.mxu0 %v523
        %1986 = vmatmul.mubr.bf16.gmra.mrb[0].mxu0 %v522
        %v1987 = vpop.f32.mrb[0].mxu0
        %v1988 = vadd.f32 %v1935, %v1987
        %v1989 = vpop.f32.mrb[0].mxu0
        %v1990 = vadd.f32 %v1937, %v1989
        %v1991 = vpop.f32.mrb[0].mxu0
        %v1992 = vadd.f32 %v1939, %v1991
        %v1993 = vpop.f32.mrb[0].mxu0
        %v1994 = vadd.f32 %v1941, %v1993
        %1995 = vmatprep.mubr.bf16.mxu0 %v527
        %1996 = vmatmul.mubr.bf16.gmra.mrb[0].mxu0 %v526
        %v1997 = vpop.f32.mrb[0].mxu0
        %v1998 = vadd.f32 %v1945, %v1997
        %v1999 = vpop.f32.mrb[0].mxu0
        %v2000 = vadd.f32 %v1947, %v1999
        %v2001 = vpop.f32.mrb[0].mxu0
        %v2002 = vadd.f32 %v1949, %v2001
        %v2003 = vpop.f32.mrb[0].mxu0
        %v2004 = vadd.f32 %v1951, %v2003
        %2005 = vdwg.mxu0
        %2006 = vmatprep.subr.bf16.mxu0 0
        %2007 = vmatpush1.bf16.msra.mxu0 %v1246
        %2008 = vmatprep.subr.bf16.mxu0 0
        %2009 = vmatpush1.bf16.msra.mxu0 %v1253
        %2010 = vmatprep.subr.bf16.mxu0 0
        %2011 = vmatpush1.bf16.msra.mxu0 %v1260
        %2012 = vmatprep.subr.bf16.mxu0 0
        %2013 = vmatpush1.bf16.msra.mxu0 %v1267
        %2014 = vmatprep.subr.bf16.mxu0 0
        %2015 = vmatpush1.bf16.msra.mxu0 %v1274
        %2016 = vmatprep.subr.bf16.mxu0 0
        %2017 = vmatpush1.bf16.msra.mxu0 %v1281
        %2018 = vmatprep.subr.bf16.mxu0 0
        %2019 = vmatpush1.bf16.msra.mxu0 %v1288
        %2020 = vmatprep.subr.bf16.mxu0 0
        %2021 = vmatpush1.bf16.msra.mxu0 %v1295
        %2022 = vmatprep.subr.bf16.mxu0 0
        %2023 = vmatpush1.bf16.msra.mxu0 %v1302
        %2024 = vmatprep.subr.bf16.mxu0 0
        %2025 = vmatpush1.bf16.msra.mxu0 %v1309
        %2026 = vmatprep.subr.bf16.mxu0 0
        %2027 = vmatpush1.bf16.msra.mxu0 %v1316
        %2028 = vmatprep.subr.bf16.mxu0 0
        %2029 = vmatpush1.bf16.msra.mxu0 %v1323
        %2030 = vmatprep.subr.bf16.mxu0 0
        %2031 = vmatpush1.bf16.msra.mxu0 %v1330
        %2032 = vmatprep.subr.bf16.mxu0 0
        %2033 = vmatpush1.bf16.msra.mxu0 %v1337
        %2034 = vmatprep.subr.bf16.mxu0 0
        %2035 = vmatpush1.bf16.msra.mxu0 %v1344
        %2036 = vmatprep.subr.bf16.mxu0 0
        %2037 = vmatpush1.bf16.msra.mxu0 %v1351
        %2038 = vmatprep.mubr.bf16.mxu0 %v521
        %2039 = vmatmul.mubr.bf16.gmra.mrb[0].mxu0 %v520
        %v2040 = vpop.f32.mrb[0].mxu0
        %v2041 = vadd.f32 %v488, %v2040
        %v2042 = vpop.f32.mrb[0].mxu0
        %v2043 = vpop.f32.mrb[0].mxu0
        %v2044 = vadd.f32 %v488, %v2043
        %v2045 = vpop.f32.mrb[0].mxu0
        %2046 = vmatprep.mubr.bf16.mxu0 %v525
        %2047 = vmatmul.mubr.bf16.gmra.mrb[0].mxu0 %v524
        %v2048 = vpop.f32.mrb[0].mxu0
        %v2049 = vadd.f32 %v488, %v2048
        %v2050 = vpop.f32.mrb[0].mxu0
        %v2051 = vpop.f32.mrb[0].mxu0
        %v2052 = vadd.f32 %v488, %v2051
        %v2053 = vpop.f32.mrb[0].mxu0
        %2054 = vdwg.mxu0
        %2055 = vmatprep.subr.bf16.mxu0 0
        %2056 = vmatpush1.bf16.msra.mxu0 %v1358
        %2057 = vmatprep.subr.bf16.mxu0 0
        %2058 = vmatpush1.bf16.msra.mxu0 %v1365
        %2059 = vmatprep.subr.bf16.mxu0 0
        %2060 = vmatpush1.bf16.msra.mxu0 %v1372
        %2061 = vmatprep.subr.bf16.mxu0 0
        %2062 = vmatpush1.bf16.msra.mxu0 %v1379
        %2063 = vmatprep.subr.bf16.mxu0 0
        %2064 = vmatpush1.bf16.msra.mxu0 %v1386
        %2065 = vmatprep.subr.bf16.mxu0 0
        %2066 = vmatpush1.bf16.msra.mxu0 %v1393
        %2067 = vmatprep.subr.bf16.mxu0 0
        %2068 = vmatpush1.bf16.msra.mxu0 %v1400
        %2069 = vmatprep.subr.bf16.mxu0 0
        %2070 = vmatpush1.bf16.msra.mxu0 %v1407
        %2071 = vmatprep.subr.bf16.mxu0 0
        %2072 = vmatpush1.bf16.msra.mxu0 %v1414
        %2073 = vmatprep.subr.bf16.mxu0 0
        %2074 = vmatpush1.bf16.msra.mxu0 %v1421
        %2075 = vmatprep.subr.bf16.mxu0 0
        %2076 = vmatpush1.bf16.msra.mxu0 %v1428
        %2077 = vmatprep.subr.bf16.mxu0 0
        %2078 = vmatpush1.bf16.msra.mxu0 %v1435
        %2079 = vmatprep.subr.bf16.mxu0 0
        %2080 = vmatpush1.bf16.msra.mxu0 %v1442
        %2081 = vmatprep.subr.bf16.mxu0 0
        %2082 = vmatpush1.bf16.msra.mxu0 %v1449
        %2083 = vmatprep.subr.bf16.mxu0 0
        %2084 = vmatpush1.bf16.msra.mxu0 %v1456
        %2085 = vmatprep.subr.bf16.mxu0 0
        %2086 = vmatpush1.bf16.msra.mxu0 %v1463
        %2087 = vmatprep.mubr.bf16.mxu0 %v523
        %2088 = vmatmul.mubr.bf16.gmra.mrb[0].mxu0 %v522
        %v2089 = vpop.f32.mrb[0].mxu0
        %v2090 = vadd.f32 %v2041, %v2089
        %v2091 = vpop.f32.mrb[0].mxu0
        %v2092 = vpop.f32.mrb[0].mxu0
        %v2093 = vadd.f32 %v2044, %v2092
        %v2094 = vpop.f32.mrb[0].mxu0
        %2095 = vmatprep.mubr.bf16.mxu0 %v527
        %2096 = vmatmul.mubr.bf16.gmra.mrb[0].mxu0 %v526
        %v2097 = vpop.f32.mrb[0].mxu0
        %v2098 = vadd.f32 %v2049, %v2097
        %v2099 = vpop.f32.mrb[0].mxu0
        %v2100 = vpop.f32.mrb[0].mxu0
        %v2101 = vadd.f32 %v2052, %v2100
        %v2102 = vpop.f32.mrb[0].mxu0
        %2103 = vdwg.mxu0
        %v2104 = vtanh.pop %v1776
        %v2105 = vtanh.pop %v1778
        %v2106 = vtanh.pop %v1882
        %v2107 = vtanh.pop %v1884
        %v2108 = vtanh.pop %v1988
        %v2109 = vtanh.pop %v1990
        %v2110 = vtanh.pop %v2090
        %v2111 = vtanh.pop %v1780
        %v2112 = vtanh.pop %v1782
        %v2113 = vtanh.pop %v1886
        %v2114 = vtanh.pop %v1888
        %v2115 = vtanh.pop %v1992
        %v2116 = vtanh.pop %v1994
        %v2117 = vtanh.pop %v2093
        %v2118 = vtanh.pop %v1786
        %v2119 = vtanh.pop %v1788
        %v2120 = vtanh.pop %v1892
        %v2121 = vtanh.pop %v1894
        %v2122 = vtanh.pop %v1998
        %v2123 = vtanh.pop %v2000
        %v2124 = vtanh.pop %v2098
        %v2125 = vtanh.pop %v1790
        %v2126 = vtanh.pop %v1792
        %v2127 = vtanh.pop %v1896
        %v2128 = vtanh.pop %v1898
        %v2129 = vtanh.pop %v2002
        %v2130 = vtanh.pop %v2004
        %v2131 = vtanh.pop %v2101
        %v2132 = vpack.c.bf16 %v2111, %v2104
        %v2133 = vpack.c.bf16 %v2112, %v2105
        %v2134 = vpack.c.bf16 %v2113, %v2106
        %v2135 = vpack.c.bf16 %v2114, %v2107
        %v2136 = vpack.c.bf16 %v2115, %v2108
        %v2137 = vpack.c.bf16 %v2116, %v2109
        %v2138 = vpack.c.bf16 %v2117, %v2110
        %v2139 = vpack.c.bf16 %v2125, %v2118
        %v2140 = vpack.c.bf16 %v2126, %v2119
        %v2141 = vpack.c.bf16 %v2127, %v2120
        %v2142 = vpack.c.bf16 %v2128, %v2121
        %v2143 = vpack.c.bf16 %v2129, %v2122
        %v2144 = vpack.c.bf16 %v2130, %v2123
        %v2145 = vpack.c.bf16 %v2131, %v2124
        %v2160 = vunpack.c.l.b16 %v2132
        %v2161 = vunpack.c.l.b16 %v2133
        %v2162 = vunpack.c.l.b16 %v2134
        %v2163 = vunpack.c.l.b16 %v2135
        %v2164 = vunpack.c.l.b16 %v2136
        %v2165 = vunpack.c.l.b16 %v2137
        %v2166 = vunpack.c.l.b16 %v2138
        %v2167 = vunpack.c.h.b16 %v2132
        %v2168 = vunpack.c.h.b16 %v2133
        %v2169 = vunpack.c.h.b16 %v2134
        %v2170 = vunpack.c.h.b16 %v2135
        %v2171 = vunpack.c.h.b16 %v2136
        %v2172 = vunpack.c.h.b16 %v2137
        %v2173 = vunpack.c.h.b16 %v2138
        %v2174 = vunpack.c.l.b16 %v2139
        %v2175 = vunpack.c.l.b16 %v2140
        %v2176 = vunpack.c.l.b16 %v2141
        %v2177 = vunpack.c.l.b16 %v2142
        %v2178 = vunpack.c.l.b16 %v2143
        %v2179 = vunpack.c.l.b16 %v2144
        %v2180 = vunpack.c.l.b16 %v2145
        %v2181 = vunpack.c.h.b16 %v2139
        %v2182 = vunpack.c.h.b16 %v2140
        %v2183 = vunpack.c.h.b16 %v2141
        %v2184 = vunpack.c.h.b16 %v2142
        %v2185 = vunpack.c.h.b16 %v2143
        %v2186 = vunpack.c.h.b16 %v2144
        %v2187 = vunpack.c.h.b16 %v2145
        %v2188 = vpack.c.b16 %v2161, %v2160
        %v2189 = vpack.c.b16 %v2163, %v2162
        %v2190 = vpack.c.b16 %v2165, %v2164
        %v2191 = vpack.c.b16 %v2166, %v2166
        %v2192 = vpack.c.b16 %v2168, %v2167
        %v2193 = vpack.c.b16 %v2170, %v2169
        %v2194 = vpack.c.b16 %v2172, %v2171
        %v2195 = vpack.c.b16 %v2173, %v2173
        %v2196 = vpack.c.b16 %v2175, %v2174
        %v2197 = vpack.c.b16 %v2177, %v2176
        %v2198 = vpack.c.b16 %v2179, %v2178
        %v2199 = vpack.c.b16 %v2180, %v2180
        %v2200 = vpack.c.b16 %v2182, %v2181
        %v2201 = vpack.c.b16 %v2184, %v2183
        %v2202 = vpack.c.b16 %v2186, %v2185
        %v2203 = vpack.c.b16 %v2187, %v2187
        %2220 = vst [vmem:[%s192] sm:$0xff] %v2188
        %2221 = vst [vmem:[%s192 + $0x8] sm:$0xff] %v2189
        %2222 = vst [vmem:[%s192 + $0x10] sm:$0xff] %v2190
        %2223 = vst [vmem:[%s192 + $0x18] sm:$0xf] %v2191
        %2224 = vst [vmem:[%s192 + $0x1c] sm:$0xff] %v2192
        %2225 = vst [vmem:[%s192 + $0x24] sm:$0xff] %v2193
        %2226 = vst [vmem:[%s192 + $0x2c] sm:$0xff] %v2194
        %2227 = vst [vmem:[%s192 + $0x34] sm:$0xf] %v2195
        %2228 = vst [vmem:[%s192 + $0x38] sm:$0xff] %v2196
        %2229 = vst [vmem:[%s192 + $0x40] sm:$0xff] %v2197
        %2230 = vst [vmem:[%s192 + $0x48] sm:$0xff] %v2198
        %2231 = vst [vmem:[%s192 + $0x50] sm:$0xf] %v2199
        %2232 = vst [vmem:[%s192 + $0x54] sm:$0xff] %v2200
        %2233 = vst [vmem:[%s192 + $0x5c] sm:$0xff] %v2201
        %2234 = vst [vmem:[%s192 + $0x64] sm:$0xff] %v2202
        %2235 = vst [vmem:[%s192 + $0x6c] sm:$0xf] %v2203
        %s2236 = smul.u32 4, %s15
        %p2237 = scmp.lt.s32.totalorder %s2236, 7
        %s2238 = scalar_select %p2237, %s2236, 7
        %s2239 = smul.addr %s2238, 7
        %s2240 = smul.addr %s2239, 4
        %s2241 = scalar_lea.vmem %s3, %s2240
        // Predicated region
        $region37: #{generator_forward.3} parent=31 // pred_check
          %p2242 = pneg %p101
        $region38: #{generator_forward.3} parent=31 // pred_check_branch
          %2244 = sbr.rel (%p2242) target = $region40
        $region39: #{generator_forward.3} parent=31 // pred_region
          %s2245 = smul.u32 4, %s15
        $region40: #{generator_forward.3} parent=31 // pred_fallthru
          _
      $region32: #{generator_forward.3} parent=5 // pred_fallthru
        _
      %p2246 = scmp.le.s32.totalorder 2, %s10
      // Predicated region
      $region41: #{generator_forward.3} parent=5 // pred_check
        %p2247 = pneg %p2246
      $region42: #{generator_forward.3} parent=5 // pred_check_branch
        %2249 = sbr.rel (%p2247) target = $region44
      $region43: #{generator_forward.3} parent=5 // pred_region
        %s2250 = ssub.s32 %s10, 2
        // Predicated region
        $region45: #{generator_forward.3} parent=43 // pred_check
          %p2251 = pneg %p107
        $region46: #{generator_forward.3} parent=43 // pred_check_branch
          %2253 = sbr.rel (%p2251) target = $region48
        $region47: #{generator_forward.3} parent=43 // pred_region
          %s2254 = smul.u32 4, %s16
          %p2255 = scmp.lt.s32.totalorder %s2254, 7
          %s2256 = scalar_select %p2255, %s2254, 7
          %s2257 = smul.addr %s2256, 7
          %s2258 = smul.addr %s2257, 4
          %s2259 = scalar_lea.vmem %s3, %s2258
        $region48: #{generator_forward.3} parent=43 // pred_fallthru
          _
      $region44: #{generator_forward.3} parent=5 // pred_fallthru
        _
    $region6: #{generator_forward.3} parent=1 // loop_footer
      %s14 = sadd.s32 1, %s10
    $region7: #{generator_forward.3} parent=1 // loop_footer_branch
      %9 = sbr.rel target = $region3
    $region8: #{generator_forward.3} parent=1 // loop_exit
      _
    %2260 = vsyncpa [#allocation3], 1
    %s2261 = scalar_lea.sflag [#allocation3], 1
    %2262 = vsyncpa %s2261, 1

</llo_original>
